<compile_context>
chip_gen: v5e
topology: v5e:2x2
jax: 0.10.0
libtpu: 0.0.40
codegen_flags: <defaults>
</compile_context>

<pallas_src>
import jax
import jax.numpy as jnp
from jax.experimental import pallas as pl
from jax.experimental.pallas import tpu as pltpu


def _round_up(x, m):
    return ((x + m - 1) // m) * m


# ---------------- Fused Pallas kernel (one grid step == TB batch rows) ----------------

def policy_head_kernel(x_ref, wc_ref, bias_ref, wf_ref, bfc_ref, out_ref, h_ref):
    """Fused 1x1 conv (BN scale pre-folded) + BN bias + ReLU + fully-connected head.

    x_ref:    (TB, C, S)      f32   batch tile, channels x spatial (free NCHW reshape)
    wc_ref:   (F, C)          bf16  1x1 conv weight with BN scale folded in
    bias_ref: (F, 1)          f32   folded BN bias (beta - mean * scale)
    wf_ref:   (F*S, A_pad)    bf16  fc weight slab, rows in PyTorch flatten order f*S+s
    bfc_ref:  (1, A_pad)      f32   fc bias (zero-padded to A_pad lanes)
    out_ref:  (TB, A_pad)     f32   logits for this batch tile
    h_ref:    (TB, F*S)       bf16  VMEM scratch: flattened conv/BN/ReLU activation
    """
    TB, C, S = x_ref.shape
    F = wc_ref.shape[0]

    # In-kernel bf16 cast of the streamed activation (VPU, hidden under the MXU work).
    x = x_ref[...].astype(jnp.bfloat16)                                 # (TB, C, S)

    # 1x1 conv == per-pixel channel contraction, done as one batched MXU matmul:
    # (TB, F, C) @ (TB, C, S) -> (TB, F, S), f32 accumulation.
    wc_b = jnp.broadcast_to(wc_ref[...][None], (TB, F, C))
    h = jnp.einsum('bfc,bcs->bfs', wc_b, x,
                   preferred_element_type=jnp.float32)                  # (TB, F, S)

    # Folded inference-BN bias + ReLU in f32 (VPU; v5e has no bf16 VPU), then bf16.
    h = jnp.maximum(h + bias_ref[...][None], 0.0).astype(jnp.bfloat16)

    # One relayout per tile: (TB, F, S) -> (TB, F*S) in NCHW flatten order (f*S + s),
    # staged through VMEM scratch with F static slice-stores (no per-row M=1 matmuls).
    for f in range(F):
        h_ref[:, f * S:(f + 1) * S] = h[:, f, :]

    # Single FC contraction: (TB, F*S) @ (F*S, A_pad) -> (TB, A_pad), full-vreg store.
    out_ref[...] = (jnp.dot(h_ref[...], wf_ref[...],
                            preferred_element_type=jnp.float32)
                    + bfc_ref[...])


# ---------------- One-time parameter preparation (hoisted out of the forward path) ------

def prepare_policy_head_params(params, eps=1e-5, lane=128):
    w_conv = params["w_conv"]                               # (F, C, 1, 1)
    F, C = int(w_conv.shape[0]), int(w_conv.shape[1])
    A = int(params["b_fc"].shape[0])
    S = int(params["w_fc"].shape[1]) // F
    A_pad = _round_up(A, lane)

    scale = params["bn_gamma"] / jnp.sqrt(params["bn_var"] + eps)       # (F,) f32
    # Fold the BN scale into the conv weight: multiply in f32, THEN cast to bf16.
    wc = (w_conv[:, :, 0, 0] * scale[:, None]).astype(jnp.bfloat16)     # (F, C)
    bias = (params["bn_beta"] - params["bn_mean"] * scale
            ).reshape(F, 1).astype(jnp.float32)                         # (F, 1)

    # PyTorch fc weight is (A, F*S) with column index f*S + s (NCHW flatten):
    # one transposed, lane-padded 2-D slab for the single FC matmul.
    wf = jnp.pad(params["w_fc"].T, ((0, 0), (0, A_pad - A))).astype(jnp.bfloat16)
    bfc = jnp.pad(params["b_fc"], (0, A_pad - A)).reshape(1, A_pad).astype(jnp.float32)

    return {"wc": wc, "bias": bias, "wf": wf, "bfc": bfc,
            "num_filters": F, "in_channels": C, "spatial": S,
            "num_actions": A, "num_actions_padded": A_pad}


# ---------------- Batch-tile / VMEM sizing ----------------

def _vmem_estimate(tb, C, S, F, A_pad, weight_buffers):
    x_blk = 2 * tb * C * S * 4                    # f32 x tile, double-buffered
    out_blk = 2 * tb * A_pad * 4                  # f32 out tile, double-buffered
    weights = weight_buffers * (F * C * 2 + F * 4 + F * S * A_pad * 2 + A_pad * 4)
    scratch = tb * F * S * 2                      # flattened h, bf16
    transient = tb * F * S * 4 + tb * F * C * 2 + tb * C * S * 2   # h f32, wc bcast, x bf16
    return x_blk + out_blk + weights + scratch + transient


def _vmem_budget():
    # Per-generation budget: v5e/v6e have 128 MiB physical VMEM, v7x only 64 MiB.
    try:
        cap = int(pltpu.get_tpu_info().vmem_capacity_bytes)
    except Exception:
        cap = 64 * 2 ** 20                        # conservative (v7x)
    return min(cap // 3, 24 * 2 ** 20)


def _choose_batch_tile(B, C, S, F, A_pad, weight_buffers, budget):
    tb = 8
    limit = _round_up(max(B, 1), 8)
    for cand in (16, 32, 64, 128):
        if cand > limit:
            break
        if _vmem_estimate(cand, C, S, F, A_pad, weight_buffers) <= budget:
            tb = cand
    return tb


# ---------------- Forward wrapper ----------------

def _policy_head_call(x3, prep, TB, single_buffer_weights):
    Bp, C, S = x3.shape
    F = prep["num_filters"]
    A_pad = prep["num_actions_padded"]

    wkw = {}
    if single_buffer_weights:
        # Constant-index blocks never change across the grid: single-buffer them.
        wkw = dict(pipeline_mode=pl.Buffered(1))

    est = _vmem_estimate(TB, C, S, F, A_pad, 1 if single_buffer_weights else 2)
    vmem_limit = int(min(max(2 * est, 16 * 2 ** 20), 48 * 2 ** 20))

    grid_spec = pltpu.PrefetchScalarGridSpec(
        num_scalar_prefetch=0,
        grid=(Bp // TB,),
        in_specs=[
            pl.BlockSpec((TB, C, S), lambda b: (b, 0, 0)),             # x tile (streamed)
            pl.BlockSpec((F, C), lambda b: (0, 0), **wkw),             # folded conv weight
            pl.BlockSpec((F, 1), lambda b: (0, 0), **wkw),             # folded BN bias
            pl.BlockSpec((F * S, A_pad), lambda b: (0, 0), **wkw),     # fc weight slab
            pl.BlockSpec((1, A_pad), lambda b: (0, 0), **wkw),         # fc bias
        ],
        out_specs=pl.BlockSpec((TB, A_pad), lambda b: (b, 0)),
        scratch_shapes=[pltpu.VMEM((TB, F * S), jnp.bfloat16)],
    )

    return pl.pallas_call(
        policy_head_kernel,
        out_shape=jax.ShapeDtypeStruct((Bp, A_pad), jnp.float32),
        grid_spec=grid_spec,
        compiler_params=pltpu.CompilerParams(
            dimension_semantics=("parallel",),
            vmem_limit_bytes=vmem_limit,
        ),
    )(x3, prep["wc"], prep["bias"], prep["wf"], prep["bfc"])


def policy_head_forward(x_nchw, prep):
    B, C, H, W = x_nchw.shape
    S = H * W
    assert C == prep["in_channels"] and S == prep["spatial"], (C, S, prep)
    A = prep["num_actions"]
    A_pad = prep["num_actions_padded"]
    F = prep["num_filters"]

    # Free reshape only (no cast, no transpose): NCHW -> (B, C, S).
    x3 = x_nchw.reshape(B, C, S)

    single_buffer = hasattr(pl, "Buffered")
    TB = _choose_batch_tile(B, C, S, F, A_pad,
                            1 if single_buffer else 2, _vmem_budget())
    Bp = _round_up(B, TB)
    if Bp != B:
        # Only needed when B is not a multiple of the batch tile (padded rows discarded).
        x3 = jnp.pad(x3, ((0, Bp - B), (0, 0), (0, 0)))

    try:
        out = jax.block_until_ready(_policy_head_call(x3, prep, TB, single_buffer))
    except Exception:
        # Fallback if this jax build rejects pipeline_mode=pl.Buffered(1).
        out = _policy_head_call(x3, prep, TB, False)
    return out[:B, :A]


# ---------------- Pure-JAX reference (mirrors the PyTorch forward, eval-mode BN) --------

def policy_head_reference(x_nchw, params, eps=1e-5):
    w = params["w_conv"][:, :, 0, 0]                                    # (F, C)
    y = jnp.einsum('bchw,fc->bfhw', x_nchw, w)
    scale = params["bn_gamma"] / jnp.sqrt(params["bn_var"] + eps)
    y = (y * scale[None, :, None, None]
         + (params["bn_beta"] - params["bn_mean"] * scale)[None, :, None, None])
    y = jnp.maximum(y, 0.0)
    flat = y.reshape(y.shape[0], -1)                                    # NCHW flatten: f*S + s
    return flat @ params["w_fc"].T + params["b_fc"]


# ---------------- Main ----------------

if __name__ == "__main__":
    # Small shapes: batch=2, in_channels=4, H=W=4 -> board_size = H*W = 16,
    # num_actions = board_size + 1 = 17 (board moves + pass).
    B, C, H, W = 2, 4, 4, 4
    board_size = H * W
    num_actions = board_size + 1
    F = 32

    key = jax.random.PRNGKey(0)
    k = jax.random.split(key, 8)

    params = {
        "w_conv": 0.1 * jax.random.normal(k[0], (F, C, 1, 1), jnp.float32),
        "bn_gamma": 1.0 + 0.1 * jax.random.normal(k[1], (F,), jnp.float32),
        "bn_beta": 0.1 * jax.random.normal(k[2], (F,), jnp.float32),
        "bn_mean": 0.1 * jax.random.normal(k[3], (F,), jnp.float32),
        "bn_var": 0.5 + jnp.abs(jax.random.normal(k[4], (F,), jnp.float32)),
        "w_fc": 0.1 * jax.random.normal(k[5], (num_actions, F * board_size), jnp.float32),
        "b_fc": 0.1 * jax.random.normal(k[6], (num_actions,), jnp.float32),
    }
    x = jax.random.normal(k[7], (B, C, H, W), jnp.float32)

    prep = prepare_policy_head_params(params)              # one-time weight prep (hoisted)
    prep = {kk: (jax.block_until_ready(v) if isinstance(v, jax.Array) else v)
            for kk, v in prep.items()}

    logits = policy_head_forward(x, prep)
    logits = jax.block_until_ready(logits)

    ref = jax.block_until_ready(policy_head_reference(x, params))
    assert logits.shape == (B, num_actions), logits.shape
    # Tolerance accounts for bf16 MXU operands (accumulation stays in f32).
    assert jnp.allclose(logits, ref, rtol=2e-2, atol=2e-2), (
        f"max abs diff = {jnp.max(jnp.abs(logits - ref))}")

    print("KERNEL_OK")
</pallas_src>

<mosaic_0001>
module attributes {stable_mosaic.version = 11 : i64} {
  func.func @policy_head_kernel(%arg0: i32, %arg1: memref<8x4x16xf32, #tpu.memory_space<vmem>>, %arg2: memref<32x4xbf16, #tpu.memory_space<vmem>>, %arg3: memref<32x1xf32, #tpu.memory_space<vmem>>, %arg4: memref<512x128xbf16, #tpu.memory_space<vmem>>, %arg5: memref<1x128xf32, #tpu.memory_space<vmem>>, %arg6: memref<8x128xf32, #tpu.memory_space<vmem>>, %arg7: memref<8x512xbf16, #tpu.memory_space<vmem>>) attributes {dimension_semantics = [#tpu.dimension_semantics<parallel>], iteration_bounds = array<i64: 1>, scalar_prefetch = 0 : i64, scratch_operands = 1 : i64, tpu.core_type = #tpu.core_type<tc>, window_params = [{transform_indices = @transform_0, window_bounds = array<i64: 8, 4, 16>}, {pipeline_mode = #tpu.pipeline_mode<synchronous>, transform_indices = @transform_1, window_bounds = array<i64: 32, 4>}, {pipeline_mode = #tpu.pipeline_mode<synchronous>, transform_indices = @transform_2, window_bounds = array<i64: 32, 1>}, {pipeline_mode = #tpu.pipeline_mode<synchronous>, transform_indices = @transform_3, window_bounds = array<i64: 512, 128>}, {pipeline_mode = #tpu.pipeline_mode<synchronous>, transform_indices = @transform_4, window_bounds = array<i64: 1, 128>}, {transform_indices = @transform_5, window_bounds = array<i64: 8, 128>}]} {
    %c0 = arith.constant 0 : index
    %c0_0 = arith.constant 0 : index
    %c0_1 = arith.constant 0 : index
    %0 = vector.load %arg1[%c0, %c0_0, %c0_1] : memref<8x4x16xf32, #tpu.memory_space<vmem>>, vector<8x4x16xf32>
    %1 = arith.truncf %0 : vector<8x4x16xf32> to vector<8x4x16xbf16>
    %c0_2 = arith.constant 0 : index
    %c0_3 = arith.constant 0 : index
    %2 = vector.load %arg2[%c0_2, %c0_3] : memref<32x4xbf16, #tpu.memory_space<vmem>>, vector<32x4xbf16>
    %3 = vector.shape_cast %2 : vector<32x4xbf16> to vector<1x32x4xbf16>
    %4 = vector.shape_cast %3 : vector<1x32x4xbf16> to vector<1x32x4xbf16>
    %5 = vector.broadcast %4 : vector<1x32x4xbf16> to vector<8x32x4xbf16>
    "tpu.trace_start"() <{level = 10 : i32, message = "bfc,bcs->bfs"}> : () -> ()
    %cst = arith.constant dense<0.000000e+00> : vector<8x32x16xf32>
    %6 = tpu.matmul %5, %1, %cst {dimension_numbers = #tpu.dot_dimension_numbers<[2], [1], [1], [2], [0, 0, 0, 1, 1, 2], [0], [0]>} : vector<8x32x4xbf16>, vector<8x4x16xbf16>, vector<8x32x16xf32> -> vector<8x32x16xf32>
    "tpu.trace_stop"() : () -> ()
    %c0_4 = arith.constant 0 : index
    %c0_5 = arith.constant 0 : index
    %7 = vector.load %arg3[%c0_4, %c0_5] : memref<32x1xf32, #tpu.memory_space<vmem>>, vector<32x1xf32>
    %8 = vector.shape_cast %7 : vector<32x1xf32> to vector<1x32x1xf32>
    %9 = vector.broadcast %8 : vector<1x32x1xf32> to vector<8x32x16xf32>
    %10 = arith.addf %6, %9 : vector<8x32x16xf32>
    %cst_6 = arith.constant 0.000000e+00 : f32
    %11 = vector.broadcast %cst_6 : f32 to vector<8x32x16xf32>
    %12 = arith.maximumf %10, %11 : vector<8x32x16xf32>
    %13 = arith.truncf %12 : vector<8x32x16xf32> to vector<8x32x16xbf16>
    %14 = vector.extract_strided_slice %13 {offsets = [0, 0, 0], sizes = [8, 1, 16], strides = [1, 1, 1]} : vector<8x32x16xbf16> to vector<8x1x16xbf16>
    %15 = vector.shape_cast %14 : vector<8x1x16xbf16> to vector<8x16xbf16>
    %c0_7 = arith.constant 0 : index
    %c0_8 = arith.constant 0 : index
    %16 = vector.load %arg7[%c0_7, %c0_8] : memref<8x512xbf16, #tpu.memory_space<vmem>>, vector<8x16xbf16>
    tpu.vector_store %arg7[%c0_7, %c0_8], %15 {strides = array<i32>} : memref<8x512xbf16, #tpu.memory_space<vmem>>, vector<8x16xbf16>,
    %17 = vector.extract_strided_slice %13 {offsets = [0, 1, 0], sizes = [8, 1, 16], strides = [1, 1, 1]} : vector<8x32x16xbf16> to vector<8x1x16xbf16>
    %18 = vector.shape_cast %17 : vector<8x1x16xbf16> to vector<8x16xbf16>
    %c0_9 = arith.constant 0 : index
    %c16 = arith.constant 16 : index
    %19 = vector.load %arg7[%c0_9, %c16] : memref<8x512xbf16, #tpu.memory_space<vmem>>, vector<8x16xbf16>
    tpu.vector_store %arg7[%c0_9, %c16], %18 {strides = array<i32>} : memref<8x512xbf16, #tpu.memory_space<vmem>>, vector<8x16xbf16>,
    %20 = vector.extract_strided_slice %13 {offsets = [0, 2, 0], sizes = [8, 1, 16], strides = [1, 1, 1]} : vector<8x32x16xbf16> to vector<8x1x16xbf16>
    %21 = vector.shape_cast %20 : vector<8x1x16xbf16> to vector<8x16xbf16>
    %c0_10 = arith.constant 0 : index
    %c32 = arith.constant 32 : index
    %22 = vector.load %arg7[%c0_10, %c32] : memref<8x512xbf16, #tpu.memory_space<vmem>>, vector<8x16xbf16>
    tpu.vector_store %arg7[%c0_10, %c32], %21 {strides = array<i32>} : memref<8x512xbf16, #tpu.memory_space<vmem>>, vector<8x16xbf16>,
    %23 = vector.extract_strided_slice %13 {offsets = [0, 3, 0], sizes = [8, 1, 16], strides = [1, 1, 1]} : vector<8x32x16xbf16> to vector<8x1x16xbf16>
    %24 = vector.shape_cast %23 : vector<8x1x16xbf16> to vector<8x16xbf16>
    %c0_11 = arith.constant 0 : index
    %c48 = arith.constant 48 : index
    %25 = vector.load %arg7[%c0_11, %c48] : memref<8x512xbf16, #tpu.memory_space<vmem>>, vector<8x16xbf16>
    tpu.vector_store %arg7[%c0_11, %c48], %24 {strides = array<i32>} : memref<8x512xbf16, #tpu.memory_space<vmem>>, vector<8x16xbf16>,
    %26 = vector.extract_strided_slice %13 {offsets = [0, 4, 0], sizes = [8, 1, 16], strides = [1, 1, 1]} : vector<8x32x16xbf16> to vector<8x1x16xbf16>
    %27 = vector.shape_cast %26 : vector<8x1x16xbf16> to vector<8x16xbf16>
    %c0_12 = arith.constant 0 : index
    %c64 = arith.constant 64 : index
    %28 = vector.load %arg7[%c0_12, %c64] : memref<8x512xbf16, #tpu.memory_space<vmem>>, vector<8x16xbf16>
    tpu.vector_store %arg7[%c0_12, %c64], %27 {strides = array<i32>} : memref<8x512xbf16, #tpu.memory_space<vmem>>, vector<8x16xbf16>,
    %29 = vector.extract_strided_slice %13 {offsets = [0, 5, 0], sizes = [8, 1, 16], strides = [1, 1, 1]} : vector<8x32x16xbf16> to vector<8x1x16xbf16>
    %30 = vector.shape_cast %29 : vector<8x1x16xbf16> to vector<8x16xbf16>
    %c0_13 = arith.constant 0 : index
    %c80 = arith.constant 80 : index
    %31 = vector.load %arg7[%c0_13, %c80] : memref<8x512xbf16, #tpu.memory_space<vmem>>, vector<8x16xbf16>
    tpu.vector_store %arg7[%c0_13, %c80], %30 {strides = array<i32>} : memref<8x512xbf16, #tpu.memory_space<vmem>>, vector<8x16xbf16>,
    %32 = vector.extract_strided_slice %13 {offsets = [0, 6, 0], sizes = [8, 1, 16], strides = [1, 1, 1]} : vector<8x32x16xbf16> to vector<8x1x16xbf16>
    %33 = vector.shape_cast %32 : vector<8x1x16xbf16> to vector<8x16xbf16>
    %c0_14 = arith.constant 0 : index
    %c96 = arith.constant 96 : index
    %34 = vector.load %arg7[%c0_14, %c96] : memref<8x512xbf16, #tpu.memory_space<vmem>>, vector<8x16xbf16>
    tpu.vector_store %arg7[%c0_14, %c96], %33 {strides = array<i32>} : memref<8x512xbf16, #tpu.memory_space<vmem>>, vector<8x16xbf16>,
    %35 = vector.extract_strided_slice %13 {offsets = [0, 7, 0], sizes = [8, 1, 16], strides = [1, 1, 1]} : vector<8x32x16xbf16> to vector<8x1x16xbf16>
    %36 = vector.shape_cast %35 : vector<8x1x16xbf16> to vector<8x16xbf16>
    %c0_15 = arith.constant 0 : index
    %c112 = arith.constant 112 : index
    %37 = vector.load %arg7[%c0_15, %c112] : memref<8x512xbf16, #tpu.memory_space<vmem>>, vector<8x16xbf16>
    tpu.vector_store %arg7[%c0_15, %c112], %36 {strides = array<i32>} : memref<8x512xbf16, #tpu.memory_space<vmem>>, vector<8x16xbf16>,
    %38 = vector.extract_strided_slice %13 {offsets = [0, 8, 0], sizes = [8, 1, 16], strides = [1, 1, 1]} : vector<8x32x16xbf16> to vector<8x1x16xbf16>
    %39 = vector.shape_cast %38 : vector<8x1x16xbf16> to vector<8x16xbf16>
    %c0_16 = arith.constant 0 : index
    %c128 = arith.constant 128 : index
    %40 = vector.load %arg7[%c0_16, %c128] : memref<8x512xbf16, #tpu.memory_space<vmem>>, vector<8x16xbf16>
    tpu.vector_store %arg7[%c0_16, %c128], %39 {strides = array<i32>} : memref<8x512xbf16, #tpu.memory_space<vmem>>, vector<8x16xbf16>,
    %41 = vector.extract_strided_slice %13 {offsets = [0, 9, 0], sizes = [8, 1, 16], strides = [1, 1, 1]} : vector<8x32x16xbf16> to vector<8x1x16xbf16>
    %42 = vector.shape_cast %41 : vector<8x1x16xbf16> to vector<8x16xbf16>
    %c0_17 = arith.constant 0 : index
    %c144 = arith.constant 144 : index
    %43 = vector.load %arg7[%c0_17, %c144] : memref<8x512xbf16, #tpu.memory_space<vmem>>, vector<8x16xbf16>
    tpu.vector_store %arg7[%c0_17, %c144], %42 {strides = array<i32>} : memref<8x512xbf16, #tpu.memory_space<vmem>>, vector<8x16xbf16>,
    %44 = vector.extract_strided_slice %13 {offsets = [0, 10, 0], sizes = [8, 1, 16], strides = [1, 1, 1]} : vector<8x32x16xbf16> to vector<8x1x16xbf16>
    %45 = vector.shape_cast %44 : vector<8x1x16xbf16> to vector<8x16xbf16>
    %c0_18 = arith.constant 0 : index
    %c160 = arith.constant 160 : index
    %46 = vector.load %arg7[%c0_18, %c160] : memref<8x512xbf16, #tpu.memory_space<vmem>>, vector<8x16xbf16>
    tpu.vector_store %arg7[%c0_18, %c160], %45 {strides = array<i32>} : memref<8x512xbf16, #tpu.memory_space<vmem>>, vector<8x16xbf16>,
    %47 = vector.extract_strided_slice %13 {offsets = [0, 11, 0], sizes = [8, 1, 16], strides = [1, 1, 1]} : vector<8x32x16xbf16> to vector<8x1x16xbf16>
    %48 = vector.shape_cast %47 : vector<8x1x16xbf16> to vector<8x16xbf16>
    %c0_19 = arith.constant 0 : index
    %c176 = arith.constant 176 : index
    %49 = vector.load %arg7[%c0_19, %c176] : memref<8x512xbf16, #tpu.memory_space<vmem>>, vector<8x16xbf16>
    tpu.vector_store %arg7[%c0_19, %c176], %48 {strides = array<i32>} : memref<8x512xbf16, #tpu.memory_space<vmem>>, vector<8x16xbf16>,
    %50 = vector.extract_strided_slice %13 {offsets = [0, 12, 0], sizes = [8, 1, 16], strides = [1, 1, 1]} : vector<8x32x16xbf16> to vector<8x1x16xbf16>
    %51 = vector.shape_cast %50 : vector<8x1x16xbf16> to vector<8x16xbf16>
    %c0_20 = arith.constant 0 : index
    %c192 = arith.constant 192 : index
    %52 = vector.load %arg7[%c0_20, %c192] : memref<8x512xbf16, #tpu.memory_space<vmem>>, vector<8x16xbf16>
    tpu.vector_store %arg7[%c0_20, %c192], %51 {strides = array<i32>} : memref<8x512xbf16, #tpu.memory_space<vmem>>, vector<8x16xbf16>,
    %53 = vector.extract_strided_slice %13 {offsets = [0, 13, 0], sizes = [8, 1, 16], strides = [1, 1, 1]} : vector<8x32x16xbf16> to vector<8x1x16xbf16>
    %54 = vector.shape_cast %53 : vector<8x1x16xbf16> to vector<8x16xbf16>
    %c0_21 = arith.constant 0 : index
    %c208 = arith.constant 208 : index
    %55 = vector.load %arg7[%c0_21, %c208] : memref<8x512xbf16, #tpu.memory_space<vmem>>, vector<8x16xbf16>
    tpu.vector_store %arg7[%c0_21, %c208], %54 {strides = array<i32>} : memref<8x512xbf16, #tpu.memory_space<vmem>>, vector<8x16xbf16>,
    %56 = vector.extract_strided_slice %13 {offsets = [0, 14, 0], sizes = [8, 1, 16], strides = [1, 1, 1]} : vector<8x32x16xbf16> to vector<8x1x16xbf16>
    %57 = vector.shape_cast %56 : vector<8x1x16xbf16> to vector<8x16xbf16>
    %c0_22 = arith.constant 0 : index
    %c224 = arith.constant 224 : index
    %58 = vector.load %arg7[%c0_22, %c224] : memref<8x512xbf16, #tpu.memory_space<vmem>>, vector<8x16xbf16>
    tpu.vector_store %arg7[%c0_22, %c224], %57 {strides = array<i32>} : memref<8x512xbf16, #tpu.memory_space<vmem>>, vector<8x16xbf16>,
    %59 = vector.extract_strided_slice %13 {offsets = [0, 15, 0], sizes = [8, 1, 16], strides = [1, 1, 1]} : vector<8x32x16xbf16> to vector<8x1x16xbf16>
    %60 = vector.shape_cast %59 : vector<8x1x16xbf16> to vector<8x16xbf16>
    %c0_23 = arith.constant 0 : index
    %c240 = arith.constant 240 : index
    %61 = vector.load %arg7[%c0_23, %c240] : memref<8x512xbf16, #tpu.memory_space<vmem>>, vector<8x16xbf16>
    tpu.vector_store %arg7[%c0_23, %c240], %60 {strides = array<i32>} : memref<8x512xbf16, #tpu.memory_space<vmem>>, vector<8x16xbf16>,
    %62 = vector.extract_strided_slice %13 {offsets = [0, 16, 0], sizes = [8, 1, 16], strides = [1, 1, 1]} : vector<8x32x16xbf16> to vector<8x1x16xbf16>
    %63 = vector.shape_cast %62 : vector<8x1x16xbf16> to vector<8x16xbf16>
    %c0_24 = arith.constant 0 : index
    %c256 = arith.constant 256 : index
    %64 = vector.load %arg7[%c0_24, %c256] : memref<8x512xbf16, #tpu.memory_space<vmem>>, vector<8x16xbf16>
    tpu.vector_store %arg7[%c0_24, %c256], %63 {strides = array<i32>} : memref<8x512xbf16, #tpu.memory_space<vmem>>, vector<8x16xbf16>,
    %65 = vector.extract_strided_slice %13 {offsets = [0, 17, 0], sizes = [8, 1, 16], strides = [1, 1, 1]} : vector<8x32x16xbf16> to vector<8x1x16xbf16>
    %66 = vector.shape_cast %65 : vector<8x1x16xbf16> to vector<8x16xbf16>
    %c0_25 = arith.constant 0 : index
    %c272 = arith.constant 272 : index
    %67 = vector.load %arg7[%c0_25, %c272] : memref<8x512xbf16, #tpu.memory_space<vmem>>, vector<8x16xbf16>
    tpu.vector_store %arg7[%c0_25, %c272], %66 {strides = array<i32>} : memref<8x512xbf16, #tpu.memory_space<vmem>>, vector<8x16xbf16>,
    %68 = vector.extract_strided_slice %13 {offsets = [0, 18, 0], sizes = [8, 1, 16], strides = [1, 1, 1]} : vector<8x32x16xbf16> to vector<8x1x16xbf16>
    %69 = vector.shape_cast %68 : vector<8x1x16xbf16> to vector<8x16xbf16>
    %c0_26 = arith.constant 0 : index
    %c288 = arith.constant 288 : index
    %70 = vector.load %arg7[%c0_26, %c288] : memref<8x512xbf16, #tpu.memory_space<vmem>>, vector<8x16xbf16>
    tpu.vector_store %arg7[%c0_26, %c288], %69 {strides = array<i32>} : memref<8x512xbf16, #tpu.memory_space<vmem>>, vector<8x16xbf16>,
    %71 = vector.extract_strided_slice %13 {offsets = [0, 19, 0], sizes = [8, 1, 16], strides = [1, 1, 1]} : vector<8x32x16xbf16> to vector<8x1x16xbf16>
    %72 = vector.shape_cast %71 : vector<8x1x16xbf16> to vector<8x16xbf16>
    %c0_27 = arith.constant 0 : index
    %c304 = arith.constant 304 : index
    %73 = vector.load %arg7[%c0_27, %c304] : memref<8x512xbf16, #tpu.memory_space<vmem>>, vector<8x16xbf16>
    tpu.vector_store %arg7[%c0_27, %c304], %72 {strides = array<i32>} : memref<8x512xbf16, #tpu.memory_space<vmem>>, vector<8x16xbf16>,
    %74 = vector.extract_strided_slice %13 {offsets = [0, 20, 0], sizes = [8, 1, 16], strides = [1, 1, 1]} : vector<8x32x16xbf16> to vector<8x1x16xbf16>
    %75 = vector.shape_cast %74 : vector<8x1x16xbf16> to vector<8x16xbf16>
    %c0_28 = arith.constant 0 : index
    %c320 = arith.constant 320 : index
    %76 = vector.load %arg7[%c0_28, %c320] : memref<8x512xbf16, #tpu.memory_space<vmem>>, vector<8x16xbf16>
    tpu.vector_store %arg7[%c0_28, %c320], %75 {strides = array<i32>} : memref<8x512xbf16, #tpu.memory_space<vmem>>, vector<8x16xbf16>,
    %77 = vector.extract_strided_slice %13 {offsets = [0, 21, 0], sizes = [8, 1, 16], strides = [1, 1, 1]} : vector<8x32x16xbf16> to vector<8x1x16xbf16>
    %78 = vector.shape_cast %77 : vector<8x1x16xbf16> to vector<8x16xbf16>
    %c0_29 = arith.constant 0 : index
    %c336 = arith.constant 336 : index
    %79 = vector.load %arg7[%c0_29, %c336] : memref<8x512xbf16, #tpu.memory_space<vmem>>, vector<8x16xbf16>
    tpu.vector_store %arg7[%c0_29, %c336], %78 {strides = array<i32>} : memref<8x512xbf16, #tpu.memory_space<vmem>>, vector<8x16xbf16>,
    %80 = vector.extract_strided_slice %13 {offsets = [0, 22, 0], sizes = [8, 1, 16], strides = [1, 1, 1]} : vector<8x32x16xbf16> to vector<8x1x16xbf16>
    %81 = vector.shape_cast %80 : vector<8x1x16xbf16> to vector<8x16xbf16>
    %c0_30 = arith.constant 0 : index
    %c352 = arith.constant 352 : index
    %82 = vector.load %arg7[%c0_30, %c352] : memref<8x512xbf16, #tpu.memory_space<vmem>>, vector<8x16xbf16>
    tpu.vector_store %arg7[%c0_30, %c352], %81 {strides = array<i32>} : memref<8x512xbf16, #tpu.memory_space<vmem>>, vector<8x16xbf16>,
    %83 = vector.extract_strided_slice %13 {offsets = [0, 23, 0], sizes = [8, 1, 16], strides = [1, 1, 1]} : vector<8x32x16xbf16> to vector<8x1x16xbf16>
    %84 = vector.shape_cast %83 : vector<8x1x16xbf16> to vector<8x16xbf16>
    %c0_31 = arith.constant 0 : index
    %c368 = arith.constant 368 : index
    %85 = vector.load %arg7[%c0_31, %c368] : memref<8x512xbf16, #tpu.memory_space<vmem>>, vector<8x16xbf16>
    tpu.vector_store %arg7[%c0_31, %c368], %84 {strides = array<i32>} : memref<8x512xbf16, #tpu.memory_space<vmem>>, vector<8x16xbf16>,
    %86 = vector.extract_strided_slice %13 {offsets = [0, 24, 0], sizes = [8, 1, 16], strides = [1, 1, 1]} : vector<8x32x16xbf16> to vector<8x1x16xbf16>
    %87 = vector.shape_cast %86 : vector<8x1x16xbf16> to vector<8x16xbf16>
    %c0_32 = arith.constant 0 : index
    %c384 = arith.constant 384 : index
    %88 = vector.load %arg7[%c0_32, %c384] : memref<8x512xbf16, #tpu.memory_space<vmem>>, vector<8x16xbf16>
    tpu.vector_store %arg7[%c0_32, %c384], %87 {strides = array<i32>} : memref<8x512xbf16, #tpu.memory_space<vmem>>, vector<8x16xbf16>,
    %89 = vector.extract_strided_slice %13 {offsets = [0, 25, 0], sizes = [8, 1, 16], strides = [1, 1, 1]} : vector<8x32x16xbf16> to vector<8x1x16xbf16>
    %90 = vector.shape_cast %89 : vector<8x1x16xbf16> to vector<8x16xbf16>
    %c0_33 = arith.constant 0 : index
    %c400 = arith.constant 400 : index
    %91 = vector.load %arg7[%c0_33, %c400] : memref<8x512xbf16, #tpu.memory_space<vmem>>, vector<8x16xbf16>
    tpu.vector_store %arg7[%c0_33, %c400], %90 {strides = array<i32>} : memref<8x512xbf16, #tpu.memory_space<vmem>>, vector<8x16xbf16>,
    %92 = vector.extract_strided_slice %13 {offsets = [0, 26, 0], sizes = [8, 1, 16], strides = [1, 1, 1]} : vector<8x32x16xbf16> to vector<8x1x16xbf16>
    %93 = vector.shape_cast %92 : vector<8x1x16xbf16> to vector<8x16xbf16>
    %c0_34 = arith.constant 0 : index
    %c416 = arith.constant 416 : index
    %94 = vector.load %arg7[%c0_34, %c416] : memref<8x512xbf16, #tpu.memory_space<vmem>>, vector<8x16xbf16>
    tpu.vector_store %arg7[%c0_34, %c416], %93 {strides = array<i32>} : memref<8x512xbf16, #tpu.memory_space<vmem>>, vector<8x16xbf16>,
    %95 = vector.extract_strided_slice %13 {offsets = [0, 27, 0], sizes = [8, 1, 16], strides = [1, 1, 1]} : vector<8x32x16xbf16> to vector<8x1x16xbf16>
    %96 = vector.shape_cast %95 : vector<8x1x16xbf16> to vector<8x16xbf16>
    %c0_35 = arith.constant 0 : index
    %c432 = arith.constant 432 : index
    %97 = vector.load %arg7[%c0_35, %c432] : memref<8x512xbf16, #tpu.memory_space<vmem>>, vector<8x16xbf16>
    tpu.vector_store %arg7[%c0_35, %c432], %96 {strides = array<i32>} : memref<8x512xbf16, #tpu.memory_space<vmem>>, vector<8x16xbf16>,
    %98 = vector.extract_strided_slice %13 {offsets = [0, 28, 0], sizes = [8, 1, 16], strides = [1, 1, 1]} : vector<8x32x16xbf16> to vector<8x1x16xbf16>
    %99 = vector.shape_cast %98 : vector<8x1x16xbf16> to vector<8x16xbf16>
    %c0_36 = arith.constant 0 : index
    %c448 = arith.constant 448 : index
    %100 = vector.load %arg7[%c0_36, %c448] : memref<8x512xbf16, #tpu.memory_space<vmem>>, vector<8x16xbf16>
    tpu.vector_store %arg7[%c0_36, %c448], %99 {strides = array<i32>} : memref<8x512xbf16, #tpu.memory_space<vmem>>, vector<8x16xbf16>,
    %101 = vector.extract_strided_slice %13 {offsets = [0, 29, 0], sizes = [8, 1, 16], strides = [1, 1, 1]} : vector<8x32x16xbf16> to vector<8x1x16xbf16>
    %102 = vector.shape_cast %101 : vector<8x1x16xbf16> to vector<8x16xbf16>
    %c0_37 = arith.constant 0 : index
    %c464 = arith.constant 464 : index
    %103 = vector.load %arg7[%c0_37, %c464] : memref<8x512xbf16, #tpu.memory_space<vmem>>, vector<8x16xbf16>
    tpu.vector_store %arg7[%c0_37, %c464], %102 {strides = array<i32>} : memref<8x512xbf16, #tpu.memory_space<vmem>>, vector<8x16xbf16>,
    %104 = vector.extract_strided_slice %13 {offsets = [0, 30, 0], sizes = [8, 1, 16], strides = [1, 1, 1]} : vector<8x32x16xbf16> to vector<8x1x16xbf16>
    %105 = vector.shape_cast %104 : vector<8x1x16xbf16> to vector<8x16xbf16>
    %c0_38 = arith.constant 0 : index
    %c480 = arith.constant 480 : index
    %106 = vector.load %arg7[%c0_38, %c480] : memref<8x512xbf16, #tpu.memory_space<vmem>>, vector<8x16xbf16>
    tpu.vector_store %arg7[%c0_38, %c480], %105 {strides = array<i32>} : memref<8x512xbf16, #tpu.memory_space<vmem>>, vector<8x16xbf16>,
    %107 = vector.extract_strided_slice %13 {offsets = [0, 31, 0], sizes = [8, 1, 16], strides = [1, 1, 1]} : vector<8x32x16xbf16> to vector<8x1x16xbf16>
    %108 = vector.shape_cast %107 : vector<8x1x16xbf16> to vector<8x16xbf16>
    %c0_39 = arith.constant 0 : index
    %c496 = arith.constant 496 : index
    %109 = vector.load %arg7[%c0_39, %c496] : memref<8x512xbf16, #tpu.memory_space<vmem>>, vector<8x16xbf16>
    tpu.vector_store %arg7[%c0_39, %c496], %108 {strides = array<i32>} : memref<8x512xbf16, #tpu.memory_space<vmem>>, vector<8x16xbf16>,
    %c0_40 = arith.constant 0 : index
    %c0_41 = arith.constant 0 : index
    %110 = vector.load %arg7[%c0_40, %c0_41] : memref<8x512xbf16, #tpu.memory_space<vmem>>, vector<8x512xbf16>
    %c0_42 = arith.constant 0 : index
    %c0_43 = arith.constant 0 : index
    %111 = vector.load %arg4[%c0_42, %c0_43] : memref<512x128xbf16, #tpu.memory_space<vmem>>, vector<512x128xbf16>
    %cst_44 = arith.constant dense<0.000000e+00> : vector<8x128xf32>
    %112 = tpu.matmul %110, %111, %cst_44 {dimension_numbers = #tpu.dot_dimension_numbers<[1], [0], [0], [1], [0, 0, 1, 1], [], []>} : vector<8x512xbf16>, vector<512x128xbf16>, vector<8x128xf32> -> vector<8x128xf32>
    %c0_45 = arith.constant 0 : index
    %c0_46 = arith.constant 0 : index
    %113 = vector.load %arg5[%c0_45, %c0_46] : memref<1x128xf32, #tpu.memory_space<vmem>>, vector<1x128xf32>
    %114 = vector.broadcast %113 : vector<1x128xf32> to vector<8x128xf32>
    %115 = arith.addf %112, %114 : vector<8x128xf32>
    %c0_47 = arith.constant 0 : index
    %c0_48 = arith.constant 0 : index
    %116 = vector.load %arg6[%c0_47, %c0_48] : memref<8x128xf32, #tpu.memory_space<vmem>>, vector<8x128xf32>
    tpu.vector_store %arg6[%c0_47, %c0_48], %115 {strides = array<i32>} : memref<8x128xf32, #tpu.memory_space<vmem>>, vector<8x128xf32>,
    return
  }
  func.func @transform_0(%arg0: i32) -> (i32, i32, i32) {
    %c0_i32 = arith.constant 0 : i32
    %c0_i32_0 = arith.constant 0 : i32
    %c0_i32_1 = arith.constant 0 : i32
    return %arg0, %c0_i32, %c0_i32_0 : i32, i32, i32
  }
  func.func @transform_1(%arg0: i32) -> (i32, i32) {
    %c0_i32 = arith.constant 0 : i32
    %c0_i32_0 = arith.constant 0 : i32
    %c0_i32_1 = arith.constant 0 : i32
    return %c0_i32, %c0_i32_0 : i32, i32
  }
  func.func @transform_2(%arg0: i32) -> (i32, i32) {
    %c0_i32 = arith.constant 0 : i32
    %c0_i32_0 = arith.constant 0 : i32
    %c0_i32_1 = arith.constant 0 : i32
    return %c0_i32, %c0_i32_0 : i32, i32
  }
  func.func @transform_3(%arg0: i32) -> (i32, i32) {
    %c0_i32 = arith.constant 0 : i32
    %c0_i32_0 = arith.constant 0 : i32
    %c0_i32_1 = arith.constant 0 : i32
    return %c0_i32, %c0_i32_0 : i32, i32
  }
  func.func @transform_4(%arg0: i32) -> (i32, i32) {
    %c0_i32 = arith.constant 0 : i32
    %c0_i32_0 = arith.constant 0 : i32
    %c0_i32_1 = arith.constant 0 : i32
    return %c0_i32, %c0_i32_0 : i32, i32
  }
  func.func @transform_5(%arg0: i32) -> (i32, i32) {
    %c0_i32 = arith.constant 0 : i32
    %c0_i32_0 = arith.constant 0 : i32
    return %arg0, %c0_i32 : i32, i32
  }
}

module attributes {stable_mosaic.version = 11 : i64} {
  func.func @policy_head_kernel(%arg0: i32, %arg1: memref<8x4x16xf32, #tpu.memory_space<vmem>>, %arg2: memref<32x4xbf16, #tpu.memory_space<vmem>>, %arg3: memref<32x1xf32, #tpu.memory_space<vmem>>, %arg4: memref<512x128xbf16, #tpu.memory_space<vmem>>, %arg5: memref<1x128xf32, #tpu.memory_space<vmem>>, %arg6: memref<8x128xf32, #tpu.memory_space<vmem>>, %arg7: memref<8x512xbf16, #tpu.memory_space<vmem>>) attributes {dimension_semantics = [#tpu.dimension_semantics<parallel>], iteration_bounds = array<i64: 1>, scalar_prefetch = 0 : i64, scratch_operands = 1 : i64, tpu.core_type = #tpu.core_type<tc>, window_params = [{transform_indices = @transform_0, window_bounds = array<i64: 8, 4, 16>}, {pipeline_mode = #tpu.pipeline_mode<synchronous>, transform_indices = @transform_1, window_bounds = array<i64: 32, 4>}, {pipeline_mode = #tpu.pipeline_mode<synchronous>, transform_indices = @transform_2, window_bounds = array<i64: 32, 1>}, {pipeline_mode = #tpu.pipeline_mode<synchronous>, transform_indices = @transform_3, window_bounds = array<i64: 512, 128>}, {pipeline_mode = #tpu.pipeline_mode<synchronous>, transform_indices = @transform_4, window_bounds = array<i64: 1, 128>}, {transform_indices = @transform_5, window_bounds = array<i64: 8, 128>}]} {
    %c0 = arith.constant 0 : index
    %c0_0 = arith.constant 0 : index
    %c0_1 = arith.constant 0 : index
    %0 = vector.load %arg1[%c0, %c0_0, %c0_1] : memref<8x4x16xf32, #tpu.memory_space<vmem>>, vector<8x4x16xf32>
    %1 = arith.truncf %0 : vector<8x4x16xf32> to vector<8x4x16xbf16>
    %c0_2 = arith.constant 0 : index
    %c0_3 = arith.constant 0 : index
    %2 = vector.load %arg2[%c0_2, %c0_3] : memref<32x4xbf16, #tpu.memory_space<vmem>>, vector<32x4xbf16>
    %3 = vector.shape_cast %2 : vector<32x4xbf16> to vector<1x32x4xbf16>
    %4 = vector.shape_cast %3 : vector<1x32x4xbf16> to vector<1x32x4xbf16>
    %5 = vector.broadcast %4 : vector<1x32x4xbf16> to vector<8x32x4xbf16>
    "tpu.trace_start"() <{level = 10 : i32, message = "bfc,bcs->bfs"}> : () -> ()
    %cst = arith.constant dense<0.000000e+00> : vector<8x32x16xf32>
    %6 = tpu.matmul %5, %1, %cst {dimension_numbers = #tpu.dot_dimension_numbers<[2], [1], [1], [2], [0, 0, 0, 1, 1, 2], [0], [0]>} : vector<8x32x4xbf16>, vector<8x4x16xbf16>, vector<8x32x16xf32> -> vector<8x32x16xf32>
    "tpu.trace_stop"() : () -> ()
    %c0_4 = arith.constant 0 : index
    %c0_5 = arith.constant 0 : index
    %7 = vector.load %arg3[%c0_4, %c0_5] : memref<32x1xf32, #tpu.memory_space<vmem>>, vector<32x1xf32>
    %8 = vector.shape_cast %7 : vector<32x1xf32> to vector<1x32x1xf32>
    %9 = vector.broadcast %8 : vector<1x32x1xf32> to vector<8x32x16xf32>
    %10 = arith.addf %6, %9 : vector<8x32x16xf32>
    %cst_6 = arith.constant 0.000000e+00 : f32
    %11 = vector.broadcast %cst_6 : f32 to vector<8x32x16xf32>
    %12 = arith.maximumf %10, %11 : vector<8x32x16xf32>
    %13 = arith.truncf %12 : vector<8x32x16xf32> to vector<8x32x16xbf16>
    %14 = vector.extract_strided_slice %13 {offsets = [0, 0, 0], sizes = [8, 1, 16], strides = [1, 1, 1]} : vector<8x32x16xbf16> to vector<8x1x16xbf16>
    %15 = vector.shape_cast %14 : vector<8x1x16xbf16> to vector<8x16xbf16>
    %c0_7 = arith.constant 0 : index
    %c0_8 = arith.constant 0 : index
    %16 = vector.load %arg7[%c0_7, %c0_8] : memref<8x512xbf16, #tpu.memory_space<vmem>>, vector<8x16xbf16>
    tpu.vector_store %arg7[%c0_7, %c0_8], %15 {strides = array<i32>} : memref<8x512xbf16, #tpu.memory_space<vmem>>, vector<8x16xbf16>,
    %17 = vector.extract_strided_slice %13 {offsets = [0, 1, 0], sizes = [8, 1, 16], strides = [1, 1, 1]} : vector<8x32x16xbf16> to vector<8x1x16xbf16>
    %18 = vector.shape_cast %17 : vector<8x1x16xbf16> to vector<8x16xbf16>
    %c0_9 = arith.constant 0 : index
    %c16 = arith.constant 16 : index
    %19 = vector.load %arg7[%c0_9, %c16] : memref<8x512xbf16, #tpu.memory_space<vmem>>, vector<8x16xbf16>
    tpu.vector_store %arg7[%c0_9, %c16], %18 {strides = array<i32>} : memref<8x512xbf16, #tpu.memory_space<vmem>>, vector<8x16xbf16>,
    %20 = vector.extract_strided_slice %13 {offsets = [0, 2, 0], sizes = [8, 1, 16], strides = [1, 1, 1]} : vector<8x32x16xbf16> to vector<8x1x16xbf16>
    %21 = vector.shape_cast %20 : vector<8x1x16xbf16> to vector<8x16xbf16>
    %c0_10 = arith.constant 0 : index
    %c32 = arith.constant 32 : index
    %22 = vector.load %arg7[%c0_10, %c32] : memref<8x512xbf16, #tpu.memory_space<vmem>>, vector<8x16xbf16>
    tpu.vector_store %arg7[%c0_10, %c32], %21 {strides = array<i32>} : memref<8x512xbf16, #tpu.memory_space<vmem>>, vector<8x16xbf16>,
    %23 = vector.extract_strided_slice %13 {offsets = [0, 3, 0], sizes = [8, 1, 16], strides = [1, 1, 1]} : vector<8x32x16xbf16> to vector<8x1x16xbf16>
    %24 = vector.shape_cast %23 : vector<8x1x16xbf16> to vector<8x16xbf16>
    %c0_11 = arith.constant 0 : index
    %c48 = arith.constant 48 : index
    %25 = vector.load %arg7[%c0_11, %c48] : memref<8x512xbf16, #tpu.memory_space<vmem>>, vector<8x16xbf16>
    tpu.vector_store %arg7[%c0_11, %c48], %24 {strides = array<i32>} : memref<8x512xbf16, #tpu.memory_space<vmem>>, vector<8x16xbf16>,
    %26 = vector.extract_strided_slice %13 {offsets = [0, 4, 0], sizes = [8, 1, 16], strides = [1, 1, 1]} : vector<8x32x16xbf16> to vector<8x1x16xbf16>
    %27 = vector.shape_cast %26 : vector<8x1x16xbf16> to vector<8x16xbf16>
    %c0_12 = arith.constant 0 : index
    %c64 = arith.constant 64 : index
    %28 = vector.load %arg7[%c0_12, %c64] : memref<8x512xbf16, #tpu.memory_space<vmem>>, vector<8x16xbf16>
    tpu.vector_store %arg7[%c0_12, %c64], %27 {strides = array<i32>} : memref<8x512xbf16, #tpu.memory_space<vmem>>, vector<8x16xbf16>,
    %29 = vector.extract_strided_slice %13 {offsets = [0, 5, 0], sizes = [8, 1, 16], strides = [1, 1, 1]} : vector<8x32x16xbf16> to vector<8x1x16xbf16>
    %30 = vector.shape_cast %29 : vector<8x1x16xbf16> to vector<8x16xbf16>
    %c0_13 = arith.constant 0 : index
    %c80 = arith.constant 80 : index
    %31 = vector.load %arg7[%c0_13, %c80] : memref<8x512xbf16, #tpu.memory_space<vmem>>, vector<8x16xbf16>
    tpu.vector_store %arg7[%c0_13, %c80], %30 {strides = array<i32>} : memref<8x512xbf16, #tpu.memory_space<vmem>>, vector<8x16xbf16>,
    %32 = vector.extract_strided_slice %13 {offsets = [0, 6, 0], sizes = [8, 1, 16], strides = [1, 1, 1]} : vector<8x32x16xbf16> to vector<8x1x16xbf16>
    %33 = vector.shape_cast %32 : vector<8x1x16xbf16> to vector<8x16xbf16>
    %c0_14 = arith.constant 0 : index
    %c96 = arith.constant 96 : index
    %34 = vector.load %arg7[%c0_14, %c96] : memref<8x512xbf16, #tpu.memory_space<vmem>>, vector<8x16xbf16>
    tpu.vector_store %arg7[%c0_14, %c96], %33 {strides = array<i32>} : memref<8x512xbf16, #tpu.memory_space<vmem>>, vector<8x16xbf16>,
    %35 = vector.extract_strided_slice %13 {offsets = [0, 7, 0], sizes = [8, 1, 16], strides = [1, 1, 1]} : vector<8x32x16xbf16> to vector<8x1x16xbf16>
    %36 = vector.shape_cast %35 : vector<8x1x16xbf16> to vector<8x16xbf16>
    %c0_15 = arith.constant 0 : index
    %c112 = arith.constant 112 : index
    %37 = vector.load %arg7[%c0_15, %c112] : memref<8x512xbf16, #tpu.memory_space<vmem>>, vector<8x16xbf16>
    tpu.vector_store %arg7[%c0_15, %c112], %36 {strides = array<i32>} : memref<8x512xbf16, #tpu.memory_space<vmem>>, vector<8x16xbf16>,
    %38 = vector.extract_strided_slice %13 {offsets = [0, 8, 0], sizes = [8, 1, 16], strides = [1, 1, 1]} : vector<8x32x16xbf16> to vector<8x1x16xbf16>
    %39 = vector.shape_cast %38 : vector<8x1x16xbf16> to vector<8x16xbf16>
    %c0_16 = arith.constant 0 : index
    %c128 = arith.constant 128 : index
    %40 = vector.load %arg7[%c0_16, %c128] : memref<8x512xbf16, #tpu.memory_space<vmem>>, vector<8x16xbf16>
    tpu.vector_store %arg7[%c0_16, %c128], %39 {strides = array<i32>} : memref<8x512xbf16, #tpu.memory_space<vmem>>, vector<8x16xbf16>,
    %41 = vector.extract_strided_slice %13 {offsets = [0, 9, 0], sizes = [8, 1, 16], strides = [1, 1, 1]} : vector<8x32x16xbf16> to vector<8x1x16xbf16>
    %42 = vector.shape_cast %41 : vector<8x1x16xbf16> to vector<8x16xbf16>
    %c0_17 = arith.constant 0 : index
    %c144 = arith.constant 144 : index
    %43 = vector.load %arg7[%c0_17, %c144] : memref<8x512xbf16, #tpu.memory_space<vmem>>, vector<8x16xbf16>
    tpu.vector_store %arg7[%c0_17, %c144], %42 {strides = array<i32>} : memref<8x512xbf16, #tpu.memory_space<vmem>>, vector<8x16xbf16>,
    %44 = vector.extract_strided_slice %13 {offsets = [0, 10, 0], sizes = [8, 1, 16], strides = [1, 1, 1]} : vector<8x32x16xbf16> to vector<8x1x16xbf16>
    %45 = vector.shape_cast %44 : vector<8x1x16xbf16> to vector<8x16xbf16>
    %c0_18 = arith.constant 0 : index
    %c160 = arith.constant 160 : index
    %46 = vector.load %arg7[%c0_18, %c160] : memref<8x512xbf16, #tpu.memory_space<vmem>>, vector<8x16xbf16>
    tpu.vector_store %arg7[%c0_18, %c160], %45 {strides = array<i32>} : memref<8x512xbf16, #tpu.memory_space<vmem>>, vector<8x16xbf16>,
    %47 = vector.extract_strided_slice %13 {offsets = [0, 11, 0], sizes = [8, 1, 16], strides = [1, 1, 1]} : vector<8x32x16xbf16> to vector<8x1x16xbf16>
    %48 = vector.shape_cast %47 : vector<8x1x16xbf16> to vector<8x16xbf16>
    %c0_19 = arith.constant 0 : index
    %c176 = arith.constant 176 : index
    %49 = vector.load %arg7[%c0_19, %c176] : memref<8x512xbf16, #tpu.memory_space<vmem>>, vector<8x16xbf16>
    tpu.vector_store %arg7[%c0_19, %c176], %48 {strides = array<i32>} : memref<8x512xbf16, #tpu.memory_space<vmem>>, vector<8x16xbf16>,
    %50 = vector.extract_strided_slice %13 {offsets = [0, 12, 0], sizes = [8, 1, 16], strides = [1, 1, 1]} : vector<8x32x16xbf16> to vector<8x1x16xbf16>
    %51 = vector.shape_cast %50 : vector<8x1x16xbf16> to vector<8x16xbf16>
    %c0_20 = arith.constant 0 : index
    %c192 = arith.constant 192 : index
    %52 = vector.load %arg7[%c0_20, %c192] : memref<8x512xbf16, #tpu.memory_space<vmem>>, vector<8x16xbf16>
    tpu.vector_store %arg7[%c0_20, %c192], %51 {strides = array<i32>} : memref<8x512xbf16, #tpu.memory_space<vmem>>, vector<8x16xbf16>,
    %53 = vector.extract_strided_slice %13 {offsets = [0, 13, 0], sizes = [8, 1, 16], strides = [1, 1, 1]} : vector<8x32x16xbf16> to vector<8x1x16xbf16>
    %54 = vector.shape_cast %53 : vector<8x1x16xbf16> to vector<8x16xbf16>
    %c0_21 = arith.constant 0 : index
    %c208 = arith.constant 208 : index
    %55 = vector.load %arg7[%c0_21, %c208] : memref<8x512xbf16, #tpu.memory_space<vmem>>, vector<8x16xbf16>
    tpu.vector_store %arg7[%c0_21, %c208], %54 {strides = array<i32>} : memref<8x512xbf16, #tpu.memory_space<vmem>>, vector<8x16xbf16>,
    %56 = vector.extract_strided_slice %13 {offsets = [0, 14, 0], sizes = [8, 1, 16], strides = [1, 1, 1]} : vector<8x32x16xbf16> to vector<8x1x16xbf16>
    %57 = vector.shape_cast %56 : vector<8x1x16xbf16> to vector<8x16xbf16>
    %c0_22 = arith.constant 0 : index
    %c224 = arith.constant 224 : index
    %58 = vector.load %arg7[%c0_22, %c224] : memref<8x512xbf16, #tpu.memory_space<vmem>>, vector<8x16xbf16>
    tpu.vector_store %arg7[%c0_22, %c224], %57 {strides = array<i32>} : memref<8x512xbf16, #tpu.memory_space<vmem>>, vector<8x16xbf16>,
    %59 = vector.extract_strided_slice %13 {offsets = [0, 15, 0], sizes = [8, 1, 16], strides = [1, 1, 1]} : vector<8x32x16xbf16> to vector<8x1x16xbf16>
    %60 = vector.shape_cast %59 : vector<8x1x16xbf16> to vector<8x16xbf16>
    %c0_23 = arith.constant 0 : index
    %c240 = arith.constant 240 : index
    %61 = vector.load %arg7[%c0_23, %c240] : memref<8x512xbf16, #tpu.memory_space<vmem>>, vector<8x16xbf16>
    tpu.vector_store %arg7[%c0_23, %c240], %60 {strides = array<i32>} : memref<8x512xbf16, #tpu.memory_space<vmem>>, vector<8x16xbf16>,
    %62 = vector.extract_strided_slice %13 {offsets = [0, 16, 0], sizes = [8, 1, 16], strides = [1, 1, 1]} : vector<8x32x16xbf16> to vector<8x1x16xbf16>
    %63 = vector.shape_cast %62 : vector<8x1x16xbf16> to vector<8x16xbf16>
    %c0_24 = arith.constant 0 : index
    %c256 = arith.constant 256 : index
    %64 = vector.load %arg7[%c0_24, %c256] : memref<8x512xbf16, #tpu.memory_space<vmem>>, vector<8x16xbf16>
    tpu.vector_store %arg7[%c0_24, %c256], %63 {strides = array<i32>} : memref<8x512xbf16, #tpu.memory_space<vmem>>, vector<8x16xbf16>,
    %65 = vector.extract_strided_slice %13 {offsets = [0, 17, 0], sizes = [8, 1, 16], strides = [1, 1, 1]} : vector<8x32x16xbf16> to vector<8x1x16xbf16>
    %66 = vector.shape_cast %65 : vector<8x1x16xbf16> to vector<8x16xbf16>
    %c0_25 = arith.constant 0 : index
    %c272 = arith.constant 272 : index
    %67 = vector.load %arg7[%c0_25, %c272] : memref<8x512xbf16, #tpu.memory_space<vmem>>, vector<8x16xbf16>
    tpu.vector_store %arg7[%c0_25, %c272], %66 {strides = array<i32>} : memref<8x512xbf16, #tpu.memory_space<vmem>>, vector<8x16xbf16>,
    %68 = vector.extract_strided_slice %13 {offsets = [0, 18, 0], sizes = [8, 1, 16], strides = [1, 1, 1]} : vector<8x32x16xbf16> to vector<8x1x16xbf16>
    %69 = vector.shape_cast %68 : vector<8x1x16xbf16> to vector<8x16xbf16>
    %c0_26 = arith.constant 0 : index
    %c288 = arith.constant 288 : index
    %70 = vector.load %arg7[%c0_26, %c288] : memref<8x512xbf16, #tpu.memory_space<vmem>>, vector<8x16xbf16>
    tpu.vector_store %arg7[%c0_26, %c288], %69 {strides = array<i32>} : memref<8x512xbf16, #tpu.memory_space<vmem>>, vector<8x16xbf16>,
    %71 = vector.extract_strided_slice %13 {offsets = [0, 19, 0], sizes = [8, 1, 16], strides = [1, 1, 1]} : vector<8x32x16xbf16> to vector<8x1x16xbf16>
    %72 = vector.shape_cast %71 : vector<8x1x16xbf16> to vector<8x16xbf16>
    %c0_27 = arith.constant 0 : index
    %c304 = arith.constant 304 : index
    %73 = vector.load %arg7[%c0_27, %c304] : memref<8x512xbf16, #tpu.memory_space<vmem>>, vector<8x16xbf16>
    tpu.vector_store %arg7[%c0_27, %c304], %72 {strides = array<i32>} : memref<8x512xbf16, #tpu.memory_space<vmem>>, vector<8x16xbf16>,
    %74 = vector.extract_strided_slice %13 {offsets = [0, 20, 0], sizes = [8, 1, 16], strides = [1, 1, 1]} : vector<8x32x16xbf16> to vector<8x1x16xbf16>
    %75 = vector.shape_cast %74 : vector<8x1x16xbf16> to vector<8x16xbf16>
    %c0_28 = arith.constant 0 : index
    %c320 = arith.constant 320 : index
    %76 = vector.load %arg7[%c0_28, %c320] : memref<8x512xbf16, #tpu.memory_space<vmem>>, vector<8x16xbf16>
    tpu.vector_store %arg7[%c0_28, %c320], %75 {strides = array<i32>} : memref<8x512xbf16, #tpu.memory_space<vmem>>, vector<8x16xbf16>,
    %77 = vector.extract_strided_slice %13 {offsets = [0, 21, 0], sizes = [8, 1, 16], strides = [1, 1, 1]} : vector<8x32x16xbf16> to vector<8x1x16xbf16>
    %78 = vector.shape_cast %77 : vector<8x1x16xbf16> to vector<8x16xbf16>
    %c0_29 = arith.constant 0 : index
    %c336 = arith.constant 336 : index
    %79 = vector.load %arg7[%c0_29, %c336] : memref<8x512xbf16, #tpu.memory_space<vmem>>, vector<8x16xbf16>
    tpu.vector_store %arg7[%c0_29, %c336], %78 {strides = array<i32>} : memref<8x512xbf16, #tpu.memory_space<vmem>>, vector<8x16xbf16>,
    %80 = vector.extract_strided_slice %13 {offsets = [0, 22, 0], sizes = [8, 1, 16], strides = [1, 1, 1]} : vector<8x32x16xbf16> to vector<8x1x16xbf16>
    %81 = vector.shape_cast %80 : vector<8x1x16xbf16> to vector<8x16xbf16>
    %c0_30 = arith.constant 0 : index
    %c352 = arith.constant 352 : index
    %82 = vector.load %arg7[%c0_30, %c352] : memref<8x512xbf16, #tpu.memory_space<vmem>>, vector<8x16xbf16>
    tpu.vector_store %arg7[%c0_30, %c352], %81 {strides = array<i32>} : memref<8x512xbf16, #tpu.memory_space<vmem>>, vector<8x16xbf16>,
    %83 = vector.extract_strided_slice %13 {offsets = [0, 23, 0], sizes = [8, 1, 16], strides = [1, 1, 1]} : vector<8x32x16xbf16> to vector<8x1x16xbf16>
    %84 = vector.shape_cast %83 : vector<8x1x16xbf16> to vector<8x16xbf16>
    %c0_31 = arith.constant 0 : index
    %c368 = arith.constant 368 : index
    %85 = vector.load %arg7[%c0_31, %c368] : memref<8x512xbf16, #tpu.memory_space<vmem>>, vector<8x16xbf16>
    tpu.vector_store %arg7[%c0_31, %c368], %84 {strides = array<i32>} : memref<8x512xbf16, #tpu.memory_space<vmem>>, vector<8x16xbf16>,
    %86 = vector.extract_strided_slice %13 {offsets = [0, 24, 0], sizes = [8, 1, 16], strides = [1, 1, 1]} : vector<8x32x16xbf16> to vector<8x1x16xbf16>
    %87 = vector.shape_cast %86 : vector<8x1x16xbf16> to vector<8x16xbf16>
    %c0_32 = arith.constant 0 : index
    %c384 = arith.constant 384 : index
    %88 = vector.load %arg7[%c0_32, %c384] : memref<8x512xbf16, #tpu.memory_space<vmem>>, vector<8x16xbf16>
    tpu.vector_store %arg7[%c0_32, %c384], %87 {strides = array<i32>} : memref<8x512xbf16, #tpu.memory_space<vmem>>, vector<8x16xbf16>,
    %89 = vector.extract_strided_slice %13 {offsets = [0, 25, 0], sizes = [8, 1, 16], strides = [1, 1, 1]} : vector<8x32x16xbf16> to vector<8x1x16xbf16>
    %90 = vector.shape_cast %89 : vector<8x1x16xbf16> to vector<8x16xbf16>
    %c0_33 = arith.constant 0 : index
    %c400 = arith.constant 400 : index
    %91 = vector.load %arg7[%c0_33, %c400] : memref<8x512xbf16, #tpu.memory_space<vmem>>, vector<8x16xbf16>
    tpu.vector_store %arg7[%c0_33, %c400], %90 {strides = array<i32>} : memref<8x512xbf16, #tpu.memory_space<vmem>>, vector<8x16xbf16>,
    %92 = vector.extract_strided_slice %13 {offsets = [0, 26, 0], sizes = [8, 1, 16], strides = [1, 1, 1]} : vector<8x32x16xbf16> to vector<8x1x16xbf16>
    %93 = vector.shape_cast %92 : vector<8x1x16xbf16> to vector<8x16xbf16>
    %c0_34 = arith.constant 0 : index
    %c416 = arith.constant 416 : index
    %94 = vector.load %arg7[%c0_34, %c416] : memref<8x512xbf16, #tpu.memory_space<vmem>>, vector<8x16xbf16>
    tpu.vector_store %arg7[%c0_34, %c416], %93 {strides = array<i32>} : memref<8x512xbf16, #tpu.memory_space<vmem>>, vector<8x16xbf16>,
    %95 = vector.extract_strided_slice %13 {offsets = [0, 27, 0], sizes = [8, 1, 16], strides = [1, 1, 1]} : vector<8x32x16xbf16> to vector<8x1x16xbf16>
    %96 = vector.shape_cast %95 : vector<8x1x16xbf16> to vector<8x16xbf16>
    %c0_35 = arith.constant 0 : index
    %c432 = arith.constant 432 : index
    %97 = vector.load %arg7[%c0_35, %c432] : memref<8x512xbf16, #tpu.memory_space<vmem>>, vector<8x16xbf16>
    tpu.vector_store %arg7[%c0_35, %c432], %96 {strides = array<i32>} : memref<8x512xbf16, #tpu.memory_space<vmem>>, vector<8x16xbf16>,
    %98 = vector.extract_strided_slice %13 {offsets = [0, 28, 0], sizes = [8, 1, 16], strides = [1, 1, 1]} : vector<8x32x16xbf16> to vector<8x1x16xbf16>
    %99 = vector.shape_cast %98 : vector<8x1x16xbf16> to vector<8x16xbf16>
    %c0_36 = arith.constant 0 : index
    %c448 = arith.constant 448 : index
    %100 = vector.load %arg7[%c0_36, %c448] : memref<8x512xbf16, #tpu.memory_space<vmem>>, vector<8x16xbf16>
    tpu.vector_store %arg7[%c0_36, %c448], %99 {strides = array<i32>} : memref<8x512xbf16, #tpu.memory_space<vmem>>, vector<8x16xbf16>,
    %101 = vector.extract_strided_slice %13 {offsets = [0, 29, 0], sizes = [8, 1, 16], strides = [1, 1, 1]} : vector<8x32x16xbf16> to vector<8x1x16xbf16>
    %102 = vector.shape_cast %101 : vector<8x1x16xbf16> to vector<8x16xbf16>
    %c0_37 = arith.constant 0 : index
    %c464 = arith.constant 464 : index
    %103 = vector.load %arg7[%c0_37, %c464] : memref<8x512xbf16, #tpu.memory_space<vmem>>, vector<8x16xbf16>
    tpu.vector_store %arg7[%c0_37, %c464], %102 {strides = array<i32>} : memref<8x512xbf16, #tpu.memory_space<vmem>>, vector<8x16xbf16>,
    %104 = vector.extract_strided_slice %13 {offsets = [0, 30, 0], sizes = [8, 1, 16], strides = [1, 1, 1]} : vector<8x32x16xbf16> to vector<8x1x16xbf16>
    %105 = vector.shape_cast %104 : vector<8x1x16xbf16> to vector<8x16xbf16>
    %c0_38 = arith.constant 0 : index
    %c480 = arith.constant 480 : index
    %106 = vector.load %arg7[%c0_38, %c480] : memref<8x512xbf16, #tpu.memory_space<vmem>>, vector<8x16xbf16>
    tpu.vector_store %arg7[%c0_38, %c480], %105 {strides = array<i32>} : memref<8x512xbf16, #tpu.memory_space<vmem>>, vector<8x16xbf16>,
    %107 = vector.extract_strided_slice %13 {offsets = [0, 31, 0], sizes = [8, 1, 16], strides = [1, 1, 1]} : vector<8x32x16xbf16> to vector<8x1x16xbf16>
    %108 = vector.shape_cast %107 : vector<8x1x16xbf16> to vector<8x16xbf16>
    %c0_39 = arith.constant 0 : index
    %c496 = arith.constant 496 : index
    %109 = vector.load %arg7[%c0_39, %c496] : memref<8x512xbf16, #tpu.memory_space<vmem>>, vector<8x16xbf16>
    tpu.vector_store %arg7[%c0_39, %c496], %108 {strides = array<i32>} : memref<8x512xbf16, #tpu.memory_space<vmem>>, vector<8x16xbf16>,
    %c0_40 = arith.constant 0 : index
    %c0_41 = arith.constant 0 : index
    %110 = vector.load %arg7[%c0_40, %c0_41] : memref<8x512xbf16, #tpu.memory_space<vmem>>, vector<8x512xbf16>
    %c0_42 = arith.constant 0 : index
    %c0_43 = arith.constant 0 : index
    %111 = vector.load %arg4[%c0_42, %c0_43] : memref<512x128xbf16, #tpu.memory_space<vmem>>, vector<512x128xbf16>
    %cst_44 = arith.constant dense<0.000000e+00> : vector<8x128xf32>
    %112 = tpu.matmul %110, %111, %cst_44 {dimension_numbers = #tpu.dot_dimension_numbers<[1], [0], [0], [1], [0, 0, 1, 1], [], []>} : vector<8x512xbf16>, vector<512x128xbf16>, vector<8x128xf32> -> vector<8x128xf32>
    %c0_45 = arith.constant 0 : index
    %c0_46 = arith.constant 0 : index
    %113 = vector.load %arg5[%c0_45, %c0_46] : memref<1x128xf32, #tpu.memory_space<vmem>>, vector<1x128xf32>
    %114 = vector.broadcast %113 : vector<1x128xf32> to vector<8x128xf32>
    %115 = arith.addf %112, %114 : vector<8x128xf32>
    %c0_47 = arith.constant 0 : index
    %c0_48 = arith.constant 0 : index
    %116 = vector.load %arg6[%c0_47, %c0_48] : memref<8x128xf32, #tpu.memory_space<vmem>>, vector<8x128xf32>
    tpu.vector_store %arg6[%c0_47, %c0_48], %115 {strides = array<i32>} : memref<8x128xf32, #tpu.memory_space<vmem>>, vector<8x128xf32>,
    return
  }
  func.func @transform_0(%arg0: i32) -> (i32, i32, i32) {
    %c0_i32 = arith.constant 0 : i32
    %c0_i32_0 = arith.constant 0 : i32
    %c0_i32_1 = arith.constant 0 : i32
    return %arg0, %c0_i32, %c0_i32_0 : i32, i32, i32
  }
  func.func @transform_1(%arg0: i32) -> (i32, i32) {
    %c0_i32 = arith.constant 0 : i32
    %c0_i32_0 = arith.constant 0 : i32
    %c0_i32_1 = arith.constant 0 : i32
    return %c0_i32, %c0_i32_0 : i32, i32
  }
  func.func @transform_2(%arg0: i32) -> (i32, i32) {
    %c0_i32 = arith.constant 0 : i32
    %c0_i32_0 = arith.constant 0 : i32
    %c0_i32_1 = arith.constant 0 : i32
    return %c0_i32, %c0_i32_0 : i32, i32
  }
  func.func @transform_3(%arg0: i32) -> (i32, i32) {
    %c0_i32 = arith.constant 0 : i32
    %c0_i32_0 = arith.constant 0 : i32
    %c0_i32_1 = arith.constant 0 : i32
    return %c0_i32, %c0_i32_0 : i32, i32
  }
  func.func @transform_4(%arg0: i32) -> (i32, i32) {
    %c0_i32 = arith.constant 0 : i32
    %c0_i32_0 = arith.constant 0 : i32
    %c0_i32_1 = arith.constant 0 : i32
    return %c0_i32, %c0_i32_0 : i32, i32
  }
  func.func @transform_5(%arg0: i32) -> (i32, i32) {
    %c0_i32 = arith.constant 0 : i32
    %c0_i32_0 = arith.constant 0 : i32
    return %arg0, %c0_i32 : i32, i32
  }
}

</mosaic_0001>

<llo_original>
// kernel: tpu_custom_call.1
$region0: #{tpu_custom_call.1}
  #allocation0 [shape = 'u32[]', space=smem, size = 0x4, offset = 0x4, fixed_abs, tag = 'smem constant byte address 0x4 - core index']
  #allocation1 [shape = 'u32[72,128]{1,0:T(1,128)}', space=vmem, size = 0x9000, scoped, tag = 'internal scratch']
  #allocation2 [shape = 'bf16[8,512]{1,0:T(8,128)(2,1)}', space=vmem, size = 0x2000, scoped, tag = 'scratch operand']
  %s0 = inlined_call_operand.vmem [shape: f32[8,4,16], index: 0, kind: input, shape index: {}]
  %s1 = inlined_call_operand.vmem [shape: bf16[32,4], index: 1, kind: input, shape index: {}]
  %s2 = inlined_call_operand.vmem [shape: f32[32,1], index: 2, kind: input, shape index: {}]
  %s3 = inlined_call_operand.hbm [shape: bf16[512,128], index: 3, kind: input, shape index: {}]
  %s4 = inlined_call_operand.vmem [shape: f32[1,128], index: 4, kind: input, shape index: {}]
  %s5 = inlined_call_operand.hbm [shape: f32[8,128], index: 5, kind: output, shape index: {}]
  %s6 = sld [smem:[#allocation0]]
  $region34: #{tpu_custom_call.1} parent=0
    _
  %s8 = ssub.s32 1, %s6
  %s9 = scalar_select 0, %s8, %s6
  $region1: #{tpu_custom_call.1} parent=0
    #allocation3 [shape = 'u8[131072]{0}', space=vmem, size = 0x20000, scoped, tag = 'input window, operand 3, single buffered']
    #allocation4 [shape = 's32[1]{0}', space=sflag, size = 0x4, scoped, tag = 'scoped memory for tpu_custom_call.1']
    #allocation5 [shape = 's32[1]{0}', space=sflag, size = 0x4, scoped, tag = 'scoped memory for tpu_custom_call.1']
    #allocation6 [shape = 'u8[4096]{0}', space=vmem, size = 0x1000, scoped, tag = 'output window, operand 0, single buffered']
    %10 = vsyncpa [#allocation4], 0
    %11 = vsyncpa [#allocation5], 0
    // Predicated region
    $region2: #{tpu_custom_call.1} parent=1 // pred_check
      _
    $region3: #{tpu_custom_call.1} parent=1 // pred_check_branch
      %13 = sbr.rel (0) target = $region5
    $region4: #{tpu_custom_call.1} parent=1 // pred_region
      _
    $region5: #{tpu_custom_call.1} parent=1 // pred_fallthru
      _
    // Predicated region
    $region6: #{tpu_custom_call.1} parent=1 // pred_check
      _
    $region7: #{tpu_custom_call.1} parent=1 // pred_check_branch
      %15 = sbr.rel (0) target = $region9
    $region8: #{tpu_custom_call.1} parent=1 // pred_region
      _
    $region9: #{tpu_custom_call.1} parent=1 // pred_fallthru
      _
    // Predicated region
    $region10: #{tpu_custom_call.1} parent=1 // pred_check
      _
    $region11: #{tpu_custom_call.1} parent=1 // pred_check_branch
      %17 = sbr.rel (0) target = $region13
    $region12: #{tpu_custom_call.1} parent=1 // pred_region
      _
    $region13: #{tpu_custom_call.1} parent=1 // pred_fallthru
      _
    // Predicated region
    $region14: #{tpu_custom_call.1} parent=1 // pred_check
      _
    $region15: #{tpu_custom_call.1} parent=1 // pred_check_branch
      %19 = sbr.rel (0) target = $region17
    $region16: #{tpu_custom_call.1} parent=1 // pred_region
      %21 = vsyncadd [#allocation4], 0
      %s22 = sshll.u32 %s3, 4
      %s23 = int_to_ptr.hbm [resolvable:$true] %s22
      %s24 = sshll.u32 [#allocation3], 4
      %s25 = int_to_ptr.vmem [resolvable:$true] %s24
      %30 = dma.hbm_to_vmem [thread:$0]  %s23, 4096, %s25, [#allocation4], 64, 64, 4
    $region17: #{tpu_custom_call.1} parent=1 // pred_fallthru
      _
    // Predicated region
    $region18: #{tpu_custom_call.1} parent=1 // pred_check
      _
    $region19: #{tpu_custom_call.1} parent=1 // pred_check_branch
      %32 = sbr.rel (0) target = $region21
    $region20: #{tpu_custom_call.1} parent=1 // pred_region
      _
    $region21: #{tpu_custom_call.1} parent=1 // pred_fallthru
      _
    // Predicated region
    $region22: #{tpu_custom_call.1} parent=1 // pred_check
      _
    $region23: #{tpu_custom_call.1} parent=1 // pred_check_branch
      %34 = sbr.rel (0) target = $region25
    $region24: #{tpu_custom_call.1} parent=1 // pred_region
      %36 = dma.done [#allocation4], 4096
    $region25: #{tpu_custom_call.1} parent=1 // pred_fallthru
      _
    %v38 = vld [vmem:[%s0] sm:$0xf]
    %v39 = vld [vmem:[%s0 + $0x4] sm:$0xf]
    %v40 = vld [vmem:[%s0 + $0x8] sm:$0xf]
    %v41 = vld [vmem:[%s0 + $0xc] sm:$0xf]
    %v42 = vld [vmem:[%s0 + $0x10] sm:$0xf]
    %v43 = vld [vmem:[%s0 + $0x14] sm:$0xf]
    %v44 = vld [vmem:[%s0 + $0x18] sm:$0xf]
    %v45 = vld [vmem:[%s0 + $0x1c] sm:$0xf]
    %v46 = vpack.c.bf16 %v38, %v38
    %v47 = vpack.c.bf16 %v39, %v39
    %v48 = vpack.c.bf16 %v40, %v40
    %v49 = vpack.c.bf16 %v41, %v41
    %v50 = vpack.c.bf16 %v42, %v42
    %v51 = vpack.c.bf16 %v43, %v43
    %v52 = vpack.c.bf16 %v44, %v44
    %v53 = vpack.c.bf16 %v45, %v45
    %v54 = vld [vmem:[%s1] sm:$0xf]
    %v55 = vld [vmem:[%s1 + $0x4] sm:$0xf]
    %v56 = vld [vmem:[%s1 + $0x8] sm:$0xf]
    %v57 = vld [vmem:[%s1 + $0xc] sm:$0xf]
    %v58 = vld [vmem:[%s2] sm:$0xff]
    %v59 = vld [vmem:[%s2 + $0x8] sm:$0xff]
    %v60 = vld [vmem:[%s2 + $0x10] sm:$0xff]
    %v61 = vld [vmem:[%s2 + $0x18] sm:$0xff]
    %63 = vset.pattern.permute.xlu0 0
    %64 = vperm.xlu0 %63, %v58
    %v65 = vpop.permute.xlu0 %64
    %68 = vset.pattern.permute.xlu0 0
    %69 = vperm.xlu0 %68, %v59
    %v70 = vpop.permute.xlu0 %69
    %73 = vset.pattern.permute.xlu0 0
    %74 = vperm.xlu0 %73, %v60
    %v75 = vpop.permute.xlu0 %74
    %78 = vset.pattern.permute.xlu0 0
    %79 = vperm.xlu0 %78, %v61
    %v80 = vpop.permute.xlu0 %79
    %v86 = vunpack.c.l.b16 %v54
    %v87 = vunpack.c.l.b16 %v55
    %v88 = vunpack.c.l.b16 %v56
    %v89 = vunpack.c.l.b16 %v57
    %v90 = vpack.c.b16 %v87, %v86
    %v91 = vpack.c.b16 %v89, %v88
    %vm92 = vcmask 31744
    %v94 = vsel %vm92, %v90, 0
    %v97 = vsel %vm92, %v91, 0
    %vm99 = vcmask 1041408
    %v101 = vsel %vm99, %v46, 0
    %103 = vmatpush.bf16.msra.mxu0 0
    %104 = vmatpush.bf16.msra.mxu0 0
    %105 = vmatpush.bf16.msra.mxu0 0
    %106 = vmatpush.bf16.msra.mxu0 0
    %107 = vmatpush.bf16.msra.mxu0 0
    %108 = vmatpush.bf16.msra.mxu0 0
    %109 = vmatpush.bf16.msra.mxu0 0
    %110 = vmatpush.bf16.msra.mxu0 %v101
    %111 = vmatmul.bf16.gmra.mxu0 %v94
    %v112 = vpop.f32.mrf.mxu0
    %v113 = vadd.f32 %v65, %v112
    %v114 = vpop.f32.mrf.mxu0
    %v115 = vadd.f32 %v70, %v114
    %116 = vmatmul.bf16.gmra.mxu0 %v97
    %v117 = vpop.f32.mrf.mxu0
    %v118 = vadd.f32 %v75, %v117
    %v119 = vpop.f32.mrf.mxu0
    %v120 = vadd.f32 %v80, %v119
    %121 = vdwg.mxu0
    %v123 = vsel %vm99, %v47, 0
    %125 = vmatpush.bf16.msra.mxu0 0
    %126 = vmatpush.bf16.msra.mxu0 0
    %127 = vmatpush.bf16.msra.mxu0 0
    %128 = vmatpush.bf16.msra.mxu0 0
    %129 = vmatpush.bf16.msra.mxu0 0
    %130 = vmatpush.bf16.msra.mxu0 0
    %131 = vmatpush.bf16.msra.mxu0 0
    %132 = vmatpush.bf16.msra.mxu0 %v123
    %133 = vmatmul.bf16.gmra.mxu0 %v94
    %v134 = vpop.f32.mrf.mxu0
    %v135 = vadd.f32 %v65, %v134
    %v136 = vpop.f32.mrf.mxu0
    %v137 = vadd.f32 %v70, %v136
    %138 = vmatmul.bf16.gmra.mxu0 %v97
    %v139 = vpop.f32.mrf.mxu0
    %v140 = vadd.f32 %v75, %v139
    %v141 = vpop.f32.mrf.mxu0
    %v142 = vadd.f32 %v80, %v141
    %143 = vdwg.mxu0
    %v145 = vsel %vm99, %v48, 0
    %147 = vmatpush.bf16.msra.mxu0 0
    %148 = vmatpush.bf16.msra.mxu0 0
    %149 = vmatpush.bf16.msra.mxu0 0
    %150 = vmatpush.bf16.msra.mxu0 0
    %151 = vmatpush.bf16.msra.mxu0 0
    %152 = vmatpush.bf16.msra.mxu0 0
    %153 = vmatpush.bf16.msra.mxu0 0
    %154 = vmatpush.bf16.msra.mxu0 %v145
    %155 = vmatmul.bf16.gmra.mxu0 %v94
    %v156 = vpop.f32.mrf.mxu0
    %v157 = vadd.f32 %v65, %v156
    %v158 = vpop.f32.mrf.mxu0
    %v159 = vadd.f32 %v70, %v158
    %160 = vmatmul.bf16.gmra.mxu0 %v97
    %v161 = vpop.f32.mrf.mxu0
    %v162 = vadd.f32 %v75, %v161
    %v163 = vpop.f32.mrf.mxu0
    %v164 = vadd.f32 %v80, %v163
    %165 = vdwg.mxu0
    %v167 = vsel %vm99, %v49, 0
    %169 = vmatpush.bf16.msra.mxu0 0
    %170 = vmatpush.bf16.msra.mxu0 0
    %171 = vmatpush.bf16.msra.mxu0 0
    %172 = vmatpush.bf16.msra.mxu0 0
    %173 = vmatpush.bf16.msra.mxu0 0
    %174 = vmatpush.bf16.msra.mxu0 0
    %175 = vmatpush.bf16.msra.mxu0 0
    %176 = vmatpush.bf16.msra.mxu0 %v167
    %177 = vmatmul.bf16.gmra.mxu0 %v94
    %v178 = vpop.f32.mrf.mxu0
    %v179 = vadd.f32 %v65, %v178
    %v180 = vpop.f32.mrf.mxu0
    %v181 = vadd.f32 %v70, %v180
    %182 = vmatmul.bf16.gmra.mxu0 %v97
    %v183 = vpop.f32.mrf.mxu0
    %v184 = vadd.f32 %v75, %v183
    %v185 = vpop.f32.mrf.mxu0
    %v186 = vadd.f32 %v80, %v185
    %187 = vdwg.mxu0
    %v189 = vsel %vm99, %v50, 0
    %191 = vmatpush.bf16.msra.mxu0 0
    %192 = vmatpush.bf16.msra.mxu0 0
    %193 = vmatpush.bf16.msra.mxu0 0
    %194 = vmatpush.bf16.msra.mxu0 0
    %195 = vmatpush.bf16.msra.mxu0 0
    %196 = vmatpush.bf16.msra.mxu0 0
    %197 = vmatpush.bf16.msra.mxu0 0
    %198 = vmatpush.bf16.msra.mxu0 %v189
    %199 = vmatmul.bf16.gmra.mxu0 %v94
    %v200 = vpop.f32.mrf.mxu0
    %v201 = vadd.f32 %v65, %v200
    %v202 = vpop.f32.mrf.mxu0
    %v203 = vadd.f32 %v70, %v202
    %204 = vmatmul.bf16.gmra.mxu0 %v97
    %v205 = vpop.f32.mrf.mxu0
    %v206 = vadd.f32 %v75, %v205
    %v207 = vpop.f32.mrf.mxu0
    %v208 = vadd.f32 %v80, %v207
    %209 = vdwg.mxu0
    %v211 = vsel %vm99, %v51, 0
    %213 = vmatpush.bf16.msra.mxu0 0
    %214 = vmatpush.bf16.msra.mxu0 0
    %215 = vmatpush.bf16.msra.mxu0 0
    %216 = vmatpush.bf16.msra.mxu0 0
    %217 = vmatpush.bf16.msra.mxu0 0
    %218 = vmatpush.bf16.msra.mxu0 0
    %219 = vmatpush.bf16.msra.mxu0 0
    %220 = vmatpush.bf16.msra.mxu0 %v211
    %221 = vmatmul.bf16.gmra.mxu0 %v94
    %v222 = vpop.f32.mrf.mxu0
    %v223 = vadd.f32 %v65, %v222
    %v224 = vpop.f32.mrf.mxu0
    %v225 = vadd.f32 %v70, %v224
    %226 = vmatmul.bf16.gmra.mxu0 %v97
    %v227 = vpop.f32.mrf.mxu0
    %v228 = vadd.f32 %v75, %v227
    %v229 = vpop.f32.mrf.mxu0
    %v230 = vadd.f32 %v80, %v229
    %231 = vdwg.mxu0
    %v233 = vsel %vm99, %v52, 0
    %235 = vmatpush.bf16.msra.mxu0 0
    %236 = vmatpush.bf16.msra.mxu0 0
    %237 = vmatpush.bf16.msra.mxu0 0
    %238 = vmatpush.bf16.msra.mxu0 0
    %239 = vmatpush.bf16.msra.mxu0 0
    %240 = vmatpush.bf16.msra.mxu0 0
    %241 = vmatpush.bf16.msra.mxu0 0
    %242 = vmatpush.bf16.msra.mxu0 %v233
    %243 = vmatmul.bf16.gmra.mxu0 %v94
    %v244 = vpop.f32.mrf.mxu0
    %v245 = vadd.f32 %v65, %v244
    %v246 = vpop.f32.mrf.mxu0
    %v247 = vadd.f32 %v70, %v246
    %248 = vmatmul.bf16.gmra.mxu0 %v97
    %v249 = vpop.f32.mrf.mxu0
    %v250 = vadd.f32 %v75, %v249
    %v251 = vpop.f32.mrf.mxu0
    %v252 = vadd.f32 %v80, %v251
    %253 = vdwg.mxu0
    %v255 = vsel %vm99, %v53, 0
    %257 = vmatpush.bf16.msra.mxu0 0
    %258 = vmatpush.bf16.msra.mxu0 0
    %259 = vmatpush.bf16.msra.mxu0 0
    %260 = vmatpush.bf16.msra.mxu0 0
    %261 = vmatpush.bf16.msra.mxu0 0
    %262 = vmatpush.bf16.msra.mxu0 0
    %263 = vmatpush.bf16.msra.mxu0 0
    %264 = vmatpush.bf16.msra.mxu0 %v255
    %265 = vmatmul.bf16.gmra.mxu0 %v94
    %v266 = vpop.f32.mrf.mxu0
    %v267 = vadd.f32 %v65, %v266
    %v268 = vpop.f32.mrf.mxu0
    %v269 = vadd.f32 %v70, %v268
    %270 = vmatmul.bf16.gmra.mxu0 %v97
    %v271 = vpop.f32.mrf.mxu0
    %v272 = vadd.f32 %v75, %v271
    %v273 = vpop.f32.mrf.mxu0
    %v274 = vadd.f32 %v80, %v273
    %275 = vdwg.mxu0
    %v276 = vmax.f32 %v113, 0.0
    %v277 = vmax.f32 %v115, 0.0
    %v278 = vmax.f32 %v118, 0.0
    %v279 = vmax.f32 %v120, 0.0
    %v280 = vmax.f32 %v135, 0.0
    %v281 = vmax.f32 %v137, 0.0
    %v282 = vmax.f32 %v140, 0.0
    %v283 = vmax.f32 %v142, 0.0
    %v284 = vmax.f32 %v157, 0.0
    %v285 = vmax.f32 %v159, 0.0
    %v286 = vmax.f32 %v162, 0.0
    %v287 = vmax.f32 %v164, 0.0
    %v288 = vmax.f32 %v179, 0.0
    %v289 = vmax.f32 %v181, 0.0
    %v290 = vmax.f32 %v184, 0.0
    %v291 = vmax.f32 %v186, 0.0
    %v292 = vmax.f32 %v201, 0.0
    %v293 = vmax.f32 %v203, 0.0
    %v294 = vmax.f32 %v206, 0.0
    %v295 = vmax.f32 %v208, 0.0
    %v296 = vmax.f32 %v223, 0.0
    %v297 = vmax.f32 %v225, 0.0
    %v298 = vmax.f32 %v228, 0.0
    %v299 = vmax.f32 %v230, 0.0
    %v300 = vmax.f32 %v245, 0.0
    %v301 = vmax.f32 %v247, 0.0
    %v302 = vmax.f32 %v250, 0.0
    %v303 = vmax.f32 %v252, 0.0
    %v304 = vmax.f32 %v267, 0.0
    %v305 = vmax.f32 %v269, 0.0
    %v306 = vmax.f32 %v272, 0.0
    %v307 = vmax.f32 %v274, 0.0
    %v308 = vpack.c.bf16 %v276, %v276
    %v309 = vpack.c.bf16 %v277, %v277
    %v310 = vpack.c.bf16 %v278, %v278
    %v311 = vpack.c.bf16 %v279, %v279
    %v312 = vpack.c.bf16 %v280, %v280
    %v313 = vpack.c.bf16 %v281, %v281
    %v314 = vpack.c.bf16 %v282, %v282
    %v315 = vpack.c.bf16 %v283, %v283
    %v316 = vpack.c.bf16 %v284, %v284
    %v317 = vpack.c.bf16 %v285, %v285
    %v318 = vpack.c.bf16 %v286, %v286
    %v319 = vpack.c.bf16 %v287, %v287
    %v320 = vpack.c.bf16 %v288, %v288
    %v321 = vpack.c.bf16 %v289, %v289
    %v322 = vpack.c.bf16 %v290, %v290
    %v323 = vpack.c.bf16 %v291, %v291
    %v324 = vpack.c.bf16 %v292, %v292
    %v325 = vpack.c.bf16 %v293, %v293
    %v326 = vpack.c.bf16 %v294, %v294
    %v327 = vpack.c.bf16 %v295, %v295
    %v328 = vpack.c.bf16 %v296, %v296
    %v329 = vpack.c.bf16 %v297, %v297
    %v330 = vpack.c.bf16 %v298, %v298
    %v331 = vpack.c.bf16 %v299, %v299
    %v332 = vpack.c.bf16 %v300, %v300
    %v333 = vpack.c.bf16 %v301, %v301
    %v334 = vpack.c.bf16 %v302, %v302
    %v335 = vpack.c.bf16 %v303, %v303
    %v336 = vpack.c.bf16 %v304, %v304
    %v337 = vpack.c.bf16 %v305, %v305
    %v338 = vpack.c.bf16 %v306, %v306
    %v339 = vpack.c.bf16 %v307, %v307
    %v348 = vunpack.c.l.b16 %v308
    %v349 = vunpack.c.l.b16 %v312
    %v350 = vunpack.c.l.b16 %v316
    %v351 = vunpack.c.l.b16 %v320
    %v352 = vunpack.c.l.b16 %v324
    %v353 = vunpack.c.l.b16 %v328
    %v354 = vunpack.c.l.b16 %v332
    %v355 = vunpack.c.l.b16 %v336
    %v356 = vrot.slane %v349, 7
    %vm357 = vcmask 1041409
    %v358 = vsel %vm357, %v356, %v348
    %v359 = vrot.slane %v350, 6
    %vm360 = vcmask 1042434
    %v361 = vsel %vm360, %v359, %v358
    %v362 = vrot.slane %v351, 5
    %vm363 = vcmask 1043459
    %v364 = vsel %vm363, %v362, %v361
    %v365 = vrot.slane %v352, 4
    %vm366 = vcmask 1044484
    %v367 = vsel %vm366, %v365, %v364
    %v368 = vrot.slane %v353, 3
    %vm369 = vcmask 1045509
    %v370 = vsel %vm369, %v368, %v367
    %v371 = vrot.slane %v354, 2
    %vm372 = vcmask 1046534
    %v373 = vsel %vm372, %v371, %v370
    %v374 = vrot.slane %v355, 1
    %vm375 = vcmask 1047559
    %v376 = vsel %vm375, %v374, %v373
    %v377 = vpack.c.b16 %v376, %v376
    %vm379 = vcmask 125952
    %380 = vst.msk [vmem:[#allocation2] sm:$0xf] %vm379, %v377
    %v381 = vrot.slane %v348, 1
    %v382 = vsel %vm357, %v349, %v381
    %v383 = vrot.slane %v350, 7
    %v384 = vsel %vm360, %v383, %v382
    %v385 = vrot.slane %v351, 6
    %v386 = vsel %vm363, %v385, %v384
    %v387 = vrot.slane %v352, 5
    %v388 = vsel %vm366, %v387, %v386
    %v389 = vrot.slane %v353, 4
    %v390 = vsel %vm369, %v389, %v388
    %v391 = vrot.slane %v354, 3
    %v392 = vsel %vm372, %v391, %v390
    %v393 = vrot.slane %v355, 2
    %v394 = vsel %vm375, %v393, %v392
    %v395 = vpack.c.b16 %v394, %v394
    %396 = vrot.lane.b32.xlu0 %v395, 16
    %v397 = vpop.permute.xlu0 %396
    %vm399 = vcmask 257152
    %400 = vst.msk [vmem:[#allocation2] sm:$0xf] %vm399, %v397
    %v401 = vrot.slane %v348, 2
    %v402 = vrot.slane %v349, 1
    %v403 = vsel %vm357, %v402, %v401
    %v404 = vsel %vm360, %v350, %v403
    %v405 = vrot.slane %v351, 7
    %v406 = vsel %vm363, %v405, %v404
    %v407 = vrot.slane %v352, 6
    %v408 = vsel %vm366, %v407, %v406
    %v409 = vrot.slane %v353, 5
    %v410 = vsel %vm369, %v409, %v408
    %v411 = vrot.slane %v354, 4
    %v412 = vsel %vm372, %v411, %v410
    %v413 = vrot.slane %v355, 3
    %v414 = vsel %vm375, %v413, %v412
    %v415 = vpack.c.b16 %v414, %v414
    %416 = vrot.lane.b32.xlu0 %v415, 32
    %v417 = vpop.permute.xlu0 %416
    %vm419 = vcmask 388352
    %420 = vst.msk [vmem:[#allocation2] sm:$0xf] %vm419, %v417
    %v421 = vrot.slane %v348, 3
    %v422 = vrot.slane %v349, 2
    %v423 = vsel %vm357, %v422, %v421
    %v424 = vrot.slane %v350, 1
    %v425 = vsel %vm360, %v424, %v423
    %v426 = vsel %vm363, %v351, %v425
    %v427 = vrot.slane %v352, 7
    %v428 = vsel %vm366, %v427, %v426
    %v429 = vrot.slane %v353, 6
    %v430 = vsel %vm369, %v429, %v428
    %v431 = vrot.slane %v354, 5
    %v432 = vsel %vm372, %v431, %v430
    %v433 = vrot.slane %v355, 4
    %v434 = vsel %vm375, %v433, %v432
    %v435 = vpack.c.b16 %v434, %v434
    %436 = vrot.lane.b32.xlu0 %v435, 48
    %v437 = vpop.permute.xlu0 %436
    %vm439 = vcmask 519552
    %440 = vst.msk [vmem:[#allocation2] sm:$0xf] %vm439, %v437
    %v441 = vrot.slane %v348, 4
    %v442 = vrot.slane %v349, 3
    %v443 = vsel %vm357, %v442, %v441
    %v444 = vrot.slane %v350, 2
    %v445 = vsel %vm360, %v444, %v443
    %v446 = vrot.slane %v351, 1
    %v447 = vsel %vm363, %v446, %v445
    %v448 = vsel %vm366, %v352, %v447
    %v449 = vrot.slane %v353, 7
    %v450 = vsel %vm369, %v449, %v448
    %v451 = vrot.slane %v354, 6
    %v452 = vsel %vm372, %v451, %v450
    %v453 = vrot.slane %v355, 5
    %v454 = vsel %vm375, %v453, %v452
    %v455 = vpack.c.b16 %v454, %v454
    %456 = vrot.lane.b32.xlu0 %v455, 64
    %v457 = vpop.permute.xlu0 %456
    %vm459 = vcmask 650752
    %460 = vst.msk [vmem:[#allocation2] sm:$0xf] %vm459, %v457
    %v461 = vrot.slane %v348, 5
    %v462 = vrot.slane %v349, 4
    %v463 = vsel %vm357, %v462, %v461
    %v464 = vrot.slane %v350, 3
    %v465 = vsel %vm360, %v464, %v463
    %v466 = vrot.slane %v351, 2
    %v467 = vsel %vm363, %v466, %v465
    %v468 = vrot.slane %v352, 1
    %v469 = vsel %vm366, %v468, %v467
    %v470 = vsel %vm369, %v353, %v469
    %v471 = vrot.slane %v354, 7
    %v472 = vsel %vm372, %v471, %v470
    %v473 = vrot.slane %v355, 6
    %v474 = vsel %vm375, %v473, %v472
    %v475 = vpack.c.b16 %v474, %v474
    %476 = vrot.lane.b32.xlu0 %v475, 80
    %v477 = vpop.permute.xlu0 %476
    %vm479 = vcmask 781952
    %480 = vst.msk [vmem:[#allocation2] sm:$0xf] %vm479, %v477
    %v481 = vrot.slane %v348, 6
    %v482 = vrot.slane %v349, 5
    %v483 = vsel %vm357, %v482, %v481
    %v484 = vrot.slane %v350, 4
    %v485 = vsel %vm360, %v484, %v483
    %v486 = vrot.slane %v351, 3
    %v487 = vsel %vm363, %v486, %v485
    %v488 = vrot.slane %v352, 2
    %v489 = vsel %vm366, %v488, %v487
    %v490 = vrot.slane %v353, 1
    %v491 = vsel %vm369, %v490, %v489
    %v492 = vsel %vm372, %v354, %v491
    %v493 = vrot.slane %v355, 7
    %v494 = vsel %vm375, %v493, %v492
    %v495 = vpack.c.b16 %v494, %v494
    %496 = vrot.lane.b32.xlu0 %v495, 96
    %v497 = vpop.permute.xlu0 %496
    %vm499 = vcmask 913152
    %500 = vst.msk [vmem:[#allocation2] sm:$0xf] %vm499, %v497
    %v501 = vrot.slane %v348, 7
    %v502 = vrot.slane %v349, 6
    %v503 = vsel %vm357, %v502, %v501
    %v504 = vrot.slane %v350, 5
    %v505 = vsel %vm360, %v504, %v503
    %v506 = vrot.slane %v351, 4
    %v507 = vsel %vm363, %v506, %v505
    %v508 = vrot.slane %v352, 3
    %v509 = vsel %vm366, %v508, %v507
    %v510 = vrot.slane %v353, 2
    %v511 = vsel %vm369, %v510, %v509
    %v512 = vrot.slane %v354, 1
    %v513 = vsel %vm372, %v512, %v511
    %v514 = vsel %vm375, %v355, %v513
    %v515 = vpack.c.b16 %v514, %v514
    %516 = vrot.lane.b32.xlu0 %v515, 112
    %v517 = vpop.permute.xlu0 %516
    %vm519 = vcmask 1044352
    %520 = vst.msk [vmem:[#allocation2] sm:$0xf] %vm519, %v517
    %v529 = vunpack.c.l.b16 %v309
    %v530 = vunpack.c.l.b16 %v313
    %v531 = vunpack.c.l.b16 %v317
    %v532 = vunpack.c.l.b16 %v321
    %v533 = vunpack.c.l.b16 %v325
    %v534 = vunpack.c.l.b16 %v329
    %v535 = vunpack.c.l.b16 %v333
    %v536 = vunpack.c.l.b16 %v337
    %v537 = vrot.slane %v530, 7
    %v538 = vsel %vm357, %v537, %v529
    %v539 = vrot.slane %v531, 6
    %v540 = vsel %vm360, %v539, %v538
    %v541 = vrot.slane %v532, 5
    %v542 = vsel %vm363, %v541, %v540
    %v543 = vrot.slane %v533, 4
    %v544 = vsel %vm366, %v543, %v542
    %v545 = vrot.slane %v534, 3
    %v546 = vsel %vm369, %v545, %v544
    %v547 = vrot.slane %v535, 2
    %v548 = vsel %vm372, %v547, %v546
    %v549 = vrot.slane %v536, 1
    %v550 = vsel %vm375, %v549, %v548
    %v551 = vpack.c.b16 %v550, %v550
    %553 = vst.msk [vmem:[#allocation2 + $0x4] sm:$0xf] %vm379, %v551
    %v554 = vrot.slane %v529, 1
    %v555 = vsel %vm357, %v530, %v554
    %v556 = vrot.slane %v531, 7
    %v557 = vsel %vm360, %v556, %v555
    %v558 = vrot.slane %v532, 6
    %v559 = vsel %vm363, %v558, %v557
    %v560 = vrot.slane %v533, 5
    %v561 = vsel %vm366, %v560, %v559
    %v562 = vrot.slane %v534, 4
    %v563 = vsel %vm369, %v562, %v561
    %v564 = vrot.slane %v535, 3
    %v565 = vsel %vm372, %v564, %v563
    %v566 = vrot.slane %v536, 2
    %v567 = vsel %vm375, %v566, %v565
    %v568 = vpack.c.b16 %v567, %v567
    %569 = vrot.lane.b32.xlu0 %v568, 16
    %v570 = vpop.permute.xlu0 %569
    %572 = vst.msk [vmem:[#allocation2 + $0x4] sm:$0xf] %vm399, %v570
    %v573 = vrot.slane %v529, 2
    %v574 = vrot.slane %v530, 1
    %v575 = vsel %vm357, %v574, %v573
    %v576 = vsel %vm360, %v531, %v575
    %v577 = vrot.slane %v532, 7
    %v578 = vsel %vm363, %v577, %v576
    %v579 = vrot.slane %v533, 6
    %v580 = vsel %vm366, %v579, %v578
    %v581 = vrot.slane %v534, 5
    %v582 = vsel %vm369, %v581, %v580
    %v583 = vrot.slane %v535, 4
    %v584 = vsel %vm372, %v583, %v582
    %v585 = vrot.slane %v536, 3
    %v586 = vsel %vm375, %v585, %v584
    %v587 = vpack.c.b16 %v586, %v586
    %588 = vrot.lane.b32.xlu0 %v587, 32
    %v589 = vpop.permute.xlu0 %588
    %591 = vst.msk [vmem:[#allocation2 + $0x4] sm:$0xf] %vm419, %v589
    %v592 = vrot.slane %v529, 3
    %v593 = vrot.slane %v530, 2
    %v594 = vsel %vm357, %v593, %v592
    %v595 = vrot.slane %v531, 1
    %v596 = vsel %vm360, %v595, %v594
    %v597 = vsel %vm363, %v532, %v596
    %v598 = vrot.slane %v533, 7
    %v599 = vsel %vm366, %v598, %v597
    %v600 = vrot.slane %v534, 6
    %v601 = vsel %vm369, %v600, %v599
    %v602 = vrot.slane %v535, 5
    %v603 = vsel %vm372, %v602, %v601
    %v604 = vrot.slane %v536, 4
    %v605 = vsel %vm375, %v604, %v603
    %v606 = vpack.c.b16 %v605, %v605
    %607 = vrot.lane.b32.xlu0 %v606, 48
    %v608 = vpop.permute.xlu0 %607
    %610 = vst.msk [vmem:[#allocation2 + $0x4] sm:$0xf] %vm439, %v608
    %v611 = vrot.slane %v529, 4
    %v612 = vrot.slane %v530, 3
    %v613 = vsel %vm357, %v612, %v611
    %v614 = vrot.slane %v531, 2
    %v615 = vsel %vm360, %v614, %v613
    %v616 = vrot.slane %v532, 1
    %v617 = vsel %vm363, %v616, %v615
    %v618 = vsel %vm366, %v533, %v617
    %v619 = vrot.slane %v534, 7
    %v620 = vsel %vm369, %v619, %v618
    %v621 = vrot.slane %v535, 6
    %v622 = vsel %vm372, %v621, %v620
    %v623 = vrot.slane %v536, 5
    %v624 = vsel %vm375, %v623, %v622
    %v625 = vpack.c.b16 %v624, %v624
    %626 = vrot.lane.b32.xlu0 %v625, 64
    %v627 = vpop.permute.xlu0 %626
    %629 = vst.msk [vmem:[#allocation2 + $0x4] sm:$0xf] %vm459, %v627
    %v630 = vrot.slane %v529, 5
    %v631 = vrot.slane %v530, 4
    %v632 = vsel %vm357, %v631, %v630
    %v633 = vrot.slane %v531, 3
    %v634 = vsel %vm360, %v633, %v632
    %v635 = vrot.slane %v532, 2
    %v636 = vsel %vm363, %v635, %v634
    %v637 = vrot.slane %v533, 1
    %v638 = vsel %vm366, %v637, %v636
    %v639 = vsel %vm369, %v534, %v638
    %v640 = vrot.slane %v535, 7
    %v641 = vsel %vm372, %v640, %v639
    %v642 = vrot.slane %v536, 6
    %v643 = vsel %vm375, %v642, %v641
    %v644 = vpack.c.b16 %v643, %v643
    %645 = vrot.lane.b32.xlu0 %v644, 80
    %v646 = vpop.permute.xlu0 %645
    %648 = vst.msk [vmem:[#allocation2 + $0x4] sm:$0xf] %vm479, %v646
    %v649 = vrot.slane %v529, 6
    %v650 = vrot.slane %v530, 5
    %v651 = vsel %vm357, %v650, %v649
    %v652 = vrot.slane %v531, 4
    %v653 = vsel %vm360, %v652, %v651
    %v654 = vrot.slane %v532, 3
    %v655 = vsel %vm363, %v654, %v653
    %v656 = vrot.slane %v533, 2
    %v657 = vsel %vm366, %v656, %v655
    %v658 = vrot.slane %v534, 1
    %v659 = vsel %vm369, %v658, %v657
    %v660 = vsel %vm372, %v535, %v659
    %v661 = vrot.slane %v536, 7
    %v662 = vsel %vm375, %v661, %v660
    %v663 = vpack.c.b16 %v662, %v662
    %664 = vrot.lane.b32.xlu0 %v663, 96
    %v665 = vpop.permute.xlu0 %664
    %667 = vst.msk [vmem:[#allocation2 + $0x4] sm:$0xf] %vm499, %v665
    %v668 = vrot.slane %v529, 7
    %v669 = vrot.slane %v530, 6
    %v670 = vsel %vm357, %v669, %v668
    %v671 = vrot.slane %v531, 5
    %v672 = vsel %vm360, %v671, %v670
    %v673 = vrot.slane %v532, 4
    %v674 = vsel %vm363, %v673, %v672
    %v675 = vrot.slane %v533, 3
    %v676 = vsel %vm366, %v675, %v674
    %v677 = vrot.slane %v534, 2
    %v678 = vsel %vm369, %v677, %v676
    %v679 = vrot.slane %v535, 1
    %v680 = vsel %vm372, %v679, %v678
    %v681 = vsel %vm375, %v536, %v680
    %v682 = vpack.c.b16 %v681, %v681
    %683 = vrot.lane.b32.xlu0 %v682, 112
    %v684 = vpop.permute.xlu0 %683
    %686 = vst.msk [vmem:[#allocation2 + $0x4] sm:$0xf] %vm519, %v684
    %v695 = vunpack.c.l.b16 %v310
    %v696 = vunpack.c.l.b16 %v314
    %v697 = vunpack.c.l.b16 %v318
    %v698 = vunpack.c.l.b16 %v322
    %v699 = vunpack.c.l.b16 %v326
    %v700 = vunpack.c.l.b16 %v330
    %v701 = vunpack.c.l.b16 %v334
    %v702 = vunpack.c.l.b16 %v338
    %v703 = vrot.slane %v696, 7
    %v704 = vsel %vm357, %v703, %v695
    %v705 = vrot.slane %v697, 6
    %v706 = vsel %vm360, %v705, %v704
    %v707 = vrot.slane %v698, 5
    %v708 = vsel %vm363, %v707, %v706
    %v709 = vrot.slane %v699, 4
    %v710 = vsel %vm366, %v709, %v708
    %v711 = vrot.slane %v700, 3
    %v712 = vsel %vm369, %v711, %v710
    %v713 = vrot.slane %v701, 2
    %v714 = vsel %vm372, %v713, %v712
    %v715 = vrot.slane %v702, 1
    %v716 = vsel %vm375, %v715, %v714
    %v717 = vpack.c.b16 %v716, %v716
    %719 = vst.msk [vmem:[#allocation2 + $0x8] sm:$0xf] %vm379, %v717
    %v720 = vrot.slane %v695, 1
    %v721 = vsel %vm357, %v696, %v720
    %v722 = vrot.slane %v697, 7
    %v723 = vsel %vm360, %v722, %v721
    %v724 = vrot.slane %v698, 6
    %v725 = vsel %vm363, %v724, %v723
    %v726 = vrot.slane %v699, 5
    %v727 = vsel %vm366, %v726, %v725
    %v728 = vrot.slane %v700, 4
    %v729 = vsel %vm369, %v728, %v727
    %v730 = vrot.slane %v701, 3
    %v731 = vsel %vm372, %v730, %v729
    %v732 = vrot.slane %v702, 2
    %v733 = vsel %vm375, %v732, %v731
    %v734 = vpack.c.b16 %v733, %v733
    %735 = vrot.lane.b32.xlu0 %v734, 16
    %v736 = vpop.permute.xlu0 %735
    %738 = vst.msk [vmem:[#allocation2 + $0x8] sm:$0xf] %vm399, %v736
    %v739 = vrot.slane %v695, 2
    %v740 = vrot.slane %v696, 1
    %v741 = vsel %vm357, %v740, %v739
    %v742 = vsel %vm360, %v697, %v741
    %v743 = vrot.slane %v698, 7
    %v744 = vsel %vm363, %v743, %v742
    %v745 = vrot.slane %v699, 6
    %v746 = vsel %vm366, %v745, %v744
    %v747 = vrot.slane %v700, 5
    %v748 = vsel %vm369, %v747, %v746
    %v749 = vrot.slane %v701, 4
    %v750 = vsel %vm372, %v749, %v748
    %v751 = vrot.slane %v702, 3
    %v752 = vsel %vm375, %v751, %v750
    %v753 = vpack.c.b16 %v752, %v752
    %754 = vrot.lane.b32.xlu0 %v753, 32
    %v755 = vpop.permute.xlu0 %754
    %757 = vst.msk [vmem:[#allocation2 + $0x8] sm:$0xf] %vm419, %v755
    %v758 = vrot.slane %v695, 3
    %v759 = vrot.slane %v696, 2
    %v760 = vsel %vm357, %v759, %v758
    %v761 = vrot.slane %v697, 1
    %v762 = vsel %vm360, %v761, %v760
    %v763 = vsel %vm363, %v698, %v762
    %v764 = vrot.slane %v699, 7
    %v765 = vsel %vm366, %v764, %v763
    %v766 = vrot.slane %v700, 6
    %v767 = vsel %vm369, %v766, %v765
    %v768 = vrot.slane %v701, 5
    %v769 = vsel %vm372, %v768, %v767
    %v770 = vrot.slane %v702, 4
    %v771 = vsel %vm375, %v770, %v769
    %v772 = vpack.c.b16 %v771, %v771
    %773 = vrot.lane.b32.xlu0 %v772, 48
    %v774 = vpop.permute.xlu0 %773
    %776 = vst.msk [vmem:[#allocation2 + $0x8] sm:$0xf] %vm439, %v774
    %v777 = vrot.slane %v695, 4
    %v778 = vrot.slane %v696, 3
    %v779 = vsel %vm357, %v778, %v777
    %v780 = vrot.slane %v697, 2
    %v781 = vsel %vm360, %v780, %v779
    %v782 = vrot.slane %v698, 1
    %v783 = vsel %vm363, %v782, %v781
    %v784 = vsel %vm366, %v699, %v783
    %v785 = vrot.slane %v700, 7
    %v786 = vsel %vm369, %v785, %v784
    %v787 = vrot.slane %v701, 6
    %v788 = vsel %vm372, %v787, %v786
    %v789 = vrot.slane %v702, 5
    %v790 = vsel %vm375, %v789, %v788
    %v791 = vpack.c.b16 %v790, %v790
    %792 = vrot.lane.b32.xlu0 %v791, 64
    %v793 = vpop.permute.xlu0 %792
    %795 = vst.msk [vmem:[#allocation2 + $0x8] sm:$0xf] %vm459, %v793
    %v796 = vrot.slane %v695, 5
    %v797 = vrot.slane %v696, 4
    %v798 = vsel %vm357, %v797, %v796
    %v799 = vrot.slane %v697, 3
    %v800 = vsel %vm360, %v799, %v798
    %v801 = vrot.slane %v698, 2
    %v802 = vsel %vm363, %v801, %v800
    %v803 = vrot.slane %v699, 1
    %v804 = vsel %vm366, %v803, %v802
    %v805 = vsel %vm369, %v700, %v804
    %v806 = vrot.slane %v701, 7
    %v807 = vsel %vm372, %v806, %v805
    %v808 = vrot.slane %v702, 6
    %v809 = vsel %vm375, %v808, %v807
    %v810 = vpack.c.b16 %v809, %v809
    %811 = vrot.lane.b32.xlu0 %v810, 80
    %v812 = vpop.permute.xlu0 %811
    %814 = vst.msk [vmem:[#allocation2 + $0x8] sm:$0xf] %vm479, %v812
    %v815 = vrot.slane %v695, 6
    %v816 = vrot.slane %v696, 5
    %v817 = vsel %vm357, %v816, %v815
    %v818 = vrot.slane %v697, 4
    %v819 = vsel %vm360, %v818, %v817
    %v820 = vrot.slane %v698, 3
    %v821 = vsel %vm363, %v820, %v819
    %v822 = vrot.slane %v699, 2
    %v823 = vsel %vm366, %v822, %v821
    %v824 = vrot.slane %v700, 1
    %v825 = vsel %vm369, %v824, %v823
    %v826 = vsel %vm372, %v701, %v825
    %v827 = vrot.slane %v702, 7
    %v828 = vsel %vm375, %v827, %v826
    %v829 = vpack.c.b16 %v828, %v828
    %830 = vrot.lane.b32.xlu0 %v829, 96
    %v831 = vpop.permute.xlu0 %830
    %833 = vst.msk [vmem:[#allocation2 + $0x8] sm:$0xf] %vm499, %v831
    %v834 = vrot.slane %v695, 7
    %v835 = vrot.slane %v696, 6
    %v836 = vsel %vm357, %v835, %v834
    %v837 = vrot.slane %v697, 5
    %v838 = vsel %vm360, %v837, %v836
    %v839 = vrot.slane %v698, 4
    %v840 = vsel %vm363, %v839, %v838
    %v841 = vrot.slane %v699, 3
    %v842 = vsel %vm366, %v841, %v840
    %v843 = vrot.slane %v700, 2
    %v844 = vsel %vm369, %v843, %v842
    %v845 = vrot.slane %v701, 1
    %v846 = vsel %vm372, %v845, %v844
    %v847 = vsel %vm375, %v702, %v846
    %v848 = vpack.c.b16 %v847, %v847
    %849 = vrot.lane.b32.xlu0 %v848, 112
    %v850 = vpop.permute.xlu0 %849
    %852 = vst.msk [vmem:[#allocation2 + $0x8] sm:$0xf] %vm519, %v850
    %v861 = vunpack.c.l.b16 %v311
    %v862 = vunpack.c.l.b16 %v315
    %v863 = vunpack.c.l.b16 %v319
    %v864 = vunpack.c.l.b16 %v323
    %v865 = vunpack.c.l.b16 %v327
    %v866 = vunpack.c.l.b16 %v331
    %v867 = vunpack.c.l.b16 %v335
    %v868 = vunpack.c.l.b16 %v339
    %v869 = vrot.slane %v862, 7
    %v870 = vsel %vm357, %v869, %v861
    %v871 = vrot.slane %v863, 6
    %v872 = vsel %vm360, %v871, %v870
    %v873 = vrot.slane %v864, 5
    %v874 = vsel %vm363, %v873, %v872
    %v875 = vrot.slane %v865, 4
    %v876 = vsel %vm366, %v875, %v874
    %v877 = vrot.slane %v866, 3
    %v878 = vsel %vm369, %v877, %v876
    %v879 = vrot.slane %v867, 2
    %v880 = vsel %vm372, %v879, %v878
    %v881 = vrot.slane %v868, 1
    %v882 = vsel %vm375, %v881, %v880
    %v883 = vpack.c.b16 %v882, %v882
    %885 = vst.msk [vmem:[#allocation2 + $0xc] sm:$0xf] %vm379, %v883
    %v886 = vrot.slane %v861, 1
    %v887 = vsel %vm357, %v862, %v886
    %v888 = vrot.slane %v863, 7
    %v889 = vsel %vm360, %v888, %v887
    %v890 = vrot.slane %v864, 6
    %v891 = vsel %vm363, %v890, %v889
    %v892 = vrot.slane %v865, 5
    %v893 = vsel %vm366, %v892, %v891
    %v894 = vrot.slane %v866, 4
    %v895 = vsel %vm369, %v894, %v893
    %v896 = vrot.slane %v867, 3
    %v897 = vsel %vm372, %v896, %v895
    %v898 = vrot.slane %v868, 2
    %v899 = vsel %vm375, %v898, %v897
    %v900 = vpack.c.b16 %v899, %v899
    %901 = vrot.lane.b32.xlu0 %v900, 16
    %v902 = vpop.permute.xlu0 %901
    %904 = vst.msk [vmem:[#allocation2 + $0xc] sm:$0xf] %vm399, %v902
    %v905 = vrot.slane %v861, 2
    %v906 = vrot.slane %v862, 1
    %v907 = vsel %vm357, %v906, %v905
    %v908 = vsel %vm360, %v863, %v907
    %v909 = vrot.slane %v864, 7
    %v910 = vsel %vm363, %v909, %v908
    %v911 = vrot.slane %v865, 6
    %v912 = vsel %vm366, %v911, %v910
    %v913 = vrot.slane %v866, 5
    %v914 = vsel %vm369, %v913, %v912
    %v915 = vrot.slane %v867, 4
    %v916 = vsel %vm372, %v915, %v914
    %v917 = vrot.slane %v868, 3
    %v918 = vsel %vm375, %v917, %v916
    %v919 = vpack.c.b16 %v918, %v918
    %920 = vrot.lane.b32.xlu0 %v919, 32
    %v921 = vpop.permute.xlu0 %920
    %923 = vst.msk [vmem:[#allocation2 + $0xc] sm:$0xf] %vm419, %v921
    %v924 = vrot.slane %v861, 3
    %v925 = vrot.slane %v862, 2
    %v926 = vsel %vm357, %v925, %v924
    %v927 = vrot.slane %v863, 1
    %v928 = vsel %vm360, %v927, %v926
    %v929 = vsel %vm363, %v864, %v928
    %v930 = vrot.slane %v865, 7
    %v931 = vsel %vm366, %v930, %v929
    %v932 = vrot.slane %v866, 6
    %v933 = vsel %vm369, %v932, %v931
    %v934 = vrot.slane %v867, 5
    %v935 = vsel %vm372, %v934, %v933
    %v936 = vrot.slane %v868, 4
    %v937 = vsel %vm375, %v936, %v935
    %v938 = vpack.c.b16 %v937, %v937
    %939 = vrot.lane.b32.xlu0 %v938, 48
    %v940 = vpop.permute.xlu0 %939
    %942 = vst.msk [vmem:[#allocation2 + $0xc] sm:$0xf] %vm439, %v940
    %v943 = vrot.slane %v861, 4
    %v944 = vrot.slane %v862, 3
    %v945 = vsel %vm357, %v944, %v943
    %v946 = vrot.slane %v863, 2
    %v947 = vsel %vm360, %v946, %v945
    %v948 = vrot.slane %v864, 1
    %v949 = vsel %vm363, %v948, %v947
    %v950 = vsel %vm366, %v865, %v949
    %v951 = vrot.slane %v866, 7
    %v952 = vsel %vm369, %v951, %v950
    %v953 = vrot.slane %v867, 6
    %v954 = vsel %vm372, %v953, %v952
    %v955 = vrot.slane %v868, 5
    %v956 = vsel %vm375, %v955, %v954
    %v957 = vpack.c.b16 %v956, %v956
    %958 = vrot.lane.b32.xlu0 %v957, 64
    %v959 = vpop.permute.xlu0 %958
    %961 = vst.msk [vmem:[#allocation2 + $0xc] sm:$0xf] %vm459, %v959
    %v962 = vrot.slane %v861, 5
    %v963 = vrot.slane %v862, 4
    %v964 = vsel %vm357, %v963, %v962
    %v965 = vrot.slane %v863, 3
    %v966 = vsel %vm360, %v965, %v964
    %v967 = vrot.slane %v864, 2
    %v968 = vsel %vm363, %v967, %v966
    %v969 = vrot.slane %v865, 1
    %v970 = vsel %vm366, %v969, %v968
    %v971 = vsel %vm369, %v866, %v970
    %v972 = vrot.slane %v867, 7
    %v973 = vsel %vm372, %v972, %v971
    %v974 = vrot.slane %v868, 6
    %v975 = vsel %vm375, %v974, %v973
    %v976 = vpack.c.b16 %v975, %v975
    %977 = vrot.lane.b32.xlu0 %v976, 80
    %v978 = vpop.permute.xlu0 %977
    %980 = vst.msk [vmem:[#allocation2 + $0xc] sm:$0xf] %vm479, %v978
    %v981 = vrot.slane %v861, 6
    %v982 = vrot.slane %v862, 5
    %v983 = vsel %vm357, %v982, %v981
    %v984 = vrot.slane %v863, 4
    %v985 = vsel %vm360, %v984, %v983
    %v986 = vrot.slane %v864, 3
    %v987 = vsel %vm363, %v986, %v985
    %v988 = vrot.slane %v865, 2
    %v989 = vsel %vm366, %v988, %v987
    %v990 = vrot.slane %v866, 1
    %v991 = vsel %vm369, %v990, %v989
    %v992 = vsel %vm372, %v867, %v991
    %v993 = vrot.slane %v868, 7
    %v994 = vsel %vm375, %v993, %v992
    %v995 = vpack.c.b16 %v994, %v994
    %996 = vrot.lane.b32.xlu0 %v995, 96
    %v997 = vpop.permute.xlu0 %996
    %999 = vst.msk [vmem:[#allocation2 + $0xc] sm:$0xf] %vm499, %v997
    %v1000 = vrot.slane %v861, 7
    %v1001 = vrot.slane %v862, 6
    %v1002 = vsel %vm357, %v1001, %v1000
    %v1003 = vrot.slane %v863, 5
    %v1004 = vsel %vm360, %v1003, %v1002
    %v1005 = vrot.slane %v864, 4
    %v1006 = vsel %vm363, %v1005, %v1004
    %v1007 = vrot.slane %v865, 3
    %v1008 = vsel %vm366, %v1007, %v1006
    %v1009 = vrot.slane %v866, 2
    %v1010 = vsel %vm369, %v1009, %v1008
    %v1011 = vrot.slane %v867, 1
    %v1012 = vsel %vm372, %v1011, %v1010
    %v1013 = vsel %vm375, %v868, %v1012
    %v1014 = vpack.c.b16 %v1013, %v1013
    %1015 = vrot.lane.b32.xlu0 %v1014, 112
    %v1016 = vpop.permute.xlu0 %1015
    %1018 = vst.msk [vmem:[#allocation2 + $0xc] sm:$0xf] %vm519, %v1016
    %v1019 = vld [vmem:[#allocation2] sm:$0xff]
    %v1020 = vld [vmem:[#allocation2 + $0x8] sm:$0xff]
    %v1021 = vld [vmem:[#allocation3] sm:$0xf]
    %v1022 = vld [vmem:[#allocation3 + $0x4] sm:$0xf]
    %v1023 = vld [vmem:[#allocation3 + $0x8] sm:$0xf]
    %v1024 = vld [vmem:[#allocation3 + $0xc] sm:$0xf]
    %v1025 = vld [vmem:[#allocation3 + $0x10] sm:$0xf]
    %v1026 = vld [vmem:[#allocation3 + $0x14] sm:$0xf]
    %v1027 = vld [vmem:[#allocation3 + $0x18] sm:$0xf]
    %v1028 = vld [vmem:[#allocation3 + $0x1c] sm:$0xf]
    %v1029 = vld [vmem:[#allocation3 + $0x20] sm:$0xf]
    %v1030 = vld [vmem:[#allocation3 + $0x24] sm:$0xf]
    %v1031 = vld [vmem:[#allocation3 + $0x28] sm:$0xf]
    %v1032 = vld [vmem:[#allocation3 + $0x2c] sm:$0xf]
    %v1033 = vld [vmem:[#allocation3 + $0x30] sm:$0xf]
    %v1034 = vld [vmem:[#allocation3 + $0x34] sm:$0xf]
    %v1035 = vld [vmem:[#allocation3 + $0x38] sm:$0xf]
    %v1036 = vld [vmem:[#allocation3 + $0x3c] sm:$0xf]
    %v1037 = vld [vmem:[#allocation3 + $0x40] sm:$0xf]
    %v1038 = vld [vmem:[#allocation3 + $0x44] sm:$0xf]
    %v1039 = vld [vmem:[#allocation3 + $0x48] sm:$0xf]
    %v1040 = vld [vmem:[#allocation3 + $0x4c] sm:$0xf]
    %v1041 = vld [vmem:[#allocation3 + $0x50] sm:$0xf]
    %v1042 = vld [vmem:[#allocation3 + $0x54] sm:$0xf]
    %v1043 = vld [vmem:[#allocation3 + $0x58] sm:$0xf]
    %v1044 = vld [vmem:[#allocation3 + $0x5c] sm:$0xf]
    %v1045 = vld [vmem:[#allocation3 + $0x60] sm:$0xf]
    %v1046 = vld [vmem:[#allocation3 + $0x64] sm:$0xf]
    %v1047 = vld [vmem:[#allocation3 + $0x68] sm:$0xf]
    %v1048 = vld [vmem:[#allocation3 + $0x6c] sm:$0xf]
    %v1049 = vld [vmem:[#allocation3 + $0x70] sm:$0xf]
    %v1050 = vld [vmem:[#allocation3 + $0x74] sm:$0xf]
    %v1051 = vld [vmem:[#allocation3 + $0x78] sm:$0xf]
    %v1052 = vld [vmem:[#allocation3 + $0x7c] sm:$0xf]
    %v1053 = vld [vmem:[#allocation3 + $0x80] sm:$0xf]
    %v1054 = vld [vmem:[#allocation3 + $0x84] sm:$0xf]
    %v1055 = vld [vmem:[#allocation3 + $0x88] sm:$0xf]
    %v1056 = vld [vmem:[#allocation3 + $0x8c] sm:$0xf]
    %v1057 = vld [vmem:[#allocation3 + $0x90] sm:$0xf]
    %v1058 = vld [vmem:[#allocation3 + $0x94] sm:$0xf]
    %v1059 = vld [vmem:[#allocation3 + $0x98] sm:$0xf]
    %v1060 = vld [vmem:[#allocation3 + $0x9c] sm:$0xf]
    %v1061 = vld [vmem:[#allocation3 + $0xa0] sm:$0xf]
    %v1062 = vld [vmem:[#allocation3 + $0xa4] sm:$0xf]
    %v1063 = vld [vmem:[#allocation3 + $0xa8] sm:$0xf]
    %v1064 = vld [vmem:[#allocation3 + $0xac] sm:$0xf]
    %v1065 = vld [vmem:[#allocation3 + $0xb0] sm:$0xf]
    %v1066 = vld [vmem:[#allocation3 + $0xb4] sm:$0xf]
    %v1067 = vld [vmem:[#allocation3 + $0xb8] sm:$0xf]
    %v1068 = vld [vmem:[#allocation3 + $0xbc] sm:$0xf]
    %v1069 = vld [vmem:[#allocation3 + $0xc0] sm:$0xf]
    %v1070 = vld [vmem:[#allocation3 + $0xc4] sm:$0xf]
    %v1071 = vld [vmem:[#allocation3 + $0xc8] sm:$0xf]
    %v1072 = vld [vmem:[#allocation3 + $0xcc] sm:$0xf]
    %v1073 = vld [vmem:[#allocation3 + $0xd0] sm:$0xf]
    %v1074 = vld [vmem:[#allocation3 + $0xd4] sm:$0xf]
    %v1075 = vld [vmem:[#allocation3 + $0xd8] sm:$0xf]
    %v1076 = vld [vmem:[#allocation3 + $0xdc] sm:$0xf]
    %v1077 = vld [vmem:[#allocation3 + $0xe0] sm:$0xf]
    %v1078 = vld [vmem:[#allocation3 + $0xe4] sm:$0xf]
    %v1079 = vld [vmem:[#allocation3 + $0xe8] sm:$0xf]
    %v1080 = vld [vmem:[#allocation3 + $0xec] sm:$0xf]
    %v1081 = vld [vmem:[#allocation3 + $0xf0] sm:$0xf]
    %v1082 = vld [vmem:[#allocation3 + $0xf4] sm:$0xf]
    %v1083 = vld [vmem:[#allocation3 + $0xf8] sm:$0xf]
    %v1084 = vld [vmem:[#allocation3 + $0xfc] sm:$0xf]
    %v1085 = vld [vmem:[%s4] sm:$0x1]
    %v1087 = vperm.slane %v1085, 0
    %v1091 = vunpack.c.l.b16 %v1019
    %v1092 = vunpack.c.h.b16 %v1019
    %v1093 = vunpack.c.l.b16 %v1020
    %v1094 = vunpack.c.h.b16 %v1020
    %v1095 = vpack.c.b16 %v1091, %v1091
    %v1096 = vpack.c.b16 %v1092, %v1092
    %v1097 = vpack.c.b16 %v1093, %v1093
    %v1098 = vpack.c.b16 %v1094, %v1094
    %v1167 = vunpack.c.l.b16 %v1021
    %v1168 = vunpack.c.l.b16 %v1022
    %v1169 = vunpack.c.l.b16 %v1023
    %v1170 = vunpack.c.l.b16 %v1024
    %v1171 = vunpack.c.l.b16 %v1025
    %v1172 = vunpack.c.l.b16 %v1026
    %v1173 = vunpack.c.l.b16 %v1027
    %v1174 = vunpack.c.l.b16 %v1028
    %v1175 = vunpack.c.l.b16 %v1029
    %v1176 = vunpack.c.l.b16 %v1030
    %v1177 = vunpack.c.l.b16 %v1031
    %v1178 = vunpack.c.l.b16 %v1032
    %v1179 = vunpack.c.l.b16 %v1033
    %v1180 = vunpack.c.l.b16 %v1034
    %v1181 = vunpack.c.l.b16 %v1035
    %v1182 = vunpack.c.l.b16 %v1036
    %v1183 = vunpack.c.l.b16 %v1037
    %v1184 = vunpack.c.l.b16 %v1038
    %v1185 = vunpack.c.l.b16 %v1039
    %v1186 = vunpack.c.l.b16 %v1040
    %v1187 = vunpack.c.l.b16 %v1041
    %v1188 = vunpack.c.l.b16 %v1042
    %v1189 = vunpack.c.l.b16 %v1043
    %v1190 = vunpack.c.l.b16 %v1044
    %v1191 = vunpack.c.l.b16 %v1045
    %v1192 = vunpack.c.l.b16 %v1046
    %v1193 = vunpack.c.l.b16 %v1047
    %v1194 = vunpack.c.l.b16 %v1048
    %v1195 = vunpack.c.l.b16 %v1049
    %v1196 = vunpack.c.l.b16 %v1050
    %v1197 = vunpack.c.l.b16 %v1051
    %v1198 = vunpack.c.l.b16 %v1052
    %v1199 = vunpack.c.l.b16 %v1053
    %v1200 = vunpack.c.l.b16 %v1054
    %v1201 = vunpack.c.l.b16 %v1055
    %v1202 = vunpack.c.l.b16 %v1056
    %v1203 = vunpack.c.l.b16 %v1057
    %v1204 = vunpack.c.l.b16 %v1058
    %v1205 = vunpack.c.l.b16 %v1059
    %v1206 = vunpack.c.l.b16 %v1060
    %v1207 = vunpack.c.l.b16 %v1061
    %v1208 = vunpack.c.l.b16 %v1062
    %v1209 = vunpack.c.l.b16 %v1063
    %v1210 = vunpack.c.l.b16 %v1064
    %v1211 = vunpack.c.l.b16 %v1065
    %v1212 = vunpack.c.l.b16 %v1066
    %v1213 = vunpack.c.l.b16 %v1067
    %v1214 = vunpack.c.l.b16 %v1068
    %v1215 = vunpack.c.l.b16 %v1069
    %v1216 = vunpack.c.l.b16 %v1070
    %v1217 = vunpack.c.l.b16 %v1071
    %v1218 = vunpack.c.l.b16 %v1072
    %v1219 = vunpack.c.l.b16 %v1073
    %v1220 = vunpack.c.l.b16 %v1074
    %v1221 = vunpack.c.l.b16 %v1075
    %v1222 = vunpack.c.l.b16 %v1076
    %v1223 = vunpack.c.l.b16 %v1077
    %v1224 = vunpack.c.l.b16 %v1078
    %v1225 = vunpack.c.l.b16 %v1079
    %v1226 = vunpack.c.l.b16 %v1080
    %v1227 = vunpack.c.l.b16 %v1081
    %v1228 = vunpack.c.l.b16 %v1082
    %v1229 = vunpack.c.l.b16 %v1083
    %v1230 = vunpack.c.l.b16 %v1084
    %v1231 = vpack.c.b16 %v1168, %v1167
    %v1232 = vpack.c.b16 %v1170, %v1169
    %v1233 = vpack.c.b16 %v1172, %v1171
    %v1234 = vpack.c.b16 %v1174, %v1173
    %v1235 = vpack.c.b16 %v1176, %v1175
    %v1236 = vpack.c.b16 %v1178, %v1177
    %v1237 = vpack.c.b16 %v1180, %v1179
    %v1238 = vpack.c.b16 %v1182, %v1181
    %v1239 = vpack.c.b16 %v1184, %v1183
    %v1240 = vpack.c.b16 %v1186, %v1185
    %v1241 = vpack.c.b16 %v1188, %v1187
    %v1242 = vpack.c.b16 %v1190, %v1189
    %v1243 = vpack.c.b16 %v1192, %v1191
    %v1244 = vpack.c.b16 %v1194, %v1193
    %v1245 = vpack.c.b16 %v1196, %v1195
    %v1246 = vpack.c.b16 %v1198, %v1197
    %v1247 = vpack.c.b16 %v1200, %v1199
    %v1248 = vpack.c.b16 %v1202, %v1201
    %v1249 = vpack.c.b16 %v1204, %v1203
    %v1250 = vpack.c.b16 %v1206, %v1205
    %v1251 = vpack.c.b16 %v1208, %v1207
    %v1252 = vpack.c.b16 %v1210, %v1209
    %v1253 = vpack.c.b16 %v1212, %v1211
    %v1254 = vpack.c.b16 %v1214, %v1213
    %v1255 = vpack.c.b16 %v1216, %v1215
    %v1256 = vpack.c.b16 %v1218, %v1217
    %v1257 = vpack.c.b16 %v1220, %v1219
    %v1258 = vpack.c.b16 %v1222, %v1221
    %v1259 = vpack.c.b16 %v1224, %v1223
    %v1260 = vpack.c.b16 %v1226, %v1225
    %v1261 = vpack.c.b16 %v1228, %v1227
    %v1262 = vpack.c.b16 %v1230, %v1229
    %1295 = vmatpush.bf16.msra.mxu0 %v1238
    %1296 = vmatpush.bf16.msra.mxu0 %v1237
    %1297 = vmatpush.bf16.msra.mxu0 %v1236
    %1298 = vmatpush.bf16.msra.mxu0 %v1235
    %1299 = vmatpush.bf16.msra.mxu0 %v1234
    %1300 = vmatpush.bf16.msra.mxu0 %v1233
    %1301 = vmatpush.bf16.msra.mxu0 %v1232
    %1302 = vmatpush.bf16.msra.mxu0 %v1231
    %1303 = vmatmul.bf16.gmra.mxu0 %v1095
    %v1304 = vpop.f32.mrf.mxu0
    %v1305 = vadd.f32 %v1087, %v1304
    %v1306 = vpop.f32.mrf.mxu0
    %1307 = vdwg.mxu0
    %1308 = vmatpush.bf16.msra.mxu0 %v1246
    %1309 = vmatpush.bf16.msra.mxu0 %v1245
    %1310 = vmatpush.bf16.msra.mxu0 %v1244
    %1311 = vmatpush.bf16.msra.mxu0 %v1243
    %1312 = vmatpush.bf16.msra.mxu0 %v1242
    %1313 = vmatpush.bf16.msra.mxu0 %v1241
    %1314 = vmatpush.bf16.msra.mxu0 %v1240
    %1315 = vmatpush.bf16.msra.mxu0 %v1239
    %1316 = vmatmul.bf16.gmra.mxu0 %v1096
    %v1317 = vpop.f32.mrf.mxu0
    %v1318 = vadd.f32 %v1305, %v1317
    %v1319 = vpop.f32.mrf.mxu0
    %1320 = vdwg.mxu0
    %1321 = vmatpush.bf16.msra.mxu0 %v1254
    %1322 = vmatpush.bf16.msra.mxu0 %v1253
    %1323 = vmatpush.bf16.msra.mxu0 %v1252
    %1324 = vmatpush.bf16.msra.mxu0 %v1251
    %1325 = vmatpush.bf16.msra.mxu0 %v1250
    %1326 = vmatpush.bf16.msra.mxu0 %v1249
    %1327 = vmatpush.bf16.msra.mxu0 %v1248
    %1328 = vmatpush.bf16.msra.mxu0 %v1247
    %1329 = vmatmul.bf16.gmra.mxu0 %v1097
    %v1330 = vpop.f32.mrf.mxu0
    %v1331 = vadd.f32 %v1318, %v1330
    %v1332 = vpop.f32.mrf.mxu0
    %1333 = vdwg.mxu0
    %1334 = vmatpush.bf16.msra.mxu0 %v1262
    %1335 = vmatpush.bf16.msra.mxu0 %v1261
    %1336 = vmatpush.bf16.msra.mxu0 %v1260
    %1337 = vmatpush.bf16.msra.mxu0 %v1259
    %1338 = vmatpush.bf16.msra.mxu0 %v1258
    %1339 = vmatpush.bf16.msra.mxu0 %v1257
    %1340 = vmatpush.bf16.msra.mxu0 %v1256
    %1341 = vmatpush.bf16.msra.mxu0 %v1255
    %1342 = vmatmul.bf16.gmra.mxu0 %v1098
    %v1343 = vpop.f32.mrf.mxu0
    %v1344 = vadd.f32 %v1331, %v1343
    %v1345 = vpop.f32.mrf.mxu0
    %1346 = vdwg.mxu0
    %1347 = vst [vmem:[#allocation6] sm:$0xff] %v1344
    // Predicated region
    $region26: #{tpu_custom_call.1} parent=1 // pred_check
      _
    $region27: #{tpu_custom_call.1} parent=1 // pred_check_branch
      %1349 = sbr.rel (0) target = $region29
    $region28: #{tpu_custom_call.1} parent=1 // pred_region
      %1351 = vsyncadd [#allocation5], 0
      %s1353 = sshll.u32 [#allocation6], 4
      %s1354 = int_to_ptr.vmem [resolvable:$true] %s1353
      %s1355 = sshll.u32 %s5, 4
      %s1356 = int_to_ptr.hbm [resolvable:$true] %s1355
      %1358 = dma.vmem_to_hbm [thread:$0]  %s1354, 128, %s1356, [#allocation5]
    $region29: #{tpu_custom_call.1} parent=1 // pred_fallthru
      _
    // Predicated region
    $region30: #{tpu_custom_call.1} parent=1 // pred_check
      _
    $region31: #{tpu_custom_call.1} parent=1 // pred_check_branch
      %1360 = sbr.rel (0) target = $region33
    $region32: #{tpu_custom_call.1} parent=1 // pred_region
      %1362 = dma.done [#allocation5], 128
    $region33: #{tpu_custom_call.1} parent=1 // pred_fallthru
      _
    %1363 = vsyncpa [#allocation4], 1
    %1364 = vsyncpa [#allocation5], 1

// kernel: tpu_custom_call.1
$region0: #{tpu_custom_call.1}
  #allocation0 [shape = 'u32[]', space=smem, size = 0x4, offset = 0x4, fixed_abs, tag = 'smem constant byte address 0x4 - core index']
  #allocation1 [shape = 'u32[72,128]{1,0:T(1,128)}', space=vmem, size = 0x9000, scoped, tag = 'internal scratch']
  #allocation2 [shape = 'bf16[8,512]{1,0:T(8,128)(2,1)}', space=vmem, size = 0x2000, scoped, tag = 'scratch operand']
  %s0 = inlined_call_operand.vmem [shape: f32[8,4,16], index: 0, kind: input, shape index: {}]
  %s1 = inlined_call_operand.vmem [shape: bf16[32,4], index: 1, kind: input, shape index: {}]
  %s2 = inlined_call_operand.vmem [shape: f32[32,1], index: 2, kind: input, shape index: {}]
  %s3 = inlined_call_operand.hbm [shape: bf16[512,128], index: 3, kind: input, shape index: {}]
  %s4 = inlined_call_operand.vmem [shape: f32[1,128], index: 4, kind: input, shape index: {}]
  %s5 = inlined_call_operand.hbm [shape: f32[8,128], index: 5, kind: output, shape index: {}]
  %s6 = sld [smem:[#allocation0]]
  $region34: #{tpu_custom_call.1} parent=0
    _
  %s8 = ssub.s32 1, %s6
  %s9 = scalar_select 0, %s8, %s6
  $region1: #{tpu_custom_call.1} parent=0
    #allocation3 [shape = 'u8[131072]{0}', space=vmem, size = 0x20000, scoped, tag = 'input window, operand 3, single buffered']
    #allocation4 [shape = 's32[1]{0}', space=sflag, size = 0x4, scoped, tag = 'scoped memory for tpu_custom_call.1']
    #allocation5 [shape = 's32[1]{0}', space=sflag, size = 0x4, scoped, tag = 'scoped memory for tpu_custom_call.1']
    #allocation6 [shape = 'u8[4096]{0}', space=vmem, size = 0x1000, scoped, tag = 'output window, operand 0, single buffered']
    %10 = vsyncpa [#allocation4], 0
    %11 = vsyncpa [#allocation5], 0
    // Predicated region
    $region2: #{tpu_custom_call.1} parent=1 // pred_check
      _
    $region3: #{tpu_custom_call.1} parent=1 // pred_check_branch
      %13 = sbr.rel (0) target = $region5
    $region4: #{tpu_custom_call.1} parent=1 // pred_region
      _
    $region5: #{tpu_custom_call.1} parent=1 // pred_fallthru
      _
    // Predicated region
    $region6: #{tpu_custom_call.1} parent=1 // pred_check
      _
    $region7: #{tpu_custom_call.1} parent=1 // pred_check_branch
      %15 = sbr.rel (0) target = $region9
    $region8: #{tpu_custom_call.1} parent=1 // pred_region
      _
    $region9: #{tpu_custom_call.1} parent=1 // pred_fallthru
      _
    // Predicated region
    $region10: #{tpu_custom_call.1} parent=1 // pred_check
      _
    $region11: #{tpu_custom_call.1} parent=1 // pred_check_branch
      %17 = sbr.rel (0) target = $region13
    $region12: #{tpu_custom_call.1} parent=1 // pred_region
      _
    $region13: #{tpu_custom_call.1} parent=1 // pred_fallthru
      _
    // Predicated region
    $region14: #{tpu_custom_call.1} parent=1 // pred_check
      _
    $region15: #{tpu_custom_call.1} parent=1 // pred_check_branch
      %19 = sbr.rel (0) target = $region17
    $region16: #{tpu_custom_call.1} parent=1 // pred_region
      %21 = vsyncadd [#allocation4], 0
      %s22 = sshll.u32 %s3, 4
      %s23 = int_to_ptr.hbm [resolvable:$true] %s22
      %s24 = sshll.u32 [#allocation3], 4
      %s25 = int_to_ptr.vmem [resolvable:$true] %s24
      %30 = dma.hbm_to_vmem [thread:$0]  %s23, 4096, %s25, [#allocation4], 64, 64, 4
    $region17: #{tpu_custom_call.1} parent=1 // pred_fallthru
      _
    // Predicated region
    $region18: #{tpu_custom_call.1} parent=1 // pred_check
      _
    $region19: #{tpu_custom_call.1} parent=1 // pred_check_branch
      %32 = sbr.rel (0) target = $region21
    $region20: #{tpu_custom_call.1} parent=1 // pred_region
      _
    $region21: #{tpu_custom_call.1} parent=1 // pred_fallthru
      _
    // Predicated region
    $region22: #{tpu_custom_call.1} parent=1 // pred_check
      _
    $region23: #{tpu_custom_call.1} parent=1 // pred_check_branch
      %34 = sbr.rel (0) target = $region25
    $region24: #{tpu_custom_call.1} parent=1 // pred_region
      %36 = dma.done [#allocation4], 4096
    $region25: #{tpu_custom_call.1} parent=1 // pred_fallthru
      _
    %v38 = vld [vmem:[%s0] sm:$0xf]
    %v39 = vld [vmem:[%s0 + $0x4] sm:$0xf]
    %v40 = vld [vmem:[%s0 + $0x8] sm:$0xf]
    %v41 = vld [vmem:[%s0 + $0xc] sm:$0xf]
    %v42 = vld [vmem:[%s0 + $0x10] sm:$0xf]
    %v43 = vld [vmem:[%s0 + $0x14] sm:$0xf]
    %v44 = vld [vmem:[%s0 + $0x18] sm:$0xf]
    %v45 = vld [vmem:[%s0 + $0x1c] sm:$0xf]
    %v46 = vpack.c.bf16 %v38, %v38
    %v47 = vpack.c.bf16 %v39, %v39
    %v48 = vpack.c.bf16 %v40, %v40
    %v49 = vpack.c.bf16 %v41, %v41
    %v50 = vpack.c.bf16 %v42, %v42
    %v51 = vpack.c.bf16 %v43, %v43
    %v52 = vpack.c.bf16 %v44, %v44
    %v53 = vpack.c.bf16 %v45, %v45
    %v54 = vld [vmem:[%s1] sm:$0xf]
    %v55 = vld [vmem:[%s1 + $0x4] sm:$0xf]
    %v56 = vld [vmem:[%s1 + $0x8] sm:$0xf]
    %v57 = vld [vmem:[%s1 + $0xc] sm:$0xf]
    %v58 = vld [vmem:[%s2] sm:$0xff]
    %v59 = vld [vmem:[%s2 + $0x8] sm:$0xff]
    %v60 = vld [vmem:[%s2 + $0x10] sm:$0xff]
    %v61 = vld [vmem:[%s2 + $0x18] sm:$0xff]
    %63 = vset.pattern.permute.xlu0 0
    %64 = vperm.xlu0 %63, %v58
    %v65 = vpop.permute.xlu0 %64
    %68 = vset.pattern.permute.xlu0 0
    %69 = vperm.xlu0 %68, %v59
    %v70 = vpop.permute.xlu0 %69
    %73 = vset.pattern.permute.xlu0 0
    %74 = vperm.xlu0 %73, %v60
    %v75 = vpop.permute.xlu0 %74
    %78 = vset.pattern.permute.xlu0 0
    %79 = vperm.xlu0 %78, %v61
    %v80 = vpop.permute.xlu0 %79
    %v86 = vunpack.c.l.b16 %v54
    %v87 = vunpack.c.l.b16 %v55
    %v88 = vunpack.c.l.b16 %v56
    %v89 = vunpack.c.l.b16 %v57
    %v90 = vpack.c.b16 %v87, %v86
    %v91 = vpack.c.b16 %v89, %v88
    %vm92 = vcmask 31744
    %v94 = vsel %vm92, %v90, 0
    %v97 = vsel %vm92, %v91, 0
    %vm99 = vcmask 1041408
    %v101 = vsel %vm99, %v46, 0
    %103 = vmatpush.bf16.msra.mxu0 0
    %104 = vmatpush.bf16.msra.mxu0 0
    %105 = vmatpush.bf16.msra.mxu0 0
    %106 = vmatpush.bf16.msra.mxu0 0
    %107 = vmatpush.bf16.msra.mxu0 0
    %108 = vmatpush.bf16.msra.mxu0 0
    %109 = vmatpush.bf16.msra.mxu0 0
    %110 = vmatpush.bf16.msra.mxu0 %v101
    %111 = vmatmul.bf16.gmra.mxu0 %v94
    %v112 = vpop.f32.mrf.mxu0
    %v113 = vadd.f32 %v65, %v112
    %v114 = vpop.f32.mrf.mxu0
    %v115 = vadd.f32 %v70, %v114
    %116 = vmatmul.bf16.gmra.mxu0 %v97
    %v117 = vpop.f32.mrf.mxu0
    %v118 = vadd.f32 %v75, %v117
    %v119 = vpop.f32.mrf.mxu0
    %v120 = vadd.f32 %v80, %v119
    %121 = vdwg.mxu0
    %v123 = vsel %vm99, %v47, 0
    %125 = vmatpush.bf16.msra.mxu0 0
    %126 = vmatpush.bf16.msra.mxu0 0
    %127 = vmatpush.bf16.msra.mxu0 0
    %128 = vmatpush.bf16.msra.mxu0 0
    %129 = vmatpush.bf16.msra.mxu0 0
    %130 = vmatpush.bf16.msra.mxu0 0
    %131 = vmatpush.bf16.msra.mxu0 0
    %132 = vmatpush.bf16.msra.mxu0 %v123
    %133 = vmatmul.bf16.gmra.mxu0 %v94
    %v134 = vpop.f32.mrf.mxu0
    %v135 = vadd.f32 %v65, %v134
    %v136 = vpop.f32.mrf.mxu0
    %v137 = vadd.f32 %v70, %v136
    %138 = vmatmul.bf16.gmra.mxu0 %v97
    %v139 = vpop.f32.mrf.mxu0
    %v140 = vadd.f32 %v75, %v139
    %v141 = vpop.f32.mrf.mxu0
    %v142 = vadd.f32 %v80, %v141
    %143 = vdwg.mxu0
    %v145 = vsel %vm99, %v48, 0
    %147 = vmatpush.bf16.msra.mxu0 0
    %148 = vmatpush.bf16.msra.mxu0 0
    %149 = vmatpush.bf16.msra.mxu0 0
    %150 = vmatpush.bf16.msra.mxu0 0
    %151 = vmatpush.bf16.msra.mxu0 0
    %152 = vmatpush.bf16.msra.mxu0 0
    %153 = vmatpush.bf16.msra.mxu0 0
    %154 = vmatpush.bf16.msra.mxu0 %v145
    %155 = vmatmul.bf16.gmra.mxu0 %v94
    %v156 = vpop.f32.mrf.mxu0
    %v157 = vadd.f32 %v65, %v156
    %v158 = vpop.f32.mrf.mxu0
    %v159 = vadd.f32 %v70, %v158
    %160 = vmatmul.bf16.gmra.mxu0 %v97
    %v161 = vpop.f32.mrf.mxu0
    %v162 = vadd.f32 %v75, %v161
    %v163 = vpop.f32.mrf.mxu0
    %v164 = vadd.f32 %v80, %v163
    %165 = vdwg.mxu0
    %v167 = vsel %vm99, %v49, 0
    %169 = vmatpush.bf16.msra.mxu0 0
    %170 = vmatpush.bf16.msra.mxu0 0
    %171 = vmatpush.bf16.msra.mxu0 0
    %172 = vmatpush.bf16.msra.mxu0 0
    %173 = vmatpush.bf16.msra.mxu0 0
    %174 = vmatpush.bf16.msra.mxu0 0
    %175 = vmatpush.bf16.msra.mxu0 0
    %176 = vmatpush.bf16.msra.mxu0 %v167
    %177 = vmatmul.bf16.gmra.mxu0 %v94
    %v178 = vpop.f32.mrf.mxu0
    %v179 = vadd.f32 %v65, %v178
    %v180 = vpop.f32.mrf.mxu0
    %v181 = vadd.f32 %v70, %v180
    %182 = vmatmul.bf16.gmra.mxu0 %v97
    %v183 = vpop.f32.mrf.mxu0
    %v184 = vadd.f32 %v75, %v183
    %v185 = vpop.f32.mrf.mxu0
    %v186 = vadd.f32 %v80, %v185
    %187 = vdwg.mxu0
    %v189 = vsel %vm99, %v50, 0
    %191 = vmatpush.bf16.msra.mxu0 0
    %192 = vmatpush.bf16.msra.mxu0 0
    %193 = vmatpush.bf16.msra.mxu0 0
    %194 = vmatpush.bf16.msra.mxu0 0
    %195 = vmatpush.bf16.msra.mxu0 0
    %196 = vmatpush.bf16.msra.mxu0 0
    %197 = vmatpush.bf16.msra.mxu0 0
    %198 = vmatpush.bf16.msra.mxu0 %v189
    %199 = vmatmul.bf16.gmra.mxu0 %v94
    %v200 = vpop.f32.mrf.mxu0
    %v201 = vadd.f32 %v65, %v200
    %v202 = vpop.f32.mrf.mxu0
    %v203 = vadd.f32 %v70, %v202
    %204 = vmatmul.bf16.gmra.mxu0 %v97
    %v205 = vpop.f32.mrf.mxu0
    %v206 = vadd.f32 %v75, %v205
    %v207 = vpop.f32.mrf.mxu0
    %v208 = vadd.f32 %v80, %v207
    %209 = vdwg.mxu0
    %v211 = vsel %vm99, %v51, 0
    %213 = vmatpush.bf16.msra.mxu0 0
    %214 = vmatpush.bf16.msra.mxu0 0
    %215 = vmatpush.bf16.msra.mxu0 0
    %216 = vmatpush.bf16.msra.mxu0 0
    %217 = vmatpush.bf16.msra.mxu0 0
    %218 = vmatpush.bf16.msra.mxu0 0
    %219 = vmatpush.bf16.msra.mxu0 0
    %220 = vmatpush.bf16.msra.mxu0 %v211
    %221 = vmatmul.bf16.gmra.mxu0 %v94
    %v222 = vpop.f32.mrf.mxu0
    %v223 = vadd.f32 %v65, %v222
    %v224 = vpop.f32.mrf.mxu0
    %v225 = vadd.f32 %v70, %v224
    %226 = vmatmul.bf16.gmra.mxu0 %v97
    %v227 = vpop.f32.mrf.mxu0
    %v228 = vadd.f32 %v75, %v227
    %v229 = vpop.f32.mrf.mxu0
    %v230 = vadd.f32 %v80, %v229
    %231 = vdwg.mxu0
    %v233 = vsel %vm99, %v52, 0
    %235 = vmatpush.bf16.msra.mxu0 0
    %236 = vmatpush.bf16.msra.mxu0 0
    %237 = vmatpush.bf16.msra.mxu0 0
    %238 = vmatpush.bf16.msra.mxu0 0
    %239 = vmatpush.bf16.msra.mxu0 0
    %240 = vmatpush.bf16.msra.mxu0 0
    %241 = vmatpush.bf16.msra.mxu0 0
    %242 = vmatpush.bf16.msra.mxu0 %v233
    %243 = vmatmul.bf16.gmra.mxu0 %v94
    %v244 = vpop.f32.mrf.mxu0
    %v245 = vadd.f32 %v65, %v244
    %v246 = vpop.f32.mrf.mxu0
    %v247 = vadd.f32 %v70, %v246
    %248 = vmatmul.bf16.gmra.mxu0 %v97
    %v249 = vpop.f32.mrf.mxu0
    %v250 = vadd.f32 %v75, %v249
    %v251 = vpop.f32.mrf.mxu0
    %v252 = vadd.f32 %v80, %v251
    %253 = vdwg.mxu0
    %v255 = vsel %vm99, %v53, 0
    %257 = vmatpush.bf16.msra.mxu0 0
    %258 = vmatpush.bf16.msra.mxu0 0
    %259 = vmatpush.bf16.msra.mxu0 0
    %260 = vmatpush.bf16.msra.mxu0 0
    %261 = vmatpush.bf16.msra.mxu0 0
    %262 = vmatpush.bf16.msra.mxu0 0
    %263 = vmatpush.bf16.msra.mxu0 0
    %264 = vmatpush.bf16.msra.mxu0 %v255
    %265 = vmatmul.bf16.gmra.mxu0 %v94
    %v266 = vpop.f32.mrf.mxu0
    %v267 = vadd.f32 %v65, %v266
    %v268 = vpop.f32.mrf.mxu0
    %v269 = vadd.f32 %v70, %v268
    %270 = vmatmul.bf16.gmra.mxu0 %v97
    %v271 = vpop.f32.mrf.mxu0
    %v272 = vadd.f32 %v75, %v271
    %v273 = vpop.f32.mrf.mxu0
    %v274 = vadd.f32 %v80, %v273
    %275 = vdwg.mxu0
    %v276 = vmax.f32 %v113, 0.0
    %v277 = vmax.f32 %v115, 0.0
    %v278 = vmax.f32 %v118, 0.0
    %v279 = vmax.f32 %v120, 0.0
    %v280 = vmax.f32 %v135, 0.0
    %v281 = vmax.f32 %v137, 0.0
    %v282 = vmax.f32 %v140, 0.0
    %v283 = vmax.f32 %v142, 0.0
    %v284 = vmax.f32 %v157, 0.0
    %v285 = vmax.f32 %v159, 0.0
    %v286 = vmax.f32 %v162, 0.0
    %v287 = vmax.f32 %v164, 0.0
    %v288 = vmax.f32 %v179, 0.0
    %v289 = vmax.f32 %v181, 0.0
    %v290 = vmax.f32 %v184, 0.0
    %v291 = vmax.f32 %v186, 0.0
    %v292 = vmax.f32 %v201, 0.0
    %v293 = vmax.f32 %v203, 0.0
    %v294 = vmax.f32 %v206, 0.0
    %v295 = vmax.f32 %v208, 0.0
    %v296 = vmax.f32 %v223, 0.0
    %v297 = vmax.f32 %v225, 0.0
    %v298 = vmax.f32 %v228, 0.0
    %v299 = vmax.f32 %v230, 0.0
    %v300 = vmax.f32 %v245, 0.0
    %v301 = vmax.f32 %v247, 0.0
    %v302 = vmax.f32 %v250, 0.0
    %v303 = vmax.f32 %v252, 0.0
    %v304 = vmax.f32 %v267, 0.0
    %v305 = vmax.f32 %v269, 0.0
    %v306 = vmax.f32 %v272, 0.0
    %v307 = vmax.f32 %v274, 0.0
    %v308 = vpack.c.bf16 %v276, %v276
    %v309 = vpack.c.bf16 %v277, %v277
    %v310 = vpack.c.bf16 %v278, %v278
    %v311 = vpack.c.bf16 %v279, %v279
    %v312 = vpack.c.bf16 %v280, %v280
    %v313 = vpack.c.bf16 %v281, %v281
    %v314 = vpack.c.bf16 %v282, %v282
    %v315 = vpack.c.bf16 %v283, %v283
    %v316 = vpack.c.bf16 %v284, %v284
    %v317 = vpack.c.bf16 %v285, %v285
    %v318 = vpack.c.bf16 %v286, %v286
    %v319 = vpack.c.bf16 %v287, %v287
    %v320 = vpack.c.bf16 %v288, %v288
    %v321 = vpack.c.bf16 %v289, %v289
    %v322 = vpack.c.bf16 %v290, %v290
    %v323 = vpack.c.bf16 %v291, %v291
    %v324 = vpack.c.bf16 %v292, %v292
    %v325 = vpack.c.bf16 %v293, %v293
    %v326 = vpack.c.bf16 %v294, %v294
    %v327 = vpack.c.bf16 %v295, %v295
    %v328 = vpack.c.bf16 %v296, %v296
    %v329 = vpack.c.bf16 %v297, %v297
    %v330 = vpack.c.bf16 %v298, %v298
    %v331 = vpack.c.bf16 %v299, %v299
    %v332 = vpack.c.bf16 %v300, %v300
    %v333 = vpack.c.bf16 %v301, %v301
    %v334 = vpack.c.bf16 %v302, %v302
    %v335 = vpack.c.bf16 %v303, %v303
    %v336 = vpack.c.bf16 %v304, %v304
    %v337 = vpack.c.bf16 %v305, %v305
    %v338 = vpack.c.bf16 %v306, %v306
    %v339 = vpack.c.bf16 %v307, %v307
    %v348 = vunpack.c.l.b16 %v308
    %v349 = vunpack.c.l.b16 %v312
    %v350 = vunpack.c.l.b16 %v316
    %v351 = vunpack.c.l.b16 %v320
    %v352 = vunpack.c.l.b16 %v324
    %v353 = vunpack.c.l.b16 %v328
    %v354 = vunpack.c.l.b16 %v332
    %v355 = vunpack.c.l.b16 %v336
    %v356 = vrot.slane %v349, 7
    %vm357 = vcmask 1041409
    %v358 = vsel %vm357, %v356, %v348
    %v359 = vrot.slane %v350, 6
    %vm360 = vcmask 1042434
    %v361 = vsel %vm360, %v359, %v358
    %v362 = vrot.slane %v351, 5
    %vm363 = vcmask 1043459
    %v364 = vsel %vm363, %v362, %v361
    %v365 = vrot.slane %v352, 4
    %vm366 = vcmask 1044484
    %v367 = vsel %vm366, %v365, %v364
    %v368 = vrot.slane %v353, 3
    %vm369 = vcmask 1045509
    %v370 = vsel %vm369, %v368, %v367
    %v371 = vrot.slane %v354, 2
    %vm372 = vcmask 1046534
    %v373 = vsel %vm372, %v371, %v370
    %v374 = vrot.slane %v355, 1
    %vm375 = vcmask 1047559
    %v376 = vsel %vm375, %v374, %v373
    %v377 = vpack.c.b16 %v376, %v376
    %vm379 = vcmask 125952
    %380 = vst.msk [vmem:[#allocation2] sm:$0xf] %vm379, %v377
    %v381 = vrot.slane %v348, 1
    %v382 = vsel %vm357, %v349, %v381
    %v383 = vrot.slane %v350, 7
    %v384 = vsel %vm360, %v383, %v382
    %v385 = vrot.slane %v351, 6
    %v386 = vsel %vm363, %v385, %v384
    %v387 = vrot.slane %v352, 5
    %v388 = vsel %vm366, %v387, %v386
    %v389 = vrot.slane %v353, 4
    %v390 = vsel %vm369, %v389, %v388
    %v391 = vrot.slane %v354, 3
    %v392 = vsel %vm372, %v391, %v390
    %v393 = vrot.slane %v355, 2
    %v394 = vsel %vm375, %v393, %v392
    %v395 = vpack.c.b16 %v394, %v394
    %396 = vrot.lane.b32.xlu0 %v395, 16
    %v397 = vpop.permute.xlu0 %396
    %vm399 = vcmask 257152
    %400 = vst.msk [vmem:[#allocation2] sm:$0xf] %vm399, %v397
    %v401 = vrot.slane %v348, 2
    %v402 = vrot.slane %v349, 1
    %v403 = vsel %vm357, %v402, %v401
    %v404 = vsel %vm360, %v350, %v403
    %v405 = vrot.slane %v351, 7
    %v406 = vsel %vm363, %v405, %v404
    %v407 = vrot.slane %v352, 6
    %v408 = vsel %vm366, %v407, %v406
    %v409 = vrot.slane %v353, 5
    %v410 = vsel %vm369, %v409, %v408
    %v411 = vrot.slane %v354, 4
    %v412 = vsel %vm372, %v411, %v410
    %v413 = vrot.slane %v355, 3
    %v414 = vsel %vm375, %v413, %v412
    %v415 = vpack.c.b16 %v414, %v414
    %416 = vrot.lane.b32.xlu0 %v415, 32
    %v417 = vpop.permute.xlu0 %416
    %vm419 = vcmask 388352
    %420 = vst.msk [vmem:[#allocation2] sm:$0xf] %vm419, %v417
    %v421 = vrot.slane %v348, 3
    %v422 = vrot.slane %v349, 2
    %v423 = vsel %vm357, %v422, %v421
    %v424 = vrot.slane %v350, 1
    %v425 = vsel %vm360, %v424, %v423
    %v426 = vsel %vm363, %v351, %v425
    %v427 = vrot.slane %v352, 7
    %v428 = vsel %vm366, %v427, %v426
    %v429 = vrot.slane %v353, 6
    %v430 = vsel %vm369, %v429, %v428
    %v431 = vrot.slane %v354, 5
    %v432 = vsel %vm372, %v431, %v430
    %v433 = vrot.slane %v355, 4
    %v434 = vsel %vm375, %v433, %v432
    %v435 = vpack.c.b16 %v434, %v434
    %436 = vrot.lane.b32.xlu0 %v435, 48
    %v437 = vpop.permute.xlu0 %436
    %vm439 = vcmask 519552
    %440 = vst.msk [vmem:[#allocation2] sm:$0xf] %vm439, %v437
    %v441 = vrot.slane %v348, 4
    %v442 = vrot.slane %v349, 3
    %v443 = vsel %vm357, %v442, %v441
    %v444 = vrot.slane %v350, 2
    %v445 = vsel %vm360, %v444, %v443
    %v446 = vrot.slane %v351, 1
    %v447 = vsel %vm363, %v446, %v445
    %v448 = vsel %vm366, %v352, %v447
    %v449 = vrot.slane %v353, 7
    %v450 = vsel %vm369, %v449, %v448
    %v451 = vrot.slane %v354, 6
    %v452 = vsel %vm372, %v451, %v450
    %v453 = vrot.slane %v355, 5
    %v454 = vsel %vm375, %v453, %v452
    %v455 = vpack.c.b16 %v454, %v454
    %456 = vrot.lane.b32.xlu0 %v455, 64
    %v457 = vpop.permute.xlu0 %456
    %vm459 = vcmask 650752
    %460 = vst.msk [vmem:[#allocation2] sm:$0xf] %vm459, %v457
    %v461 = vrot.slane %v348, 5
    %v462 = vrot.slane %v349, 4
    %v463 = vsel %vm357, %v462, %v461
    %v464 = vrot.slane %v350, 3
    %v465 = vsel %vm360, %v464, %v463
    %v466 = vrot.slane %v351, 2
    %v467 = vsel %vm363, %v466, %v465
    %v468 = vrot.slane %v352, 1
    %v469 = vsel %vm366, %v468, %v467
    %v470 = vsel %vm369, %v353, %v469
    %v471 = vrot.slane %v354, 7
    %v472 = vsel %vm372, %v471, %v470
    %v473 = vrot.slane %v355, 6
    %v474 = vsel %vm375, %v473, %v472
    %v475 = vpack.c.b16 %v474, %v474
    %476 = vrot.lane.b32.xlu0 %v475, 80
    %v477 = vpop.permute.xlu0 %476
    %vm479 = vcmask 781952
    %480 = vst.msk [vmem:[#allocation2] sm:$0xf] %vm479, %v477
    %v481 = vrot.slane %v348, 6
    %v482 = vrot.slane %v349, 5
    %v483 = vsel %vm357, %v482, %v481
    %v484 = vrot.slane %v350, 4
    %v485 = vsel %vm360, %v484, %v483
    %v486 = vrot.slane %v351, 3
    %v487 = vsel %vm363, %v486, %v485
    %v488 = vrot.slane %v352, 2
    %v489 = vsel %vm366, %v488, %v487
    %v490 = vrot.slane %v353, 1
    %v491 = vsel %vm369, %v490, %v489
    %v492 = vsel %vm372, %v354, %v491
    %v493 = vrot.slane %v355, 7
    %v494 = vsel %vm375, %v493, %v492
    %v495 = vpack.c.b16 %v494, %v494
    %496 = vrot.lane.b32.xlu0 %v495, 96
    %v497 = vpop.permute.xlu0 %496
    %vm499 = vcmask 913152
    %500 = vst.msk [vmem:[#allocation2] sm:$0xf] %vm499, %v497
    %v501 = vrot.slane %v348, 7
    %v502 = vrot.slane %v349, 6
    %v503 = vsel %vm357, %v502, %v501
    %v504 = vrot.slane %v350, 5
    %v505 = vsel %vm360, %v504, %v503
    %v506 = vrot.slane %v351, 4
    %v507 = vsel %vm363, %v506, %v505
    %v508 = vrot.slane %v352, 3
    %v509 = vsel %vm366, %v508, %v507
    %v510 = vrot.slane %v353, 2
    %v511 = vsel %vm369, %v510, %v509
    %v512 = vrot.slane %v354, 1
    %v513 = vsel %vm372, %v512, %v511
    %v514 = vsel %vm375, %v355, %v513
    %v515 = vpack.c.b16 %v514, %v514
    %516 = vrot.lane.b32.xlu0 %v515, 112
    %v517 = vpop.permute.xlu0 %516
    %vm519 = vcmask 1044352
    %520 = vst.msk [vmem:[#allocation2] sm:$0xf] %vm519, %v517
    %v529 = vunpack.c.l.b16 %v309
    %v530 = vunpack.c.l.b16 %v313
    %v531 = vunpack.c.l.b16 %v317
    %v532 = vunpack.c.l.b16 %v321
    %v533 = vunpack.c.l.b16 %v325
    %v534 = vunpack.c.l.b16 %v329
    %v535 = vunpack.c.l.b16 %v333
    %v536 = vunpack.c.l.b16 %v337
    %v537 = vrot.slane %v530, 7
    %v538 = vsel %vm357, %v537, %v529
    %v539 = vrot.slane %v531, 6
    %v540 = vsel %vm360, %v539, %v538
    %v541 = vrot.slane %v532, 5
    %v542 = vsel %vm363, %v541, %v540
    %v543 = vrot.slane %v533, 4
    %v544 = vsel %vm366, %v543, %v542
    %v545 = vrot.slane %v534, 3
    %v546 = vsel %vm369, %v545, %v544
    %v547 = vrot.slane %v535, 2
    %v548 = vsel %vm372, %v547, %v546
    %v549 = vrot.slane %v536, 1
    %v550 = vsel %vm375, %v549, %v548
    %v551 = vpack.c.b16 %v550, %v550
    %553 = vst.msk [vmem:[#allocation2 + $0x4] sm:$0xf] %vm379, %v551
    %v554 = vrot.slane %v529, 1
    %v555 = vsel %vm357, %v530, %v554
    %v556 = vrot.slane %v531, 7
    %v557 = vsel %vm360, %v556, %v555
    %v558 = vrot.slane %v532, 6
    %v559 = vsel %vm363, %v558, %v557
    %v560 = vrot.slane %v533, 5
    %v561 = vsel %vm366, %v560, %v559
    %v562 = vrot.slane %v534, 4
    %v563 = vsel %vm369, %v562, %v561
    %v564 = vrot.slane %v535, 3
    %v565 = vsel %vm372, %v564, %v563
    %v566 = vrot.slane %v536, 2
    %v567 = vsel %vm375, %v566, %v565
    %v568 = vpack.c.b16 %v567, %v567
    %569 = vrot.lane.b32.xlu0 %v568, 16
    %v570 = vpop.permute.xlu0 %569
    %572 = vst.msk [vmem:[#allocation2 + $0x4] sm:$0xf] %vm399, %v570
    %v573 = vrot.slane %v529, 2
    %v574 = vrot.slane %v530, 1
    %v575 = vsel %vm357, %v574, %v573
    %v576 = vsel %vm360, %v531, %v575
    %v577 = vrot.slane %v532, 7
    %v578 = vsel %vm363, %v577, %v576
    %v579 = vrot.slane %v533, 6
    %v580 = vsel %vm366, %v579, %v578
    %v581 = vrot.slane %v534, 5
    %v582 = vsel %vm369, %v581, %v580
    %v583 = vrot.slane %v535, 4
    %v584 = vsel %vm372, %v583, %v582
    %v585 = vrot.slane %v536, 3
    %v586 = vsel %vm375, %v585, %v584
    %v587 = vpack.c.b16 %v586, %v586
    %588 = vrot.lane.b32.xlu0 %v587, 32
    %v589 = vpop.permute.xlu0 %588
    %591 = vst.msk [vmem:[#allocation2 + $0x4] sm:$0xf] %vm419, %v589
    %v592 = vrot.slane %v529, 3
    %v593 = vrot.slane %v530, 2
    %v594 = vsel %vm357, %v593, %v592
    %v595 = vrot.slane %v531, 1
    %v596 = vsel %vm360, %v595, %v594
    %v597 = vsel %vm363, %v532, %v596
    %v598 = vrot.slane %v533, 7
    %v599 = vsel %vm366, %v598, %v597
    %v600 = vrot.slane %v534, 6
    %v601 = vsel %vm369, %v600, %v599
    %v602 = vrot.slane %v535, 5
    %v603 = vsel %vm372, %v602, %v601
    %v604 = vrot.slane %v536, 4
    %v605 = vsel %vm375, %v604, %v603
    %v606 = vpack.c.b16 %v605, %v605
    %607 = vrot.lane.b32.xlu0 %v606, 48
    %v608 = vpop.permute.xlu0 %607
    %610 = vst.msk [vmem:[#allocation2 + $0x4] sm:$0xf] %vm439, %v608
    %v611 = vrot.slane %v529, 4
    %v612 = vrot.slane %v530, 3
    %v613 = vsel %vm357, %v612, %v611
    %v614 = vrot.slane %v531, 2
    %v615 = vsel %vm360, %v614, %v613
    %v616 = vrot.slane %v532, 1
    %v617 = vsel %vm363, %v616, %v615
    %v618 = vsel %vm366, %v533, %v617
    %v619 = vrot.slane %v534, 7
    %v620 = vsel %vm369, %v619, %v618
    %v621 = vrot.slane %v535, 6
    %v622 = vsel %vm372, %v621, %v620
    %v623 = vrot.slane %v536, 5
    %v624 = vsel %vm375, %v623, %v622
    %v625 = vpack.c.b16 %v624, %v624
    %626 = vrot.lane.b32.xlu0 %v625, 64
    %v627 = vpop.permute.xlu0 %626
    %629 = vst.msk [vmem:[#allocation2 + $0x4] sm:$0xf] %vm459, %v627
    %v630 = vrot.slane %v529, 5
    %v631 = vrot.slane %v530, 4
    %v632 = vsel %vm357, %v631, %v630
    %v633 = vrot.slane %v531, 3
    %v634 = vsel %vm360, %v633, %v632
    %v635 = vrot.slane %v532, 2
    %v636 = vsel %vm363, %v635, %v634
    %v637 = vrot.slane %v533, 1
    %v638 = vsel %vm366, %v637, %v636
    %v639 = vsel %vm369, %v534, %v638
    %v640 = vrot.slane %v535, 7
    %v641 = vsel %vm372, %v640, %v639
    %v642 = vrot.slane %v536, 6
    %v643 = vsel %vm375, %v642, %v641
    %v644 = vpack.c.b16 %v643, %v643
    %645 = vrot.lane.b32.xlu0 %v644, 80
    %v646 = vpop.permute.xlu0 %645
    %648 = vst.msk [vmem:[#allocation2 + $0x4] sm:$0xf] %vm479, %v646
    %v649 = vrot.slane %v529, 6
    %v650 = vrot.slane %v530, 5
    %v651 = vsel %vm357, %v650, %v649
    %v652 = vrot.slane %v531, 4
    %v653 = vsel %vm360, %v652, %v651
    %v654 = vrot.slane %v532, 3
    %v655 = vsel %vm363, %v654, %v653
    %v656 = vrot.slane %v533, 2
    %v657 = vsel %vm366, %v656, %v655
    %v658 = vrot.slane %v534, 1
    %v659 = vsel %vm369, %v658, %v657
    %v660 = vsel %vm372, %v535, %v659
    %v661 = vrot.slane %v536, 7
    %v662 = vsel %vm375, %v661, %v660
    %v663 = vpack.c.b16 %v662, %v662
    %664 = vrot.lane.b32.xlu0 %v663, 96
    %v665 = vpop.permute.xlu0 %664
    %667 = vst.msk [vmem:[#allocation2 + $0x4] sm:$0xf] %vm499, %v665
    %v668 = vrot.slane %v529, 7
    %v669 = vrot.slane %v530, 6
    %v670 = vsel %vm357, %v669, %v668
    %v671 = vrot.slane %v531, 5
    %v672 = vsel %vm360, %v671, %v670
    %v673 = vrot.slane %v532, 4
    %v674 = vsel %vm363, %v673, %v672
    %v675 = vrot.slane %v533, 3
    %v676 = vsel %vm366, %v675, %v674
    %v677 = vrot.slane %v534, 2
    %v678 = vsel %vm369, %v677, %v676
    %v679 = vrot.slane %v535, 1
    %v680 = vsel %vm372, %v679, %v678
    %v681 = vsel %vm375, %v536, %v680
    %v682 = vpack.c.b16 %v681, %v681
    %683 = vrot.lane.b32.xlu0 %v682, 112
    %v684 = vpop.permute.xlu0 %683
    %686 = vst.msk [vmem:[#allocation2 + $0x4] sm:$0xf] %vm519, %v684
    %v695 = vunpack.c.l.b16 %v310
    %v696 = vunpack.c.l.b16 %v314
    %v697 = vunpack.c.l.b16 %v318
    %v698 = vunpack.c.l.b16 %v322
    %v699 = vunpack.c.l.b16 %v326
    %v700 = vunpack.c.l.b16 %v330
    %v701 = vunpack.c.l.b16 %v334
    %v702 = vunpack.c.l.b16 %v338
    %v703 = vrot.slane %v696, 7
    %v704 = vsel %vm357, %v703, %v695
    %v705 = vrot.slane %v697, 6
    %v706 = vsel %vm360, %v705, %v704
    %v707 = vrot.slane %v698, 5
    %v708 = vsel %vm363, %v707, %v706
    %v709 = vrot.slane %v699, 4
    %v710 = vsel %vm366, %v709, %v708
    %v711 = vrot.slane %v700, 3
    %v712 = vsel %vm369, %v711, %v710
    %v713 = vrot.slane %v701, 2
    %v714 = vsel %vm372, %v713, %v712
    %v715 = vrot.slane %v702, 1
    %v716 = vsel %vm375, %v715, %v714
    %v717 = vpack.c.b16 %v716, %v716
    %719 = vst.msk [vmem:[#allocation2 + $0x8] sm:$0xf] %vm379, %v717
    %v720 = vrot.slane %v695, 1
    %v721 = vsel %vm357, %v696, %v720
    %v722 = vrot.slane %v697, 7
    %v723 = vsel %vm360, %v722, %v721
    %v724 = vrot.slane %v698, 6
    %v725 = vsel %vm363, %v724, %v723
    %v726 = vrot.slane %v699, 5
    %v727 = vsel %vm366, %v726, %v725
    %v728 = vrot.slane %v700, 4
    %v729 = vsel %vm369, %v728, %v727
    %v730 = vrot.slane %v701, 3
    %v731 = vsel %vm372, %v730, %v729
    %v732 = vrot.slane %v702, 2
    %v733 = vsel %vm375, %v732, %v731
    %v734 = vpack.c.b16 %v733, %v733
    %735 = vrot.lane.b32.xlu0 %v734, 16
    %v736 = vpop.permute.xlu0 %735
    %738 = vst.msk [vmem:[#allocation2 + $0x8] sm:$0xf] %vm399, %v736
    %v739 = vrot.slane %v695, 2
    %v740 = vrot.slane %v696, 1
    %v741 = vsel %vm357, %v740, %v739
    %v742 = vsel %vm360, %v697, %v741
    %v743 = vrot.slane %v698, 7
    %v744 = vsel %vm363, %v743, %v742
    %v745 = vrot.slane %v699, 6
    %v746 = vsel %vm366, %v745, %v744
    %v747 = vrot.slane %v700, 5
    %v748 = vsel %vm369, %v747, %v746
    %v749 = vrot.slane %v701, 4
    %v750 = vsel %vm372, %v749, %v748
    %v751 = vrot.slane %v702, 3
    %v752 = vsel %vm375, %v751, %v750
    %v753 = vpack.c.b16 %v752, %v752
    %754 = vrot.lane.b32.xlu0 %v753, 32
    %v755 = vpop.permute.xlu0 %754
    %757 = vst.msk [vmem:[#allocation2 + $0x8] sm:$0xf] %vm419, %v755
    %v758 = vrot.slane %v695, 3
    %v759 = vrot.slane %v696, 2
    %v760 = vsel %vm357, %v759, %v758
    %v761 = vrot.slane %v697, 1
    %v762 = vsel %vm360, %v761, %v760
    %v763 = vsel %vm363, %v698, %v762
    %v764 = vrot.slane %v699, 7
    %v765 = vsel %vm366, %v764, %v763
    %v766 = vrot.slane %v700, 6
    %v767 = vsel %vm369, %v766, %v765
    %v768 = vrot.slane %v701, 5
    %v769 = vsel %vm372, %v768, %v767
    %v770 = vrot.slane %v702, 4
    %v771 = vsel %vm375, %v770, %v769
    %v772 = vpack.c.b16 %v771, %v771
    %773 = vrot.lane.b32.xlu0 %v772, 48
    %v774 = vpop.permute.xlu0 %773
    %776 = vst.msk [vmem:[#allocation2 + $0x8] sm:$0xf] %vm439, %v774
    %v777 = vrot.slane %v695, 4
    %v778 = vrot.slane %v696, 3
    %v779 = vsel %vm357, %v778, %v777
    %v780 = vrot.slane %v697, 2
    %v781 = vsel %vm360, %v780, %v779
    %v782 = vrot.slane %v698, 1
    %v783 = vsel %vm363, %v782, %v781
    %v784 = vsel %vm366, %v699, %v783
    %v785 = vrot.slane %v700, 7
    %v786 = vsel %vm369, %v785, %v784
    %v787 = vrot.slane %v701, 6
    %v788 = vsel %vm372, %v787, %v786
    %v789 = vrot.slane %v702, 5
    %v790 = vsel %vm375, %v789, %v788
    %v791 = vpack.c.b16 %v790, %v790
    %792 = vrot.lane.b32.xlu0 %v791, 64
    %v793 = vpop.permute.xlu0 %792
    %795 = vst.msk [vmem:[#allocation2 + $0x8] sm:$0xf] %vm459, %v793
    %v796 = vrot.slane %v695, 5
    %v797 = vrot.slane %v696, 4
    %v798 = vsel %vm357, %v797, %v796
    %v799 = vrot.slane %v697, 3
    %v800 = vsel %vm360, %v799, %v798
    %v801 = vrot.slane %v698, 2
    %v802 = vsel %vm363, %v801, %v800
    %v803 = vrot.slane %v699, 1
    %v804 = vsel %vm366, %v803, %v802
    %v805 = vsel %vm369, %v700, %v804
    %v806 = vrot.slane %v701, 7
    %v807 = vsel %vm372, %v806, %v805
    %v808 = vrot.slane %v702, 6
    %v809 = vsel %vm375, %v808, %v807
    %v810 = vpack.c.b16 %v809, %v809
    %811 = vrot.lane.b32.xlu0 %v810, 80
    %v812 = vpop.permute.xlu0 %811
    %814 = vst.msk [vmem:[#allocation2 + $0x8] sm:$0xf] %vm479, %v812
    %v815 = vrot.slane %v695, 6
    %v816 = vrot.slane %v696, 5
    %v817 = vsel %vm357, %v816, %v815
    %v818 = vrot.slane %v697, 4
    %v819 = vsel %vm360, %v818, %v817
    %v820 = vrot.slane %v698, 3
    %v821 = vsel %vm363, %v820, %v819
    %v822 = vrot.slane %v699, 2
    %v823 = vsel %vm366, %v822, %v821
    %v824 = vrot.slane %v700, 1
    %v825 = vsel %vm369, %v824, %v823
    %v826 = vsel %vm372, %v701, %v825
    %v827 = vrot.slane %v702, 7
    %v828 = vsel %vm375, %v827, %v826
    %v829 = vpack.c.b16 %v828, %v828
    %830 = vrot.lane.b32.xlu0 %v829, 96
    %v831 = vpop.permute.xlu0 %830
    %833 = vst.msk [vmem:[#allocation2 + $0x8] sm:$0xf] %vm499, %v831
    %v834 = vrot.slane %v695, 7
    %v835 = vrot.slane %v696, 6
    %v836 = vsel %vm357, %v835, %v834
    %v837 = vrot.slane %v697, 5
    %v838 = vsel %vm360, %v837, %v836
    %v839 = vrot.slane %v698, 4
    %v840 = vsel %vm363, %v839, %v838
    %v841 = vrot.slane %v699, 3
    %v842 = vsel %vm366, %v841, %v840
    %v843 = vrot.slane %v700, 2
    %v844 = vsel %vm369, %v843, %v842
    %v845 = vrot.slane %v701, 1
    %v846 = vsel %vm372, %v845, %v844
    %v847 = vsel %vm375, %v702, %v846
    %v848 = vpack.c.b16 %v847, %v847
    %849 = vrot.lane.b32.xlu0 %v848, 112
    %v850 = vpop.permute.xlu0 %849
    %852 = vst.msk [vmem:[#allocation2 + $0x8] sm:$0xf] %vm519, %v850
    %v861 = vunpack.c.l.b16 %v311
    %v862 = vunpack.c.l.b16 %v315
    %v863 = vunpack.c.l.b16 %v319
    %v864 = vunpack.c.l.b16 %v323
    %v865 = vunpack.c.l.b16 %v327
    %v866 = vunpack.c.l.b16 %v331
    %v867 = vunpack.c.l.b16 %v335
    %v868 = vunpack.c.l.b16 %v339
    %v869 = vrot.slane %v862, 7
    %v870 = vsel %vm357, %v869, %v861
    %v871 = vrot.slane %v863, 6
    %v872 = vsel %vm360, %v871, %v870
    %v873 = vrot.slane %v864, 5
    %v874 = vsel %vm363, %v873, %v872
    %v875 = vrot.slane %v865, 4
    %v876 = vsel %vm366, %v875, %v874
    %v877 = vrot.slane %v866, 3
    %v878 = vsel %vm369, %v877, %v876
    %v879 = vrot.slane %v867, 2
    %v880 = vsel %vm372, %v879, %v878
    %v881 = vrot.slane %v868, 1
    %v882 = vsel %vm375, %v881, %v880
    %v883 = vpack.c.b16 %v882, %v882
    %885 = vst.msk [vmem:[#allocation2 + $0xc] sm:$0xf] %vm379, %v883
    %v886 = vrot.slane %v861, 1
    %v887 = vsel %vm357, %v862, %v886
    %v888 = vrot.slane %v863, 7
    %v889 = vsel %vm360, %v888, %v887
    %v890 = vrot.slane %v864, 6
    %v891 = vsel %vm363, %v890, %v889
    %v892 = vrot.slane %v865, 5
    %v893 = vsel %vm366, %v892, %v891
    %v894 = vrot.slane %v866, 4
    %v895 = vsel %vm369, %v894, %v893
    %v896 = vrot.slane %v867, 3
    %v897 = vsel %vm372, %v896, %v895
    %v898 = vrot.slane %v868, 2
    %v899 = vsel %vm375, %v898, %v897
    %v900 = vpack.c.b16 %v899, %v899
    %901 = vrot.lane.b32.xlu0 %v900, 16
    %v902 = vpop.permute.xlu0 %901
    %904 = vst.msk [vmem:[#allocation2 + $0xc] sm:$0xf] %vm399, %v902
    %v905 = vrot.slane %v861, 2
    %v906 = vrot.slane %v862, 1
    %v907 = vsel %vm357, %v906, %v905
    %v908 = vsel %vm360, %v863, %v907
    %v909 = vrot.slane %v864, 7
    %v910 = vsel %vm363, %v909, %v908
    %v911 = vrot.slane %v865, 6
    %v912 = vsel %vm366, %v911, %v910
    %v913 = vrot.slane %v866, 5
    %v914 = vsel %vm369, %v913, %v912
    %v915 = vrot.slane %v867, 4
    %v916 = vsel %vm372, %v915, %v914
    %v917 = vrot.slane %v868, 3
    %v918 = vsel %vm375, %v917, %v916
    %v919 = vpack.c.b16 %v918, %v918
    %920 = vrot.lane.b32.xlu0 %v919, 32
    %v921 = vpop.permute.xlu0 %920
    %923 = vst.msk [vmem:[#allocation2 + $0xc] sm:$0xf] %vm419, %v921
    %v924 = vrot.slane %v861, 3
    %v925 = vrot.slane %v862, 2
    %v926 = vsel %vm357, %v925, %v924
    %v927 = vrot.slane %v863, 1
    %v928 = vsel %vm360, %v927, %v926
    %v929 = vsel %vm363, %v864, %v928
    %v930 = vrot.slane %v865, 7
    %v931 = vsel %vm366, %v930, %v929
    %v932 = vrot.slane %v866, 6
    %v933 = vsel %vm369, %v932, %v931
    %v934 = vrot.slane %v867, 5
    %v935 = vsel %vm372, %v934, %v933
    %v936 = vrot.slane %v868, 4
    %v937 = vsel %vm375, %v936, %v935
    %v938 = vpack.c.b16 %v937, %v937
    %939 = vrot.lane.b32.xlu0 %v938, 48
    %v940 = vpop.permute.xlu0 %939
    %942 = vst.msk [vmem:[#allocation2 + $0xc] sm:$0xf] %vm439, %v940
    %v943 = vrot.slane %v861, 4
    %v944 = vrot.slane %v862, 3
    %v945 = vsel %vm357, %v944, %v943
    %v946 = vrot.slane %v863, 2
    %v947 = vsel %vm360, %v946, %v945
    %v948 = vrot.slane %v864, 1
    %v949 = vsel %vm363, %v948, %v947
    %v950 = vsel %vm366, %v865, %v949
    %v951 = vrot.slane %v866, 7
    %v952 = vsel %vm369, %v951, %v950
    %v953 = vrot.slane %v867, 6
    %v954 = vsel %vm372, %v953, %v952
    %v955 = vrot.slane %v868, 5
    %v956 = vsel %vm375, %v955, %v954
    %v957 = vpack.c.b16 %v956, %v956
    %958 = vrot.lane.b32.xlu0 %v957, 64
    %v959 = vpop.permute.xlu0 %958
    %961 = vst.msk [vmem:[#allocation2 + $0xc] sm:$0xf] %vm459, %v959
    %v962 = vrot.slane %v861, 5
    %v963 = vrot.slane %v862, 4
    %v964 = vsel %vm357, %v963, %v962
    %v965 = vrot.slane %v863, 3
    %v966 = vsel %vm360, %v965, %v964
    %v967 = vrot.slane %v864, 2
    %v968 = vsel %vm363, %v967, %v966
    %v969 = vrot.slane %v865, 1
    %v970 = vsel %vm366, %v969, %v968
    %v971 = vsel %vm369, %v866, %v970
    %v972 = vrot.slane %v867, 7
    %v973 = vsel %vm372, %v972, %v971
    %v974 = vrot.slane %v868, 6
    %v975 = vsel %vm375, %v974, %v973
    %v976 = vpack.c.b16 %v975, %v975
    %977 = vrot.lane.b32.xlu0 %v976, 80
    %v978 = vpop.permute.xlu0 %977
    %980 = vst.msk [vmem:[#allocation2 + $0xc] sm:$0xf] %vm479, %v978
    %v981 = vrot.slane %v861, 6
    %v982 = vrot.slane %v862, 5
    %v983 = vsel %vm357, %v982, %v981
    %v984 = vrot.slane %v863, 4
    %v985 = vsel %vm360, %v984, %v983
    %v986 = vrot.slane %v864, 3
    %v987 = vsel %vm363, %v986, %v985
    %v988 = vrot.slane %v865, 2
    %v989 = vsel %vm366, %v988, %v987
    %v990 = vrot.slane %v866, 1
    %v991 = vsel %vm369, %v990, %v989
    %v992 = vsel %vm372, %v867, %v991
    %v993 = vrot.slane %v868, 7
    %v994 = vsel %vm375, %v993, %v992
    %v995 = vpack.c.b16 %v994, %v994
    %996 = vrot.lane.b32.xlu0 %v995, 96
    %v997 = vpop.permute.xlu0 %996
    %999 = vst.msk [vmem:[#allocation2 + $0xc] sm:$0xf] %vm499, %v997
    %v1000 = vrot.slane %v861, 7
    %v1001 = vrot.slane %v862, 6
    %v1002 = vsel %vm357, %v1001, %v1000
    %v1003 = vrot.slane %v863, 5
    %v1004 = vsel %vm360, %v1003, %v1002
    %v1005 = vrot.slane %v864, 4
    %v1006 = vsel %vm363, %v1005, %v1004
    %v1007 = vrot.slane %v865, 3
    %v1008 = vsel %vm366, %v1007, %v1006
    %v1009 = vrot.slane %v866, 2
    %v1010 = vsel %vm369, %v1009, %v1008
    %v1011 = vrot.slane %v867, 1
    %v1012 = vsel %vm372, %v1011, %v1010
    %v1013 = vsel %vm375, %v868, %v1012
    %v1014 = vpack.c.b16 %v1013, %v1013
    %1015 = vrot.lane.b32.xlu0 %v1014, 112
    %v1016 = vpop.permute.xlu0 %1015
    %1018 = vst.msk [vmem:[#allocation2 + $0xc] sm:$0xf] %vm519, %v1016
    %v1019 = vld [vmem:[#allocation2] sm:$0xff]
    %v1020 = vld [vmem:[#allocation2 + $0x8] sm:$0xff]
    %v1021 = vld [vmem:[#allocation3] sm:$0xf]
    %v1022 = vld [vmem:[#allocation3 + $0x4] sm:$0xf]
    %v1023 = vld [vmem:[#allocation3 + $0x8] sm:$0xf]
    %v1024 = vld [vmem:[#allocation3 + $0xc] sm:$0xf]
    %v1025 = vld [vmem:[#allocation3 + $0x10] sm:$0xf]
    %v1026 = vld [vmem:[#allocation3 + $0x14] sm:$0xf]
    %v1027 = vld [vmem:[#allocation3 + $0x18] sm:$0xf]
    %v1028 = vld [vmem:[#allocation3 + $0x1c] sm:$0xf]
    %v1029 = vld [vmem:[#allocation3 + $0x20] sm:$0xf]
    %v1030 = vld [vmem:[#allocation3 + $0x24] sm:$0xf]
    %v1031 = vld [vmem:[#allocation3 + $0x28] sm:$0xf]
    %v1032 = vld [vmem:[#allocation3 + $0x2c] sm:$0xf]
    %v1033 = vld [vmem:[#allocation3 + $0x30] sm:$0xf]
    %v1034 = vld [vmem:[#allocation3 + $0x34] sm:$0xf]
    %v1035 = vld [vmem:[#allocation3 + $0x38] sm:$0xf]
    %v1036 = vld [vmem:[#allocation3 + $0x3c] sm:$0xf]
    %v1037 = vld [vmem:[#allocation3 + $0x40] sm:$0xf]
    %v1038 = vld [vmem:[#allocation3 + $0x44] sm:$0xf]
    %v1039 = vld [vmem:[#allocation3 + $0x48] sm:$0xf]
    %v1040 = vld [vmem:[#allocation3 + $0x4c] sm:$0xf]
    %v1041 = vld [vmem:[#allocation3 + $0x50] sm:$0xf]
    %v1042 = vld [vmem:[#allocation3 + $0x54] sm:$0xf]
    %v1043 = vld [vmem:[#allocation3 + $0x58] sm:$0xf]
    %v1044 = vld [vmem:[#allocation3 + $0x5c] sm:$0xf]
    %v1045 = vld [vmem:[#allocation3 + $0x60] sm:$0xf]
    %v1046 = vld [vmem:[#allocation3 + $0x64] sm:$0xf]
    %v1047 = vld [vmem:[#allocation3 + $0x68] sm:$0xf]
    %v1048 = vld [vmem:[#allocation3 + $0x6c] sm:$0xf]
    %v1049 = vld [vmem:[#allocation3 + $0x70] sm:$0xf]
    %v1050 = vld [vmem:[#allocation3 + $0x74] sm:$0xf]
    %v1051 = vld [vmem:[#allocation3 + $0x78] sm:$0xf]
    %v1052 = vld [vmem:[#allocation3 + $0x7c] sm:$0xf]
    %v1053 = vld [vmem:[#allocation3 + $0x80] sm:$0xf]
    %v1054 = vld [vmem:[#allocation3 + $0x84] sm:$0xf]
    %v1055 = vld [vmem:[#allocation3 + $0x88] sm:$0xf]
    %v1056 = vld [vmem:[#allocation3 + $0x8c] sm:$0xf]
    %v1057 = vld [vmem:[#allocation3 + $0x90] sm:$0xf]
    %v1058 = vld [vmem:[#allocation3 + $0x94] sm:$0xf]
    %v1059 = vld [vmem:[#allocation3 + $0x98] sm:$0xf]
    %v1060 = vld [vmem:[#allocation3 + $0x9c] sm:$0xf]
    %v1061 = vld [vmem:[#allocation3 + $0xa0] sm:$0xf]
    %v1062 = vld [vmem:[#allocation3 + $0xa4] sm:$0xf]
    %v1063 = vld [vmem:[#allocation3 + $0xa8] sm:$0xf]
    %v1064 = vld [vmem:[#allocation3 + $0xac] sm:$0xf]
    %v1065 = vld [vmem:[#allocation3 + $0xb0] sm:$0xf]
    %v1066 = vld [vmem:[#allocation3 + $0xb4] sm:$0xf]
    %v1067 = vld [vmem:[#allocation3 + $0xb8] sm:$0xf]
    %v1068 = vld [vmem:[#allocation3 + $0xbc] sm:$0xf]
    %v1069 = vld [vmem:[#allocation3 + $0xc0] sm:$0xf]
    %v1070 = vld [vmem:[#allocation3 + $0xc4] sm:$0xf]
    %v1071 = vld [vmem:[#allocation3 + $0xc8] sm:$0xf]
    %v1072 = vld [vmem:[#allocation3 + $0xcc] sm:$0xf]
    %v1073 = vld [vmem:[#allocation3 + $0xd0] sm:$0xf]
    %v1074 = vld [vmem:[#allocation3 + $0xd4] sm:$0xf]
    %v1075 = vld [vmem:[#allocation3 + $0xd8] sm:$0xf]
    %v1076 = vld [vmem:[#allocation3 + $0xdc] sm:$0xf]
    %v1077 = vld [vmem:[#allocation3 + $0xe0] sm:$0xf]
    %v1078 = vld [vmem:[#allocation3 + $0xe4] sm:$0xf]
    %v1079 = vld [vmem:[#allocation3 + $0xe8] sm:$0xf]
    %v1080 = vld [vmem:[#allocation3 + $0xec] sm:$0xf]
    %v1081 = vld [vmem:[#allocation3 + $0xf0] sm:$0xf]
    %v1082 = vld [vmem:[#allocation3 + $0xf4] sm:$0xf]
    %v1083 = vld [vmem:[#allocation3 + $0xf8] sm:$0xf]
    %v1084 = vld [vmem:[#allocation3 + $0xfc] sm:$0xf]
    %v1085 = vld [vmem:[%s4] sm:$0x1]
    %v1087 = vperm.slane %v1085, 0
    %v1091 = vunpack.c.l.b16 %v1019
    %v1092 = vunpack.c.h.b16 %v1019
    %v1093 = vunpack.c.l.b16 %v1020
    %v1094 = vunpack.c.h.b16 %v1020
    %v1095 = vpack.c.b16 %v1091, %v1091
    %v1096 = vpack.c.b16 %v1092, %v1092
    %v1097 = vpack.c.b16 %v1093, %v1093
    %v1098 = vpack.c.b16 %v1094, %v1094
    %v1167 = vunpack.c.l.b16 %v1021
    %v1168 = vunpack.c.l.b16 %v1022
    %v1169 = vunpack.c.l.b16 %v1023
    %v1170 = vunpack.c.l.b16 %v1024
    %v1171 = vunpack.c.l.b16 %v1025
    %v1172 = vunpack.c.l.b16 %v1026
    %v1173 = vunpack.c.l.b16 %v1027
    %v1174 = vunpack.c.l.b16 %v1028
    %v1175 = vunpack.c.l.b16 %v1029
    %v1176 = vunpack.c.l.b16 %v1030
    %v1177 = vunpack.c.l.b16 %v1031
    %v1178 = vunpack.c.l.b16 %v1032
    %v1179 = vunpack.c.l.b16 %v1033
    %v1180 = vunpack.c.l.b16 %v1034
    %v1181 = vunpack.c.l.b16 %v1035
    %v1182 = vunpack.c.l.b16 %v1036
    %v1183 = vunpack.c.l.b16 %v1037
    %v1184 = vunpack.c.l.b16 %v1038
    %v1185 = vunpack.c.l.b16 %v1039
    %v1186 = vunpack.c.l.b16 %v1040
    %v1187 = vunpack.c.l.b16 %v1041
    %v1188 = vunpack.c.l.b16 %v1042
    %v1189 = vunpack.c.l.b16 %v1043
    %v1190 = vunpack.c.l.b16 %v1044
    %v1191 = vunpack.c.l.b16 %v1045
    %v1192 = vunpack.c.l.b16 %v1046
    %v1193 = vunpack.c.l.b16 %v1047
    %v1194 = vunpack.c.l.b16 %v1048
    %v1195 = vunpack.c.l.b16 %v1049
    %v1196 = vunpack.c.l.b16 %v1050
    %v1197 = vunpack.c.l.b16 %v1051
    %v1198 = vunpack.c.l.b16 %v1052
    %v1199 = vunpack.c.l.b16 %v1053
    %v1200 = vunpack.c.l.b16 %v1054
    %v1201 = vunpack.c.l.b16 %v1055
    %v1202 = vunpack.c.l.b16 %v1056
    %v1203 = vunpack.c.l.b16 %v1057
    %v1204 = vunpack.c.l.b16 %v1058
    %v1205 = vunpack.c.l.b16 %v1059
    %v1206 = vunpack.c.l.b16 %v1060
    %v1207 = vunpack.c.l.b16 %v1061
    %v1208 = vunpack.c.l.b16 %v1062
    %v1209 = vunpack.c.l.b16 %v1063
    %v1210 = vunpack.c.l.b16 %v1064
    %v1211 = vunpack.c.l.b16 %v1065
    %v1212 = vunpack.c.l.b16 %v1066
    %v1213 = vunpack.c.l.b16 %v1067
    %v1214 = vunpack.c.l.b16 %v1068
    %v1215 = vunpack.c.l.b16 %v1069
    %v1216 = vunpack.c.l.b16 %v1070
    %v1217 = vunpack.c.l.b16 %v1071
    %v1218 = vunpack.c.l.b16 %v1072
    %v1219 = vunpack.c.l.b16 %v1073
    %v1220 = vunpack.c.l.b16 %v1074
    %v1221 = vunpack.c.l.b16 %v1075
    %v1222 = vunpack.c.l.b16 %v1076
    %v1223 = vunpack.c.l.b16 %v1077
    %v1224 = vunpack.c.l.b16 %v1078
    %v1225 = vunpack.c.l.b16 %v1079
    %v1226 = vunpack.c.l.b16 %v1080
    %v1227 = vunpack.c.l.b16 %v1081
    %v1228 = vunpack.c.l.b16 %v1082
    %v1229 = vunpack.c.l.b16 %v1083
    %v1230 = vunpack.c.l.b16 %v1084
    %v1231 = vpack.c.b16 %v1168, %v1167
    %v1232 = vpack.c.b16 %v1170, %v1169
    %v1233 = vpack.c.b16 %v1172, %v1171
    %v1234 = vpack.c.b16 %v1174, %v1173
    %v1235 = vpack.c.b16 %v1176, %v1175
    %v1236 = vpack.c.b16 %v1178, %v1177
    %v1237 = vpack.c.b16 %v1180, %v1179
    %v1238 = vpack.c.b16 %v1182, %v1181
    %v1239 = vpack.c.b16 %v1184, %v1183
    %v1240 = vpack.c.b16 %v1186, %v1185
    %v1241 = vpack.c.b16 %v1188, %v1187
    %v1242 = vpack.c.b16 %v1190, %v1189
    %v1243 = vpack.c.b16 %v1192, %v1191
    %v1244 = vpack.c.b16 %v1194, %v1193
    %v1245 = vpack.c.b16 %v1196, %v1195
    %v1246 = vpack.c.b16 %v1198, %v1197
    %v1247 = vpack.c.b16 %v1200, %v1199
    %v1248 = vpack.c.b16 %v1202, %v1201
    %v1249 = vpack.c.b16 %v1204, %v1203
    %v1250 = vpack.c.b16 %v1206, %v1205
    %v1251 = vpack.c.b16 %v1208, %v1207
    %v1252 = vpack.c.b16 %v1210, %v1209
    %v1253 = vpack.c.b16 %v1212, %v1211
    %v1254 = vpack.c.b16 %v1214, %v1213
    %v1255 = vpack.c.b16 %v1216, %v1215
    %v1256 = vpack.c.b16 %v1218, %v1217
    %v1257 = vpack.c.b16 %v1220, %v1219
    %v1258 = vpack.c.b16 %v1222, %v1221
    %v1259 = vpack.c.b16 %v1224, %v1223
    %v1260 = vpack.c.b16 %v1226, %v1225
    %v1261 = vpack.c.b16 %v1228, %v1227
    %v1262 = vpack.c.b16 %v1230, %v1229
    %1295 = vmatpush.bf16.msra.mxu0 %v1238
    %1296 = vmatpush.bf16.msra.mxu0 %v1237
    %1297 = vmatpush.bf16.msra.mxu0 %v1236
    %1298 = vmatpush.bf16.msra.mxu0 %v1235
    %1299 = vmatpush.bf16.msra.mxu0 %v1234
    %1300 = vmatpush.bf16.msra.mxu0 %v1233
    %1301 = vmatpush.bf16.msra.mxu0 %v1232
    %1302 = vmatpush.bf16.msra.mxu0 %v1231
    %1303 = vmatmul.bf16.gmra.mxu0 %v1095
    %v1304 = vpop.f32.mrf.mxu0
    %v1305 = vadd.f32 %v1087, %v1304
    %v1306 = vpop.f32.mrf.mxu0
    %1307 = vdwg.mxu0
    %1308 = vmatpush.bf16.msra.mxu0 %v1246
    %1309 = vmatpush.bf16.msra.mxu0 %v1245
    %1310 = vmatpush.bf16.msra.mxu0 %v1244
    %1311 = vmatpush.bf16.msra.mxu0 %v1243
    %1312 = vmatpush.bf16.msra.mxu0 %v1242
    %1313 = vmatpush.bf16.msra.mxu0 %v1241
    %1314 = vmatpush.bf16.msra.mxu0 %v1240
    %1315 = vmatpush.bf16.msra.mxu0 %v1239
    %1316 = vmatmul.bf16.gmra.mxu0 %v1096
    %v1317 = vpop.f32.mrf.mxu0
    %v1318 = vadd.f32 %v1305, %v1317
    %v1319 = vpop.f32.mrf.mxu0
    %1320 = vdwg.mxu0
    %1321 = vmatpush.bf16.msra.mxu0 %v1254
    %1322 = vmatpush.bf16.msra.mxu0 %v1253
    %1323 = vmatpush.bf16.msra.mxu0 %v1252
    %1324 = vmatpush.bf16.msra.mxu0 %v1251
    %1325 = vmatpush.bf16.msra.mxu0 %v1250
    %1326 = vmatpush.bf16.msra.mxu0 %v1249
    %1327 = vmatpush.bf16.msra.mxu0 %v1248
    %1328 = vmatpush.bf16.msra.mxu0 %v1247
    %1329 = vmatmul.bf16.gmra.mxu0 %v1097
    %v1330 = vpop.f32.mrf.mxu0
    %v1331 = vadd.f32 %v1318, %v1330
    %v1332 = vpop.f32.mrf.mxu0
    %1333 = vdwg.mxu0
    %1334 = vmatpush.bf16.msra.mxu0 %v1262
    %1335 = vmatpush.bf16.msra.mxu0 %v1261
    %1336 = vmatpush.bf16.msra.mxu0 %v1260
    %1337 = vmatpush.bf16.msra.mxu0 %v1259
    %1338 = vmatpush.bf16.msra.mxu0 %v1258
    %1339 = vmatpush.bf16.msra.mxu0 %v1257
    %1340 = vmatpush.bf16.msra.mxu0 %v1256
    %1341 = vmatpush.bf16.msra.mxu0 %v1255
    %1342 = vmatmul.bf16.gmra.mxu0 %v1098
    %v1343 = vpop.f32.mrf.mxu0
    %v1344 = vadd.f32 %v1331, %v1343
    %v1345 = vpop.f32.mrf.mxu0
    %1346 = vdwg.mxu0
    %1347 = vst [vmem:[#allocation6] sm:$0xff] %v1344
    // Predicated region
    $region26: #{tpu_custom_call.1} parent=1 // pred_check
      _
    $region27: #{tpu_custom_call.1} parent=1 // pred_check_branch
      %1349 = sbr.rel (0) target = $region29
    $region28: #{tpu_custom_call.1} parent=1 // pred_region
      %1351 = vsyncadd [#allocation5], 0
      %s1353 = sshll.u32 [#allocation6], 4
      %s1354 = int_to_ptr.vmem [resolvable:$true] %s1353
      %s1355 = sshll.u32 %s5, 4
      %s1356 = int_to_ptr.hbm [resolvable:$true] %s1355
      %1358 = dma.vmem_to_hbm [thread:$0]  %s1354, 128, %s1356, [#allocation5]
    $region29: #{tpu_custom_call.1} parent=1 // pred_fallthru
      _
    // Predicated region
    $region30: #{tpu_custom_call.1} parent=1 // pred_check
      _
    $region31: #{tpu_custom_call.1} parent=1 // pred_check_branch
      %1360 = sbr.rel (0) target = $region33
    $region32: #{tpu_custom_call.1} parent=1 // pred_region
      %1362 = dma.done [#allocation5], 128
    $region33: #{tpu_custom_call.1} parent=1 // pred_fallthru
      _
    %1363 = vsyncpa [#allocation4], 1
    %1364 = vsyncpa [#allocation5], 1

</llo_original>
